<compile_context>
chip_gen: v7x
topology: tpu7x:2x2x1
jax: 0.10.0
libtpu: 0.0.40
codegen_flags: <defaults>
</compile_context>

<pallas_src>
import math

import jax
import jax.numpy as jnp
from jax import lax
from jax.experimental import pallas as pl
from jax.experimental.pallas import tpu as pltpu


# ---------------- configuration (small synthetic shapes) ----------------
WORD_DIM   = 32        # vocabulary size (word_dim)
HIDDEN_DIM = 32        # d_model (hidden_dim)
NCLASS     = 4
DEGREE     = 2         # max children per parent; tree rows are DEGREE+1 wide
NUM_HEADS  = 4         # multi_head  (HIDDEN_DIM % NUM_HEADS == 0 -> d_k = 8)
N_ENC      = 2         # encoder depth
N_DEC      = 2         # decoder depth
LN_EPS     = 1e-6
NEG_BIG    = -1e30
MAX_PARENT_BLOCK = 1024   # max parents processed per grid step (sublane batching)

N_ATTN = N_ENC + 2 * N_DEC                 # 6 multi-head attention blocks
N_FFN  = N_ENC + N_DEC                     # 4 position-wise FFN blocks
N_LN   = (2 * N_ENC + 1) + (3 * N_DEC + 1) # 12 layer norms
# stacked [H, H] weights: [enc Wo | dec self-attn (Wv@Wo) | dec src Wq | dec src Wo]
IDX_ENC_WO = 0
IDX_SELF   = N_ENC
IDX_DECQ   = N_ENC + N_DEC
IDX_DECO   = N_ENC + 2 * N_DEC
N_HH       = N_ENC + 3 * N_DEC

assert HIDDEN_DIM % NUM_HEADS == 0
assert DEGREE == 2


def _next_pow2(n):
    n = max(int(n), 1)
    return 1 << (n - 1).bit_length()


# ---------------- fused kernel: encoder + decoder + per-core max/min pooling ----------------
def _fused_tree_kernel(nparents_ref,
                       child0_ref, child1_ref, parent_ref, kbias_ref,
                       wqkv_ref, bqkv_ref,
                       w_hh_ref, b_hh_ref,
                       dec_wkv_ref, dec_bkv_ref,
                       ffn_w1_ref, ffn_b1_ref, ffn_w2_ref, ffn_b2_ref,
                       ln_s_ref, ln_b_ref,
                       w_seg_ref,
                       max_ref, min_ref):
    c = pl.program_id(0)                 # TensorCore split (parallel axis)
    p = pl.program_id(1)                 # parent-block sweep (reduction axis)
    steps = pl.num_programs(1)

    @pl.when(p == 0)
    def _():
        max_ref[...] = jnp.full_like(max_ref, NEG_BIG)
        min_ref[...] = jnp.full_like(min_ref, -NEG_BIG)

    x0 = child0_ref[...]                 # [PB, H] child-0 embeddings (parent aligned)
    x1 = child1_ref[...]                 # [PB, H] child-1 embeddings (zero if missing)
    y  = parent_ref[...]                 # [PB, H] parent embeddings (decoder queries)
    kb = kbias_ref[...]                  # [PB, 2] 0 for real child, -1e30 for pad
    PB, H = y.shape
    w_seg = w_seg_ref[...]               # [H, H] bf16 block-diag per-head sum+broadcast (scaled)

    b0 = kb[:, 0:1]
    b1 = kb[:, 1:2]
    d10 = b1 - b0                        # additive mask term for "key1 minus key0" logits
    d01 = b0 - b1

    def mm(a, w):                        # bf16 MXU operands, f32 accumulate
        return jnp.dot(a.astype(jnp.bfloat16), w, preferred_element_type=jnp.float32)

    def ln(v, idx):
        # annotated-transformer LayerNorm: a*(x-mean)/(std+eps)+b, unbiased std
        s = ln_s_ref[idx]
        b = ln_b_ref[idx]
        mean = jnp.mean(v, axis=-1, keepdims=True)
        d = v - mean
        var = jnp.sum(d * d, axis=-1, keepdims=True) * (1.0 / (H - 1))
        inv = pl.reciprocal(jnp.sqrt(var) + LN_EPS, approx=True)   # EUP slot (free co-issue)
        return s * d * inv + b

    def ffn(v, idx):
        h = jnp.maximum(mm(v, ffn_w1_ref[idx]) + ffn_b1_ref[idx], 0.0)
        return mm(h, ffn_w2_ref[idx]) + ffn_b2_ref[idx]

    # -------- Encoder over the two child streams (pre-norm, N_ENC layers + final LN) ----
    for l in range(N_ENC):
        xn0 = ln(x0, 2 * l)
        xn1 = ln(x1, 2 * l)
        qkv0 = mm(xn0, wqkv_ref[l]) + bqkv_ref[l]          # [PB, 3H] fused Q|K|V
        qkv1 = mm(xn1, wqkv_ref[l]) + bqkv_ref[l]
        q0, k0, v0 = qkv0[:, :H], qkv0[:, H:2 * H], qkv0[:, 2 * H:]
        q1, k1, v1 = qkv1[:, :H], qkv1[:, H:2 * H], qkv1[:, 2 * H:]
        # Per-head scaled logit difference (other-key minus own-key), broadcast back to
        # each head's lanes by the block-diagonal w_seg.  Softmax over 2 keys == sigmoid.
        diff0 = mm(q0 * (k1 - k0), w_seg) + d10            # query = child 0
        diff1 = mm(q1 * (k0 - k1), w_seg) + d01            # query = child 1
        p0 = 1.0 / (1.0 + jnp.exp(-diff0))                 # attention weight on the other child
        p1 = 1.0 / (1.0 + jnp.exp(-diff1))
        ctx0 = v0 + p0 * (v1 - v0)
        ctx1 = v1 + p1 * (v0 - v1)
        wo = w_hh_ref[IDX_ENC_WO + l]
        bo = b_hh_ref[IDX_ENC_WO + l]
        x0 = x0 + mm(ctx0, wo) + bo
        x1 = x1 + mm(ctx1, wo) + bo
        xn0 = ln(x0, 2 * l + 1)
        xn1 = ln(x1, 2 * l + 1)
        x0 = x0 + ffn(xn0, l)
        x1 = x1 + ffn(xn1, l)
    mem0 = ln(x0, 2 * N_ENC)                               # encoder memory, child 0
    mem1 = ln(x1, 2 * N_ENC)                               # encoder memory, child 1

    # -------- Decoder: length-1 parent query attends to its two children memories --------
    for l in range(N_DEC):
        n0 = 2 * N_ENC + 1 + 3 * l
        yn = ln(y, n0)
        # Length-1 self-attention: softmax over one key == 1, so the sublayer is the
        # (pre-folded) V->O projection only.
        y = y + mm(yn, w_hh_ref[IDX_SELF + l]) + b_hh_ref[IDX_SELF + l]
        yn = ln(y, n0 + 1)
        qd = mm(yn, w_hh_ref[IDX_DECQ + l]) + b_hh_ref[IDX_DECQ + l]     # [PB, H]
        kv0 = mm(mem0, dec_wkv_ref[l]) + dec_bkv_ref[l]                  # [PB, 2H] K|V
        kv1 = mm(mem1, dec_wkv_ref[l]) + dec_bkv_ref[l]
        k0m, v0m = kv0[:, :H], kv0[:, H:]
        k1m, v1m = kv1[:, :H], kv1[:, H:]
        diff = mm(qd * (k1m - k0m), w_seg) + d10
        ps = 1.0 / (1.0 + jnp.exp(-diff))                                # weight on child 1
        ctx = v0m + ps * (v1m - v0m)
        y = y + mm(ctx, w_hh_ref[IDX_DECO + l]) + b_hh_ref[IDX_DECO + l]
        yn = ln(y, n0 + 2)
        y = y + ffn(yn, N_ENC + l)
    node_h = ln(y, 2 * N_ENC + 1 + 3 * N_DEC)                            # [PB, H]

    # -------- masked max/min pooling into this core's resident output block --------
    row = lax.broadcasted_iota(jnp.int32, (PB, 1), 0)
    blk = c * steps + p
    ok = (blk * PB + row) < nparents_ref[0]                              # [PB, 1] validity
    blk_max = jnp.max(jnp.where(ok, node_h, NEG_BIG), axis=0, keepdims=True)    # [1, H]
    blk_min = jnp.min(jnp.where(ok, node_h, -NEG_BIG), axis=0, keepdims=True)   # [1, H]
    max_ref[...] = jnp.maximum(max_ref[...], blk_max)
    min_ref[...] = jnp.minimum(min_ref[...], blk_min)


# ---------------- wrapper ----------------
def tree_transformer_forward(params, x_word, x_index, tree):
    E_bu = params["E_bu"]                       # [H, V]
    num_nodes = x_word.shape[0]
    num_parents = tree.shape[0]
    num_leaves = num_nodes - num_parents
    H, V = E_bu.shape
    K = DEGREE
    assert tree.shape[1] - 1 == K

    # ---- node embeddings: words_xe[i] = sum_j x_word[i,j] * E_bu[:, x_index[i,j]].
    # Trivial [N,V]@[V,H]; left to XLA (a dedicated pallas_call costs more in launch
    # overhead than the matmul itself).
    counts = jnp.zeros((num_nodes, V), jnp.float32)
    counts = counts.at[jnp.arange(num_nodes)[:, None], x_index].add(x_word.astype(jnp.float32))
    words_xe = jnp.dot(counts, E_bu.T)                                   # [N, H]

    # ---- per-parent child gather (two parent-aligned streams) + key masks ----
    child_idx = tree[:, :K]                     # [P, 2]; last column = parent id, dropped
    mask = child_idx > -1
    safe = jnp.where(mask, child_idx, 0)
    ch = jnp.take(words_xe, safe, axis=0)                                # [P, 2, H]
    ch = jnp.where(mask[..., None], ch, 0.0)
    kbias = jnp.where(mask, 0.0, NEG_BIG).astype(jnp.float32)            # [P, 2]
    parent_xe = words_xe[num_leaves:]                                    # [P, H]

    # ---- parent-block sizing, power-of-two bucketed (one Mosaic compile / bucket) ----
    PB = min(MAX_PARENT_BLOCK, max(8, _next_pow2((num_parents + 1) // 2)))
    steps = _next_pow2(-(-num_parents // (2 * PB)))
    p_pad = 2 * PB * steps
    pad = p_pad - num_parents

    child0 = jnp.pad(ch[:, 0, :], ((0, pad), (0, 0)))
    child1 = jnp.pad(ch[:, 1, :], ((0, pad), (0, 0)))
    parent2d = jnp.pad(parent_xe, ((0, pad), (0, 0)))
    kbias = jnp.pad(kbias, ((0, pad), (0, 0)), constant_values=NEG_BIG)

    # ---- weight re-packing: fused QKV / KV, folded decoder self-attn, bf16 MXU operands ----
    aw, ab = params["attn_w"], params["attn_b"]            # [6,4,H,H], [6,4,1,H]
    enc_ids  = list(range(N_ENC))
    self_ids = [N_ENC + 2 * l for l in range(N_DEC)]
    src_ids  = [N_ENC + 2 * l + 1 for l in range(N_DEC)]
    bf = jnp.bfloat16

    wqkv = jnp.stack([jnp.concatenate([aw[a, 0], aw[a, 1], aw[a, 2]], axis=1)
                      for a in enc_ids]).astype(bf)                      # [N_ENC, H, 3H]
    bqkv = jnp.stack([jnp.concatenate([ab[a, 0], ab[a, 1], ab[a, 2]], axis=1)
                      for a in enc_ids])                                 # [N_ENC, 1, 3H]
    dec_wkv = jnp.stack([jnp.concatenate([aw[a, 1], aw[a, 2]], axis=1)
                         for a in src_ids]).astype(bf)                   # [N_DEC, H, 2H]
    dec_bkv = jnp.stack([jnp.concatenate([ab[a, 1], ab[a, 2]], axis=1)
                         for a in src_ids])                              # [N_DEC, 1, 2H]
    w_hh = jnp.stack([aw[a, 3] for a in enc_ids]
                     + [aw[a, 2] @ aw[a, 3] for a in self_ids]           # folded Wv@Wo
                     + [aw[a, 0] for a in src_ids]
                     + [aw[a, 3] for a in src_ids]).astype(bf)           # [N_HH, H, H]
    b_hh = jnp.stack([ab[a, 3] for a in enc_ids]
                     + [ab[a, 2] @ aw[a, 3] + ab[a, 3] for a in self_ids]
                     + [ab[a, 0] for a in src_ids]
                     + [ab[a, 3] for a in src_ids])                      # [N_HH, 1, H]
    ffn_w1 = params["ffn_w1"].astype(bf)
    ffn_w2 = params["ffn_w2"].astype(bf)

    # block-diagonal per-head "sum then broadcast" matrix with 1/sqrt(d_k) folded in
    dk = H // NUM_HEADS
    hid = jnp.arange(H) // dk
    w_seg = (jnp.where(hid[:, None] == hid[None, :], 1.0, 0.0) / math.sqrt(dk)).astype(bf)

    nparents = jnp.array([num_parents], jnp.int32)

    row_map = lambda c, p, n: (c * steps + p, 0)
    cw2 = lambda c, p, n: (0, 0)
    cw3 = lambda c, p, n: (0, 0, 0)

    grid_spec = pltpu.PrefetchScalarGridSpec(
        num_scalar_prefetch=1,
        grid=(2, steps),                                   # (TensorCore split, parent blocks)
        in_specs=[
            pl.BlockSpec((PB, H), row_map),                # child-0 stream
            pl.BlockSpec((PB, H), row_map),                # child-1 stream
            pl.BlockSpec((PB, H), row_map),                # parent embeddings
            pl.BlockSpec((PB, K), row_map),                # per-child key masks
            pl.BlockSpec((N_ENC, H, 3 * H), cw3),          # fused Wqkv
            pl.BlockSpec((N_ENC, 1, 3 * H), cw3),
            pl.BlockSpec((N_HH, H, H), cw3),               # stacked [H,H] weights
            pl.BlockSpec((N_HH, 1, H), cw3),
            pl.BlockSpec((N_DEC, H, 2 * H), cw3),          # decoder fused Wkv
            pl.BlockSpec((N_DEC, 1, 2 * H), cw3),
            pl.BlockSpec((N_FFN, H, 2 * H), cw3),
            pl.BlockSpec((N_FFN, 1, 2 * H), cw3),
            pl.BlockSpec((N_FFN, 2 * H, H), cw3),
            pl.BlockSpec((N_FFN, 1, H), cw3),
            pl.BlockSpec((N_LN, 1, H), cw3),
            pl.BlockSpec((N_LN, 1, H), cw3),
            pl.BlockSpec((H, H), cw2),                     # w_seg
        ],
        out_specs=[
            pl.BlockSpec((8, H), lambda c, p, n: (c, 0)),  # per-core partial max pool
            pl.BlockSpec((8, H), lambda c, p, n: (c, 0)),  # per-core partial min pool
        ],
    )

    max_part, min_part = pl.pallas_call(
        _fused_tree_kernel,
        out_shape=(jax.ShapeDtypeStruct((2 * 8, H), jnp.float32),
                   jax.ShapeDtypeStruct((2 * 8, H), jnp.float32)),
        grid_spec=grid_spec,
        compiler_params=pltpu.CompilerParams(
            dimension_semantics=("parallel", "arbitrary"),
            vmem_limit_bytes=32 * 1024 * 1024),
    )(nparents,
      child0, child1, parent2d, kbias,
      wqkv, bqkv, w_hh, b_hh, dec_wkv, dec_bkv,
      ffn_w1, params["ffn_b1"], ffn_w2, params["ffn_b2"],
      params["ln_scale"], params["ln_bias"],
      w_seg)

    # ---- merge the per-core partial pools + classifier (tiny; left to XLA) ----
    final_state = jnp.concatenate([jnp.max(max_part, axis=0),
                                   jnp.min(min_part, axis=0)])[None, :]          # [1, 2H]
    logits = jnp.sum(params["W_out"] * final_state, axis=1) + params["b_out"]    # [NCLASS]
    logits = logits - jnp.max(logits)
    e = jnp.exp(logits)
    return e / jnp.sum(e)                                                        # [NCLASS]


# ---------------- deterministic parameter init ----------------
def init_params(key):
    ks = jax.random.split(key, 8)

    def nrm(k, shape):
        return (0.1 * jax.random.normal(k, shape)).astype(jnp.float32)

    H, FF = HIDDEN_DIM, 2 * HIDDEN_DIM
    return {
        "E_bu":     nrm(ks[0], (H, WORD_DIM)),       # init_matrix([hidden, word_dim])
        "W_out":    nrm(ks[1], (NCLASS, 2 * H)),     # init_matrix([Nclass, 2*hidden])
        "b_out":    jnp.zeros((NCLASS,), jnp.float32),
        "attn_w":   nrm(ks[2], (N_ATTN, 4, H, H)),   # (Wq, Wk, Wv, Wo) per attention block
        "attn_b":   jnp.zeros((N_ATTN, 4, 1, H), jnp.float32),
        "ffn_w1":   nrm(ks[3], (N_FFN, H, FF)),
        "ffn_b1":   jnp.zeros((N_FFN, 1, FF), jnp.float32),
        "ffn_w2":   nrm(ks[4], (N_FFN, FF, H)),
        "ffn_b2":   jnp.zeros((N_FFN, 1, H), jnp.float32),
        "ln_scale": jnp.ones((N_LN, 1, H), jnp.float32),
        "ln_bias":  jnp.zeros((N_LN, 1, H), jnp.float32),
    }


if __name__ == "__main__":
    key = jax.random.PRNGKey(0)
    k_par, k_w, k_i = jax.random.split(key, 3)
    params = init_params(k_par)

    # Small tree: 7 nodes = 4 leaves (0..3) + 3 parents (4, 5, 6); 5 word slots/node.
    num_nodes, num_leaves, n_words = 7, 4, 5
    x_word = jax.random.uniform(k_w, (num_nodes, n_words), jnp.float32)      # word frequencies
    x_index = jax.random.randint(k_i, (num_nodes, n_words), 0, WORD_DIM)     # word ids
    # tree rows: [child0, child1, parent_node]; -1 marks a missing child.
    tree = jnp.array([[0, 1, 4],
                      [2, 3, 5],
                      [4, -1, 6]], dtype=jnp.int32)

    probs = tree_transformer_forward(params, x_word, x_index, tree)
    probs = jax.block_until_ready(probs)

    assert probs.shape == (NCLASS,)
    assert bool(jnp.all(jnp.isfinite(probs)))
    assert abs(float(jnp.sum(probs)) - 1.0) < 1e-3
    print("KERNEL_OK")
</pallas_src>

<mosaic_0001>
module attributes {stable_mosaic.version = 11 : i64} {
  func.func @_fused_tree_kernel(%arg0: i32, %arg1: i32, %arg2: memref<1xi32, #tpu.memory_space<smem>>, %arg3: memref<8x32xf32, #tpu.memory_space<vmem>>, %arg4: memref<8x32xf32, #tpu.memory_space<vmem>>, %arg5: memref<8x32xf32, #tpu.memory_space<vmem>>, %arg6: memref<8x2xf32, #tpu.memory_space<vmem>>, %arg7: memref<2x32x96xbf16, #tpu.memory_space<vmem>>, %arg8: memref<2x1x96xf32, #tpu.memory_space<vmem>>, %arg9: memref<8x32x32xbf16, #tpu.memory_space<vmem>>, %arg10: memref<8x1x32xf32, #tpu.memory_space<vmem>>, %arg11: memref<2x32x64xbf16, #tpu.memory_space<vmem>>, %arg12: memref<2x1x64xf32, #tpu.memory_space<vmem>>, %arg13: memref<4x32x64xbf16, #tpu.memory_space<vmem>>, %arg14: memref<4x1x64xf32, #tpu.memory_space<vmem>>, %arg15: memref<4x64x32xbf16, #tpu.memory_space<vmem>>, %arg16: memref<4x1x32xf32, #tpu.memory_space<vmem>>, %arg17: memref<12x1x32xf32, #tpu.memory_space<vmem>>, %arg18: memref<12x1x32xf32, #tpu.memory_space<vmem>>, %arg19: memref<32x32xbf16, #tpu.memory_space<vmem>>, %arg20: memref<8x32xf32, #tpu.memory_space<vmem>>, %arg21: memref<8x32xf32, #tpu.memory_space<vmem>>) attributes {dimension_semantics = [#tpu.dimension_semantics<parallel>, #tpu.dimension_semantics<arbitrary>], iteration_bounds = array<i64: 2, 1>, scalar_prefetch = 1 : i64, scratch_operands = 0 : i64, tpu.core_type = #tpu.core_type<tc>, window_params = [{transform_indices = @transform_0, window_bounds = array<i64: 8, 32>}, {transform_indices = @transform_1, window_bounds = array<i64: 8, 32>}, {transform_indices = @transform_2, window_bounds = array<i64: 8, 32>}, {transform_indices = @transform_3, window_bounds = array<i64: 8, 2>}, {pipeline_mode = #tpu.pipeline_mode<synchronous>, transform_indices = @transform_4, window_bounds = array<i64: 2, 32, 96>}, {pipeline_mode = #tpu.pipeline_mode<synchronous>, transform_indices = @transform_5, window_bounds = array<i64: 2, 1, 96>}, {pipeline_mode = #tpu.pipeline_mode<synchronous>, transform_indices = @transform_6, window_bounds = array<i64: 8, 32, 32>}, {pipeline_mode = #tpu.pipeline_mode<synchronous>, transform_indices = @transform_7, window_bounds = array<i64: 8, 1, 32>}, {pipeline_mode = #tpu.pipeline_mode<synchronous>, transform_indices = @transform_8, window_bounds = array<i64: 2, 32, 64>}, {pipeline_mode = #tpu.pipeline_mode<synchronous>, transform_indices = @transform_9, window_bounds = array<i64: 2, 1, 64>}, {pipeline_mode = #tpu.pipeline_mode<synchronous>, transform_indices = @transform_10, window_bounds = array<i64: 4, 32, 64>}, {pipeline_mode = #tpu.pipeline_mode<synchronous>, transform_indices = @transform_11, window_bounds = array<i64: 4, 1, 64>}, {pipeline_mode = #tpu.pipeline_mode<synchronous>, transform_indices = @transform_12, window_bounds = array<i64: 4, 64, 32>}, {pipeline_mode = #tpu.pipeline_mode<synchronous>, transform_indices = @transform_13, window_bounds = array<i64: 4, 1, 32>}, {pipeline_mode = #tpu.pipeline_mode<synchronous>, transform_indices = @transform_14, window_bounds = array<i64: 12, 1, 32>}, {pipeline_mode = #tpu.pipeline_mode<synchronous>, transform_indices = @transform_15, window_bounds = array<i64: 12, 1, 32>}, {pipeline_mode = #tpu.pipeline_mode<synchronous>, transform_indices = @transform_16, window_bounds = array<i64: 32, 32>}, {transform_indices = @transform_17, window_bounds = array<i64: 8, 32>}, {transform_indices = @transform_18, window_bounds = array<i64: 8, 32>}]} {
    %c0_i32 = arith.constant 0 : i32
    %0 = arith.cmpi eq, %arg1, %c0_i32 : i32
    %1 = arith.extui %0 : i1 to i32
    %c0_i32_0 = arith.constant 0 : i32
    %2 = arith.cmpi ne, %1, %c0_i32_0 : i32
    scf.if %2 {
      %cst_426 = arith.constant -1.000000e+30 : f32
      %840 = vector.broadcast %cst_426 : f32 to vector<8x32xf32>
      %c0_427 = arith.constant 0 : index
      %c0_428 = arith.constant 0 : index
      %841 = vector.load %arg20[%c0_427, %c0_428] : memref<8x32xf32, #tpu.memory_space<vmem>>, vector<8x32xf32>
      tpu.vector_store %arg20[%c0_427, %c0_428], %840 {strides = array<i32>} : memref<8x32xf32, #tpu.memory_space<vmem>>, vector<8x32xf32>,
      %cst_429 = arith.constant 1.000000e+30 : f32
      %842 = vector.broadcast %cst_429 : f32 to vector<8x32xf32>
      %c0_430 = arith.constant 0 : index
      %c0_431 = arith.constant 0 : index
      %843 = vector.load %arg21[%c0_430, %c0_431] : memref<8x32xf32, #tpu.memory_space<vmem>>, vector<8x32xf32>
      tpu.vector_store %arg21[%c0_430, %c0_431], %842 {strides = array<i32>} : memref<8x32xf32, #tpu.memory_space<vmem>>, vector<8x32xf32>,
    } else {
    }
    %c0 = arith.constant 0 : index
    %c0_1 = arith.constant 0 : index
    %3 = vector.load %arg3[%c0, %c0_1] : memref<8x32xf32, #tpu.memory_space<vmem>>, vector<8x32xf32>
    %c0_2 = arith.constant 0 : index
    %c0_3 = arith.constant 0 : index
    %4 = vector.load %arg4[%c0_2, %c0_3] : memref<8x32xf32, #tpu.memory_space<vmem>>, vector<8x32xf32>
    %c0_4 = arith.constant 0 : index
    %c0_5 = arith.constant 0 : index
    %5 = vector.load %arg5[%c0_4, %c0_5] : memref<8x32xf32, #tpu.memory_space<vmem>>, vector<8x32xf32>
    %c0_6 = arith.constant 0 : index
    %c0_7 = arith.constant 0 : index
    %6 = vector.load %arg6[%c0_6, %c0_7] : memref<8x2xf32, #tpu.memory_space<vmem>>, vector<8x2xf32>
    %c0_8 = arith.constant 0 : index
    %c0_9 = arith.constant 0 : index
    %7 = vector.load %arg19[%c0_8, %c0_9] : memref<32x32xbf16, #tpu.memory_space<vmem>>, vector<32x32xbf16>
    %8 = vector.extract_strided_slice %6 {offsets = [0, 0], sizes = [8, 1], strides = [1, 1]} : vector<8x2xf32> to vector<8x1xf32>
    %9 = vector.extract_strided_slice %6 {offsets = [0, 1], sizes = [8, 1], strides = [1, 1]} : vector<8x2xf32> to vector<8x1xf32>
    %10 = arith.subf %9, %8 : vector<8x1xf32>
    %11 = arith.subf %8, %9 : vector<8x1xf32>
    %c0_10 = arith.constant 0 : index
    %c0_11 = arith.constant 0 : index
    %c0_12 = arith.constant 0 : index
    %12 = vector.load %arg17[%c0_10, %c0_11, %c0_12] : memref<12x1x32xf32, #tpu.memory_space<vmem>>, vector<1x1x32xf32>
    %13 = vector.shape_cast %12 : vector<1x1x32xf32> to vector<1x32xf32>
    %c0_13 = arith.constant 0 : index
    %c0_14 = arith.constant 0 : index
    %c0_15 = arith.constant 0 : index
    %14 = vector.load %arg18[%c0_13, %c0_14, %c0_15] : memref<12x1x32xf32, #tpu.memory_space<vmem>>, vector<1x1x32xf32>
    %15 = vector.shape_cast %14 : vector<1x1x32xf32> to vector<1x32xf32>
    %cst = arith.constant dense<0.000000e+00> : vector<8xf32>
    %16 = vector.multi_reduction <add>, %3, %cst [1] : vector<8x32xf32> to vector<8xf32>
    %17 = vector.shape_cast %16 : vector<8xf32> to vector<8x1xf32>
    %cst_16 = arith.constant 3.200000e+01 : f32
    %18 = vector.broadcast %cst_16 : f32 to vector<8x1xf32>
    %19 = arith.divf %17, %18 : vector<8x1xf32>
    %20 = vector.broadcast %19 : vector<8x1xf32> to vector<8x32xf32>
    %21 = arith.subf %3, %20 : vector<8x32xf32>
    %22 = arith.mulf %21, %21 : vector<8x32xf32>
    %cst_17 = arith.constant dense<0.000000e+00> : vector<8xf32>
    %23 = vector.multi_reduction <add>, %22, %cst_17 [1] : vector<8x32xf32> to vector<8xf32>
    %24 = vector.shape_cast %23 : vector<8xf32> to vector<8x1xf32>
    %cst_18 = arith.constant 0.0322580636 : f32
    %25 = vector.broadcast %cst_18 : f32 to vector<8x1xf32>
    %26 = arith.mulf %24, %25 : vector<8x1xf32>
    %27 = math.sqrt %26 : vector<8x1xf32>
    %cst_19 = arith.constant 9.99999997E-7 : f32
    %28 = vector.broadcast %cst_19 : f32 to vector<8x1xf32>
    %29 = arith.addf %27, %28 : vector<8x1xf32>
    %30 = tpu.reciprocal %29 {approx = true} : vector<8x1xf32> -> vector<8x1xf32>
    %31 = vector.broadcast %13 : vector<1x32xf32> to vector<8x32xf32>
    %32 = arith.mulf %31, %21 : vector<8x32xf32>
    %33 = vector.broadcast %30 : vector<8x1xf32> to vector<8x32xf32>
    %34 = arith.mulf %32, %33 : vector<8x32xf32>
    %35 = vector.broadcast %15 : vector<1x32xf32> to vector<8x32xf32>
    %36 = arith.addf %34, %35 : vector<8x32xf32>
    %c0_20 = arith.constant 0 : index
    %c0_21 = arith.constant 0 : index
    %c0_22 = arith.constant 0 : index
    %37 = vector.load %arg17[%c0_20, %c0_21, %c0_22] : memref<12x1x32xf32, #tpu.memory_space<vmem>>, vector<1x1x32xf32>
    %38 = vector.shape_cast %37 : vector<1x1x32xf32> to vector<1x32xf32>
    %c0_23 = arith.constant 0 : index
    %c0_24 = arith.constant 0 : index
    %c0_25 = arith.constant 0 : index
    %39 = vector.load %arg18[%c0_23, %c0_24, %c0_25] : memref<12x1x32xf32, #tpu.memory_space<vmem>>, vector<1x1x32xf32>
    %40 = vector.shape_cast %39 : vector<1x1x32xf32> to vector<1x32xf32>
    %cst_26 = arith.constant dense<0.000000e+00> : vector<8xf32>
    %41 = vector.multi_reduction <add>, %4, %cst_26 [1] : vector<8x32xf32> to vector<8xf32>
    %42 = vector.shape_cast %41 : vector<8xf32> to vector<8x1xf32>
    %cst_27 = arith.constant 3.200000e+01 : f32
    %43 = vector.broadcast %cst_27 : f32 to vector<8x1xf32>
    %44 = arith.divf %42, %43 : vector<8x1xf32>
    %45 = vector.broadcast %44 : vector<8x1xf32> to vector<8x32xf32>
    %46 = arith.subf %4, %45 : vector<8x32xf32>
    %47 = arith.mulf %46, %46 : vector<8x32xf32>
    %cst_28 = arith.constant dense<0.000000e+00> : vector<8xf32>
    %48 = vector.multi_reduction <add>, %47, %cst_28 [1] : vector<8x32xf32> to vector<8xf32>
    %49 = vector.shape_cast %48 : vector<8xf32> to vector<8x1xf32>
    %cst_29 = arith.constant 0.0322580636 : f32
    %50 = vector.broadcast %cst_29 : f32 to vector<8x1xf32>
    %51 = arith.mulf %49, %50 : vector<8x1xf32>
    %52 = math.sqrt %51 : vector<8x1xf32>
    %cst_30 = arith.constant 9.99999997E-7 : f32
    %53 = vector.broadcast %cst_30 : f32 to vector<8x1xf32>
    %54 = arith.addf %52, %53 : vector<8x1xf32>
    %55 = tpu.reciprocal %54 {approx = true} : vector<8x1xf32> -> vector<8x1xf32>
    %56 = vector.broadcast %38 : vector<1x32xf32> to vector<8x32xf32>
    %57 = arith.mulf %56, %46 : vector<8x32xf32>
    %58 = vector.broadcast %55 : vector<8x1xf32> to vector<8x32xf32>
    %59 = arith.mulf %57, %58 : vector<8x32xf32>
    %60 = vector.broadcast %40 : vector<1x32xf32> to vector<8x32xf32>
    %61 = arith.addf %59, %60 : vector<8x32xf32>
    %c0_31 = arith.constant 0 : index
    %c0_32 = arith.constant 0 : index
    %c0_33 = arith.constant 0 : index
    %62 = vector.load %arg7[%c0_31, %c0_32, %c0_33] : memref<2x32x96xbf16, #tpu.memory_space<vmem>>, vector<1x32x96xbf16>
    %63 = vector.shape_cast %62 : vector<1x32x96xbf16> to vector<32x96xbf16>
    %64 = arith.truncf %36 : vector<8x32xf32> to vector<8x32xbf16>
    %cst_34 = arith.constant dense<0.000000e+00> : vector<8x96xf32>
    %65 = tpu.matmul %64, %63, %cst_34 {dimension_numbers = #tpu.dot_dimension_numbers<[1], [0], [0], [1], [0, 0, 1, 1], [], []>} : vector<8x32xbf16>, vector<32x96xbf16>, vector<8x96xf32> -> vector<8x96xf32>
    %c0_35 = arith.constant 0 : index
    %c0_36 = arith.constant 0 : index
    %c0_37 = arith.constant 0 : index
    %66 = vector.load %arg8[%c0_35, %c0_36, %c0_37] : memref<2x1x96xf32, #tpu.memory_space<vmem>>, vector<1x1x96xf32>
    %67 = vector.shape_cast %66 : vector<1x1x96xf32> to vector<1x96xf32>
    %68 = vector.broadcast %67 : vector<1x96xf32> to vector<8x96xf32>
    %69 = arith.addf %65, %68 : vector<8x96xf32>
    %c0_38 = arith.constant 0 : index
    %c0_39 = arith.constant 0 : index
    %c0_40 = arith.constant 0 : index
    %70 = vector.load %arg7[%c0_38, %c0_39, %c0_40] : memref<2x32x96xbf16, #tpu.memory_space<vmem>>, vector<1x32x96xbf16>
    %71 = vector.shape_cast %70 : vector<1x32x96xbf16> to vector<32x96xbf16>
    %72 = arith.truncf %61 : vector<8x32xf32> to vector<8x32xbf16>
    %cst_41 = arith.constant dense<0.000000e+00> : vector<8x96xf32>
    %73 = tpu.matmul %72, %71, %cst_41 {dimension_numbers = #tpu.dot_dimension_numbers<[1], [0], [0], [1], [0, 0, 1, 1], [], []>} : vector<8x32xbf16>, vector<32x96xbf16>, vector<8x96xf32> -> vector<8x96xf32>
    %c0_42 = arith.constant 0 : index
    %c0_43 = arith.constant 0 : index
    %c0_44 = arith.constant 0 : index
    %74 = vector.load %arg8[%c0_42, %c0_43, %c0_44] : memref<2x1x96xf32, #tpu.memory_space<vmem>>, vector<1x1x96xf32>
    %75 = vector.shape_cast %74 : vector<1x1x96xf32> to vector<1x96xf32>
    %76 = vector.broadcast %75 : vector<1x96xf32> to vector<8x96xf32>
    %77 = arith.addf %73, %76 : vector<8x96xf32>
    %78 = vector.extract_strided_slice %69 {offsets = [0, 0], sizes = [8, 32], strides = [1, 1]} : vector<8x96xf32> to vector<8x32xf32>
    %79 = vector.extract_strided_slice %69 {offsets = [0, 32], sizes = [8, 32], strides = [1, 1]} : vector<8x96xf32> to vector<8x32xf32>
    %80 = vector.extract_strided_slice %69 {offsets = [0, 64], sizes = [8, 32], strides = [1, 1]} : vector<8x96xf32> to vector<8x32xf32>
    %81 = vector.extract_strided_slice %77 {offsets = [0, 0], sizes = [8, 32], strides = [1, 1]} : vector<8x96xf32> to vector<8x32xf32>
    %82 = vector.extract_strided_slice %77 {offsets = [0, 32], sizes = [8, 32], strides = [1, 1]} : vector<8x96xf32> to vector<8x32xf32>
    %83 = vector.extract_strided_slice %77 {offsets = [0, 64], sizes = [8, 32], strides = [1, 1]} : vector<8x96xf32> to vector<8x32xf32>
    %84 = arith.subf %82, %79 : vector<8x32xf32>
    %85 = arith.mulf %78, %84 : vector<8x32xf32>
    %86 = arith.truncf %85 : vector<8x32xf32> to vector<8x32xbf16>
    %cst_45 = arith.constant dense<0.000000e+00> : vector<8x32xf32>
    %87 = tpu.matmul %86, %7, %cst_45 {dimension_numbers = #tpu.dot_dimension_numbers<[1], [0], [0], [1], [0, 0, 1, 1], [], []>} : vector<8x32xbf16>, vector<32x32xbf16>, vector<8x32xf32> -> vector<8x32xf32>
    %88 = vector.broadcast %10 : vector<8x1xf32> to vector<8x32xf32>
    %89 = arith.addf %87, %88 : vector<8x32xf32>
    %90 = arith.subf %79, %82 : vector<8x32xf32>
    %91 = arith.mulf %81, %90 : vector<8x32xf32>
    %92 = arith.truncf %91 : vector<8x32xf32> to vector<8x32xbf16>
    %cst_46 = arith.constant dense<0.000000e+00> : vector<8x32xf32>
    %93 = tpu.matmul %92, %7, %cst_46 {dimension_numbers = #tpu.dot_dimension_numbers<[1], [0], [0], [1], [0, 0, 1, 1], [], []>} : vector<8x32xbf16>, vector<32x32xbf16>, vector<8x32xf32> -> vector<8x32xf32>
    %94 = vector.broadcast %11 : vector<8x1xf32> to vector<8x32xf32>
    %95 = arith.addf %93, %94 : vector<8x32xf32>
    %cst_47 = arith.constant 0.000000e+00 : f32
    %96 = vector.broadcast %cst_47 : f32 to vector<8x32xf32>
    %97 = arith.subf %96, %89 : vector<8x32xf32>
    %98 = math.exp %97 : vector<8x32xf32>
    %cst_48 = arith.constant 1.000000e+00 : f32
    %99 = vector.broadcast %cst_48 : f32 to vector<8x32xf32>
    %100 = arith.addf %99, %98 : vector<8x32xf32>
    %cst_49 = arith.constant 1.000000e+00 : f32
    %101 = vector.broadcast %cst_49 : f32 to vector<8x32xf32>
    %102 = arith.divf %101, %100 : vector<8x32xf32>
    %cst_50 = arith.constant 0.000000e+00 : f32
    %103 = vector.broadcast %cst_50 : f32 to vector<8x32xf32>
    %104 = arith.subf %103, %95 : vector<8x32xf32>
    %105 = math.exp %104 : vector<8x32xf32>
    %cst_51 = arith.constant 1.000000e+00 : f32
    %106 = vector.broadcast %cst_51 : f32 to vector<8x32xf32>
    %107 = arith.addf %106, %105 : vector<8x32xf32>
    %cst_52 = arith.constant 1.000000e+00 : f32
    %108 = vector.broadcast %cst_52 : f32 to vector<8x32xf32>
    %109 = arith.divf %108, %107 : vector<8x32xf32>
    %110 = arith.subf %83, %80 : vector<8x32xf32>
    %111 = arith.mulf %102, %110 : vector<8x32xf32>
    %112 = arith.addf %80, %111 : vector<8x32xf32>
    %113 = arith.subf %80, %83 : vector<8x32xf32>
    %114 = arith.mulf %109, %113 : vector<8x32xf32>
    %115 = arith.addf %83, %114 : vector<8x32xf32>
    %c0_53 = arith.constant 0 : index
    %c0_54 = arith.constant 0 : index
    %c0_55 = arith.constant 0 : index
    %116 = vector.load %arg9[%c0_53, %c0_54, %c0_55] : memref<8x32x32xbf16, #tpu.memory_space<vmem>>, vector<1x32x32xbf16>
    %117 = vector.shape_cast %116 : vector<1x32x32xbf16> to vector<32x32xbf16>
    %c0_56 = arith.constant 0 : index
    %c0_57 = arith.constant 0 : index
    %c0_58 = arith.constant 0 : index
    %118 = vector.load %arg10[%c0_56, %c0_57, %c0_58] : memref<8x1x32xf32, #tpu.memory_space<vmem>>, vector<1x1x32xf32>
    %119 = vector.shape_cast %118 : vector<1x1x32xf32> to vector<1x32xf32>
    %120 = arith.truncf %112 : vector<8x32xf32> to vector<8x32xbf16>
    %cst_59 = arith.constant dense<0.000000e+00> : vector<8x32xf32>
    %121 = tpu.matmul %120, %117, %cst_59 {dimension_numbers = #tpu.dot_dimension_numbers<[1], [0], [0], [1], [0, 0, 1, 1], [], []>} : vector<8x32xbf16>, vector<32x32xbf16>, vector<8x32xf32> -> vector<8x32xf32>
    %122 = arith.addf %3, %121 : vector<8x32xf32>
    %123 = vector.broadcast %119 : vector<1x32xf32> to vector<8x32xf32>
    %124 = arith.addf %122, %123 : vector<8x32xf32>
    %125 = arith.truncf %115 : vector<8x32xf32> to vector<8x32xbf16>
    %cst_60 = arith.constant dense<0.000000e+00> : vector<8x32xf32>
    %126 = tpu.matmul %125, %117, %cst_60 {dimension_numbers = #tpu.dot_dimension_numbers<[1], [0], [0], [1], [0, 0, 1, 1], [], []>} : vector<8x32xbf16>, vector<32x32xbf16>, vector<8x32xf32> -> vector<8x32xf32>
    %127 = arith.addf %4, %126 : vector<8x32xf32>
    %128 = vector.broadcast %119 : vector<1x32xf32> to vector<8x32xf32>
    %129 = arith.addf %127, %128 : vector<8x32xf32>
    %c1 = arith.constant 1 : index
    %c0_61 = arith.constant 0 : index
    %c0_62 = arith.constant 0 : index
    %130 = vector.load %arg17[%c1, %c0_61, %c0_62] : memref<12x1x32xf32, #tpu.memory_space<vmem>>, vector<1x1x32xf32>
    %131 = vector.shape_cast %130 : vector<1x1x32xf32> to vector<1x32xf32>
    %c1_63 = arith.constant 1 : index
    %c0_64 = arith.constant 0 : index
    %c0_65 = arith.constant 0 : index
    %132 = vector.load %arg18[%c1_63, %c0_64, %c0_65] : memref<12x1x32xf32, #tpu.memory_space<vmem>>, vector<1x1x32xf32>
    %133 = vector.shape_cast %132 : vector<1x1x32xf32> to vector<1x32xf32>
    %cst_66 = arith.constant dense<0.000000e+00> : vector<8xf32>
    %134 = vector.multi_reduction <add>, %124, %cst_66 [1] : vector<8x32xf32> to vector<8xf32>
    %135 = vector.shape_cast %134 : vector<8xf32> to vector<8x1xf32>
    %cst_67 = arith.constant 3.200000e+01 : f32
    %136 = vector.broadcast %cst_67 : f32 to vector<8x1xf32>
    %137 = arith.divf %135, %136 : vector<8x1xf32>
    %138 = vector.broadcast %137 : vector<8x1xf32> to vector<8x32xf32>
    %139 = arith.subf %124, %138 : vector<8x32xf32>
    %140 = arith.mulf %139, %139 : vector<8x32xf32>
    %cst_68 = arith.constant dense<0.000000e+00> : vector<8xf32>
    %141 = vector.multi_reduction <add>, %140, %cst_68 [1] : vector<8x32xf32> to vector<8xf32>
    %142 = vector.shape_cast %141 : vector<8xf32> to vector<8x1xf32>
    %cst_69 = arith.constant 0.0322580636 : f32
    %143 = vector.broadcast %cst_69 : f32 to vector<8x1xf32>
    %144 = arith.mulf %142, %143 : vector<8x1xf32>
    %145 = math.sqrt %144 : vector<8x1xf32>
    %cst_70 = arith.constant 9.99999997E-7 : f32
    %146 = vector.broadcast %cst_70 : f32 to vector<8x1xf32>
    %147 = arith.addf %145, %146 : vector<8x1xf32>
    %148 = tpu.reciprocal %147 {approx = true} : vector<8x1xf32> -> vector<8x1xf32>
    %149 = vector.broadcast %131 : vector<1x32xf32> to vector<8x32xf32>
    %150 = arith.mulf %149, %139 : vector<8x32xf32>
    %151 = vector.broadcast %148 : vector<8x1xf32> to vector<8x32xf32>
    %152 = arith.mulf %150, %151 : vector<8x32xf32>
    %153 = vector.broadcast %133 : vector<1x32xf32> to vector<8x32xf32>
    %154 = arith.addf %152, %153 : vector<8x32xf32>
    %c1_71 = arith.constant 1 : index
    %c0_72 = arith.constant 0 : index
    %c0_73 = arith.constant 0 : index
    %155 = vector.load %arg17[%c1_71, %c0_72, %c0_73] : memref<12x1x32xf32, #tpu.memory_space<vmem>>, vector<1x1x32xf32>
    %156 = vector.shape_cast %155 : vector<1x1x32xf32> to vector<1x32xf32>
    %c1_74 = arith.constant 1 : index
    %c0_75 = arith.constant 0 : index
    %c0_76 = arith.constant 0 : index
    %157 = vector.load %arg18[%c1_74, %c0_75, %c0_76] : memref<12x1x32xf32, #tpu.memory_space<vmem>>, vector<1x1x32xf32>
    %158 = vector.shape_cast %157 : vector<1x1x32xf32> to vector<1x32xf32>
    %cst_77 = arith.constant dense<0.000000e+00> : vector<8xf32>
    %159 = vector.multi_reduction <add>, %129, %cst_77 [1] : vector<8x32xf32> to vector<8xf32>
    %160 = vector.shape_cast %159 : vector<8xf32> to vector<8x1xf32>
    %cst_78 = arith.constant 3.200000e+01 : f32
    %161 = vector.broadcast %cst_78 : f32 to vector<8x1xf32>
    %162 = arith.divf %160, %161 : vector<8x1xf32>
    %163 = vector.broadcast %162 : vector<8x1xf32> to vector<8x32xf32>
    %164 = arith.subf %129, %163 : vector<8x32xf32>
    %165 = arith.mulf %164, %164 : vector<8x32xf32>
    %cst_79 = arith.constant dense<0.000000e+00> : vector<8xf32>
    %166 = vector.multi_reduction <add>, %165, %cst_79 [1] : vector<8x32xf32> to vector<8xf32>
    %167 = vector.shape_cast %166 : vector<8xf32> to vector<8x1xf32>
    %cst_80 = arith.constant 0.0322580636 : f32
    %168 = vector.broadcast %cst_80 : f32 to vector<8x1xf32>
    %169 = arith.mulf %167, %168 : vector<8x1xf32>
    %170 = math.sqrt %169 : vector<8x1xf32>
    %cst_81 = arith.constant 9.99999997E-7 : f32
    %171 = vector.broadcast %cst_81 : f32 to vector<8x1xf32>
    %172 = arith.addf %170, %171 : vector<8x1xf32>
    %173 = tpu.reciprocal %172 {approx = true} : vector<8x1xf32> -> vector<8x1xf32>
    %174 = vector.broadcast %156 : vector<1x32xf32> to vector<8x32xf32>
    %175 = arith.mulf %174, %164 : vector<8x32xf32>
    %176 = vector.broadcast %173 : vector<8x1xf32> to vector<8x32xf32>
    %177 = arith.mulf %175, %176 : vector<8x32xf32>
    %178 = vector.broadcast %158 : vector<1x32xf32> to vector<8x32xf32>
    %179 = arith.addf %177, %178 : vector<8x32xf32>
    %c0_82 = arith.constant 0 : index
    %c0_83 = arith.constant 0 : index
    %c0_84 = arith.constant 0 : index
    %180 = vector.load %arg13[%c0_82, %c0_83, %c0_84] : memref<4x32x64xbf16, #tpu.memory_space<vmem>>, vector<1x32x64xbf16>
    %181 = vector.shape_cast %180 : vector<1x32x64xbf16> to vector<32x64xbf16>
    %182 = arith.truncf %154 : vector<8x32xf32> to vector<8x32xbf16>
    %cst_85 = arith.constant dense<0.000000e+00> : vector<8x64xf32>
    %183 = tpu.matmul %182, %181, %cst_85 {dimension_numbers = #tpu.dot_dimension_numbers<[1], [0], [0], [1], [0, 0, 1, 1], [], []>} : vector<8x32xbf16>, vector<32x64xbf16>, vector<8x64xf32> -> vector<8x64xf32>
    %c0_86 = arith.constant 0 : index
    %c0_87 = arith.constant 0 : index
    %c0_88 = arith.constant 0 : index
    %184 = vector.load %arg14[%c0_86, %c0_87, %c0_88] : memref<4x1x64xf32, #tpu.memory_space<vmem>>, vector<1x1x64xf32>
    %185 = vector.shape_cast %184 : vector<1x1x64xf32> to vector<1x64xf32>
    %186 = vector.broadcast %185 : vector<1x64xf32> to vector<8x64xf32>
    %187 = arith.addf %183, %186 : vector<8x64xf32>
    %cst_89 = arith.constant 0.000000e+00 : f32
    %188 = vector.broadcast %cst_89 : f32 to vector<8x64xf32>
    %189 = arith.maximumf %187, %188 : vector<8x64xf32>
    %c0_90 = arith.constant 0 : index
    %c0_91 = arith.constant 0 : index
    %c0_92 = arith.constant 0 : index
    %190 = vector.load %arg15[%c0_90, %c0_91, %c0_92] : memref<4x64x32xbf16, #tpu.memory_space<vmem>>, vector<1x64x32xbf16>
    %191 = vector.shape_cast %190 : vector<1x64x32xbf16> to vector<64x32xbf16>
    %192 = arith.truncf %189 : vector<8x64xf32> to vector<8x64xbf16>
    %cst_93 = arith.constant dense<0.000000e+00> : vector<8x32xf32>
    %193 = tpu.matmul %192, %191, %cst_93 {dimension_numbers = #tpu.dot_dimension_numbers<[1], [0], [0], [1], [0, 0, 1, 1], [], []>} : vector<8x64xbf16>, vector<64x32xbf16>, vector<8x32xf32> -> vector<8x32xf32>
    %c0_94 = arith.constant 0 : index
    %c0_95 = arith.constant 0 : index
    %c0_96 = arith.constant 0 : index
    %194 = vector.load %arg16[%c0_94, %c0_95, %c0_96] : memref<4x1x32xf32, #tpu.memory_space<vmem>>, vector<1x1x32xf32>
    %195 = vector.shape_cast %194 : vector<1x1x32xf32> to vector<1x32xf32>
    %196 = vector.broadcast %195 : vector<1x32xf32> to vector<8x32xf32>
    %197 = arith.addf %193, %196 : vector<8x32xf32>
    %198 = arith.addf %124, %197 : vector<8x32xf32>
    %c0_97 = arith.constant 0 : index
    %c0_98 = arith.constant 0 : index
    %c0_99 = arith.constant 0 : index
    %199 = vector.load %arg13[%c0_97, %c0_98, %c0_99] : memref<4x32x64xbf16, #tpu.memory_space<vmem>>, vector<1x32x64xbf16>
    %200 = vector.shape_cast %199 : vector<1x32x64xbf16> to vector<32x64xbf16>
    %201 = arith.truncf %179 : vector<8x32xf32> to vector<8x32xbf16>
    %cst_100 = arith.constant dense<0.000000e+00> : vector<8x64xf32>
    %202 = tpu.matmul %201, %200, %cst_100 {dimension_numbers = #tpu.dot_dimension_numbers<[1], [0], [0], [1], [0, 0, 1, 1], [], []>} : vector<8x32xbf16>, vector<32x64xbf16>, vector<8x64xf32> -> vector<8x64xf32>
    %c0_101 = arith.constant 0 : index
    %c0_102 = arith.constant 0 : index
    %c0_103 = arith.constant 0 : index
    %203 = vector.load %arg14[%c0_101, %c0_102, %c0_103] : memref<4x1x64xf32, #tpu.memory_space<vmem>>, vector<1x1x64xf32>
    %204 = vector.shape_cast %203 : vector<1x1x64xf32> to vector<1x64xf32>
    %205 = vector.broadcast %204 : vector<1x64xf32> to vector<8x64xf32>
    %206 = arith.addf %202, %205 : vector<8x64xf32>
    %cst_104 = arith.constant 0.000000e+00 : f32
    %207 = vector.broadcast %cst_104 : f32 to vector<8x64xf32>
    %208 = arith.maximumf %206, %207 : vector<8x64xf32>
    %c0_105 = arith.constant 0 : index
    %c0_106 = arith.constant 0 : index
    %c0_107 = arith.constant 0 : index
    %209 = vector.load %arg15[%c0_105, %c0_106, %c0_107] : memref<4x64x32xbf16, #tpu.memory_space<vmem>>, vector<1x64x32xbf16>
    %210 = vector.shape_cast %209 : vector<1x64x32xbf16> to vector<64x32xbf16>
    %211 = arith.truncf %208 : vector<8x64xf32> to vector<8x64xbf16>
    %cst_108 = arith.constant dense<0.000000e+00> : vector<8x32xf32>
    %212 = tpu.matmul %211, %210, %cst_108 {dimension_numbers = #tpu.dot_dimension_numbers<[1], [0], [0], [1], [0, 0, 1, 1], [], []>} : vector<8x64xbf16>, vector<64x32xbf16>, vector<8x32xf32> -> vector<8x32xf32>
    %c0_109 = arith.constant 0 : index
    %c0_110 = arith.constant 0 : index
    %c0_111 = arith.constant 0 : index
    %213 = vector.load %arg16[%c0_109, %c0_110, %c0_111] : memref<4x1x32xf32, #tpu.memory_space<vmem>>, vector<1x1x32xf32>
    %214 = vector.shape_cast %213 : vector<1x1x32xf32> to vector<1x32xf32>
    %215 = vector.broadcast %214 : vector<1x32xf32> to vector<8x32xf32>
    %216 = arith.addf %212, %215 : vector<8x32xf32>
    %217 = arith.addf %129, %216 : vector<8x32xf32>
    %c2 = arith.constant 2 : index
    %c0_112 = arith.constant 0 : index
    %c0_113 = arith.constant 0 : index
    %218 = vector.load %arg17[%c2, %c0_112, %c0_113] : memref<12x1x32xf32, #tpu.memory_space<vmem>>, vector<1x1x32xf32>
    %219 = vector.shape_cast %218 : vector<1x1x32xf32> to vector<1x32xf32>
    %c2_114 = arith.constant 2 : index
    %c0_115 = arith.constant 0 : index
    %c0_116 = arith.constant 0 : index
    %220 = vector.load %arg18[%c2_114, %c0_115, %c0_116] : memref<12x1x32xf32, #tpu.memory_space<vmem>>, vector<1x1x32xf32>
    %221 = vector.shape_cast %220 : vector<1x1x32xf32> to vector<1x32xf32>
    %cst_117 = arith.constant dense<0.000000e+00> : vector<8xf32>
    %222 = vector.multi_reduction <add>, %198, %cst_117 [1] : vector<8x32xf32> to vector<8xf32>
    %223 = vector.shape_cast %222 : vector<8xf32> to vector<8x1xf32>
    %cst_118 = arith.constant 3.200000e+01 : f32
    %224 = vector.broadcast %cst_118 : f32 to vector<8x1xf32>
    %225 = arith.divf %223, %224 : vector<8x1xf32>
    %226 = vector.broadcast %225 : vector<8x1xf32> to vector<8x32xf32>
    %227 = arith.subf %198, %226 : vector<8x32xf32>
    %228 = arith.mulf %227, %227 : vector<8x32xf32>
    %cst_119 = arith.constant dense<0.000000e+00> : vector<8xf32>
    %229 = vector.multi_reduction <add>, %228, %cst_119 [1] : vector<8x32xf32> to vector<8xf32>
    %230 = vector.shape_cast %229 : vector<8xf32> to vector<8x1xf32>
    %cst_120 = arith.constant 0.0322580636 : f32
    %231 = vector.broadcast %cst_120 : f32 to vector<8x1xf32>
    %232 = arith.mulf %230, %231 : vector<8x1xf32>
    %233 = math.sqrt %232 : vector<8x1xf32>
    %cst_121 = arith.constant 9.99999997E-7 : f32
    %234 = vector.broadcast %cst_121 : f32 to vector<8x1xf32>
    %235 = arith.addf %233, %234 : vector<8x1xf32>
    %236 = tpu.reciprocal %235 {approx = true} : vector<8x1xf32> -> vector<8x1xf32>
    %237 = vector.broadcast %219 : vector<1x32xf32> to vector<8x32xf32>
    %238 = arith.mulf %237, %227 : vector<8x32xf32>
    %239 = vector.broadcast %236 : vector<8x1xf32> to vector<8x32xf32>
    %240 = arith.mulf %238, %239 : vector<8x32xf32>
    %241 = vector.broadcast %221 : vector<1x32xf32> to vector<8x32xf32>
    %242 = arith.addf %240, %241 : vector<8x32xf32>
    %c2_122 = arith.constant 2 : index
    %c0_123 = arith.constant 0 : index
    %c0_124 = arith.constant 0 : index
    %243 = vector.load %arg17[%c2_122, %c0_123, %c0_124] : memref<12x1x32xf32, #tpu.memory_space<vmem>>, vector<1x1x32xf32>
    %244 = vector.shape_cast %243 : vector<1x1x32xf32> to vector<1x32xf32>
    %c2_125 = arith.constant 2 : index
    %c0_126 = arith.constant 0 : index
    %c0_127 = arith.constant 0 : index
    %245 = vector.load %arg18[%c2_125, %c0_126, %c0_127] : memref<12x1x32xf32, #tpu.memory_space<vmem>>, vector<1x1x32xf32>
    %246 = vector.shape_cast %245 : vector<1x1x32xf32> to vector<1x32xf32>
    %cst_128 = arith.constant dense<0.000000e+00> : vector<8xf32>
    %247 = vector.multi_reduction <add>, %217, %cst_128 [1] : vector<8x32xf32> to vector<8xf32>
    %248 = vector.shape_cast %247 : vector<8xf32> to vector<8x1xf32>
    %cst_129 = arith.constant 3.200000e+01 : f32
    %249 = vector.broadcast %cst_129 : f32 to vector<8x1xf32>
    %250 = arith.divf %248, %249 : vector<8x1xf32>
    %251 = vector.broadcast %250 : vector<8x1xf32> to vector<8x32xf32>
    %252 = arith.subf %217, %251 : vector<8x32xf32>
    %253 = arith.mulf %252, %252 : vector<8x32xf32>
    %cst_130 = arith.constant dense<0.000000e+00> : vector<8xf32>
    %254 = vector.multi_reduction <add>, %253, %cst_130 [1] : vector<8x32xf32> to vector<8xf32>
    %255 = vector.shape_cast %254 : vector<8xf32> to vector<8x1xf32>
    %cst_131 = arith.constant 0.0322580636 : f32
    %256 = vector.broadcast %cst_131 : f32 to vector<8x1xf32>
    %257 = arith.mulf %255, %256 : vector<8x1xf32>
    %258 = math.sqrt %257 : vector<8x1xf32>
    %cst_132 = arith.constant 9.99999997E-7 : f32
    %259 = vector.broadcast %cst_132 : f32 to vector<8x1xf32>
    %260 = arith.addf %258, %259 : vector<8x1xf32>
    %261 = tpu.reciprocal %260 {approx = true} : vector<8x1xf32> -> vector<8x1xf32>
    %262 = vector.broadcast %244 : vector<1x32xf32> to vector<8x32xf32>
    %263 = arith.mulf %262, %252 : vector<8x32xf32>
    %264 = vector.broadcast %261 : vector<8x1xf32> to vector<8x32xf32>
    %265 = arith.mulf %263, %264 : vector<8x32xf32>
    %266 = vector.broadcast %246 : vector<1x32xf32> to vector<8x32xf32>
    %267 = arith.addf %265, %266 : vector<8x32xf32>
    %c1_133 = arith.constant 1 : index
    %c0_134 = arith.constant 0 : index
    %c0_135 = arith.constant 0 : index
    %268 = vector.load %arg7[%c1_133, %c0_134, %c0_135] : memref<2x32x96xbf16, #tpu.memory_space<vmem>>, vector<1x32x96xbf16>
    %269 = vector.shape_cast %268 : vector<1x32x96xbf16> to vector<32x96xbf16>
    %270 = arith.truncf %242 : vector<8x32xf32> to vector<8x32xbf16>
    %cst_136 = arith.constant dense<0.000000e+00> : vector<8x96xf32>
    %271 = tpu.matmul %270, %269, %cst_136 {dimension_numbers = #tpu.dot_dimension_numbers<[1], [0], [0], [1], [0, 0, 1, 1], [], []>} : vector<8x32xbf16>, vector<32x96xbf16>, vector<8x96xf32> -> vector<8x96xf32>
    %c1_137 = arith.constant 1 : index
    %c0_138 = arith.constant 0 : index
    %c0_139 = arith.constant 0 : index
    %272 = vector.load %arg8[%c1_137, %c0_138, %c0_139] : memref<2x1x96xf32, #tpu.memory_space<vmem>>, vector<1x1x96xf32>
    %273 = vector.shape_cast %272 : vector<1x1x96xf32> to vector<1x96xf32>
    %274 = vector.broadcast %273 : vector<1x96xf32> to vector<8x96xf32>
    %275 = arith.addf %271, %274 : vector<8x96xf32>
    %c1_140 = arith.constant 1 : index
    %c0_141 = arith.constant 0 : index
    %c0_142 = arith.constant 0 : index
    %276 = vector.load %arg7[%c1_140, %c0_141, %c0_142] : memref<2x32x96xbf16, #tpu.memory_space<vmem>>, vector<1x32x96xbf16>
    %277 = vector.shape_cast %276 : vector<1x32x96xbf16> to vector<32x96xbf16>
    %278 = arith.truncf %267 : vector<8x32xf32> to vector<8x32xbf16>
    %cst_143 = arith.constant dense<0.000000e+00> : vector<8x96xf32>
    %279 = tpu.matmul %278, %277, %cst_143 {dimension_numbers = #tpu.dot_dimension_numbers<[1], [0], [0], [1], [0, 0, 1, 1], [], []>} : vector<8x32xbf16>, vector<32x96xbf16>, vector<8x96xf32> -> vector<8x96xf32>
    %c1_144 = arith.constant 1 : index
    %c0_145 = arith.constant 0 : index
    %c0_146 = arith.constant 0 : index
    %280 = vector.load %arg8[%c1_144, %c0_145, %c0_146] : memref<2x1x96xf32, #tpu.memory_space<vmem>>, vector<1x1x96xf32>
    %281 = vector.shape_cast %280 : vector<1x1x96xf32> to vector<1x96xf32>
    %282 = vector.broadcast %281 : vector<1x96xf32> to vector<8x96xf32>
    %283 = arith.addf %279, %282 : vector<8x96xf32>
    %284 = vector.extract_strided_slice %275 {offsets = [0, 0], sizes = [8, 32], strides = [1, 1]} : vector<8x96xf32> to vector<8x32xf32>
    %285 = vector.extract_strided_slice %275 {offsets = [0, 32], sizes = [8, 32], strides = [1, 1]} : vector<8x96xf32> to vector<8x32xf32>
    %286 = vector.extract_strided_slice %275 {offsets = [0, 64], sizes = [8, 32], strides = [1, 1]} : vector<8x96xf32> to vector<8x32xf32>
    %287 = vector.extract_strided_slice %283 {offsets = [0, 0], sizes = [8, 32], strides = [1, 1]} : vector<8x96xf32> to vector<8x32xf32>
    %288 = vector.extract_strided_slice %283 {offsets = [0, 32], sizes = [8, 32], strides = [1, 1]} : vector<8x96xf32> to vector<8x32xf32>
    %289 = vector.extract_strided_slice %283 {offsets = [0, 64], sizes = [8, 32], strides = [1, 1]} : vector<8x96xf32> to vector<8x32xf32>
    %290 = arith.subf %288, %285 : vector<8x32xf32>
    %291 = arith.mulf %284, %290 : vector<8x32xf32>
    %292 = arith.truncf %291 : vector<8x32xf32> to vector<8x32xbf16>
    %cst_147 = arith.constant dense<0.000000e+00> : vector<8x32xf32>
    %293 = tpu.matmul %292, %7, %cst_147 {dimension_numbers = #tpu.dot_dimension_numbers<[1], [0], [0], [1], [0, 0, 1, 1], [], []>} : vector<8x32xbf16>, vector<32x32xbf16>, vector<8x32xf32> -> vector<8x32xf32>
    %294 = vector.broadcast %10 : vector<8x1xf32> to vector<8x32xf32>
    %295 = arith.addf %293, %294 : vector<8x32xf32>
    %296 = arith.subf %285, %288 : vector<8x32xf32>
    %297 = arith.mulf %287, %296 : vector<8x32xf32>
    %298 = arith.truncf %297 : vector<8x32xf32> to vector<8x32xbf16>
    %cst_148 = arith.constant dense<0.000000e+00> : vector<8x32xf32>
    %299 = tpu.matmul %298, %7, %cst_148 {dimension_numbers = #tpu.dot_dimension_numbers<[1], [0], [0], [1], [0, 0, 1, 1], [], []>} : vector<8x32xbf16>, vector<32x32xbf16>, vector<8x32xf32> -> vector<8x32xf32>
    %300 = vector.broadcast %11 : vector<8x1xf32> to vector<8x32xf32>
    %301 = arith.addf %299, %300 : vector<8x32xf32>
    %cst_149 = arith.constant 0.000000e+00 : f32
    %302 = vector.broadcast %cst_149 : f32 to vector<8x32xf32>
    %303 = arith.subf %302, %295 : vector<8x32xf32>
    %304 = math.exp %303 : vector<8x32xf32>
    %cst_150 = arith.constant 1.000000e+00 : f32
    %305 = vector.broadcast %cst_150 : f32 to vector<8x32xf32>
    %306 = arith.addf %305, %304 : vector<8x32xf32>
    %cst_151 = arith.constant 1.000000e+00 : f32
    %307 = vector.broadcast %cst_151 : f32 to vector<8x32xf32>
    %308 = arith.divf %307, %306 : vector<8x32xf32>
    %cst_152 = arith.constant 0.000000e+00 : f32
    %309 = vector.broadcast %cst_152 : f32 to vector<8x32xf32>
    %310 = arith.subf %309, %301 : vector<8x32xf32>
    %311 = math.exp %310 : vector<8x32xf32>
    %cst_153 = arith.constant 1.000000e+00 : f32
    %312 = vector.broadcast %cst_153 : f32 to vector<8x32xf32>
    %313 = arith.addf %312, %311 : vector<8x32xf32>
    %cst_154 = arith.constant 1.000000e+00 : f32
    %314 = vector.broadcast %cst_154 : f32 to vector<8x32xf32>
    %315 = arith.divf %314, %313 : vector<8x32xf32>
    %316 = arith.subf %289, %286 : vector<8x32xf32>
    %317 = arith.mulf %308, %316 : vector<8x32xf32>
    %318 = arith.addf %286, %317 : vector<8x32xf32>
    %319 = arith.subf %286, %289 : vector<8x32xf32>
    %320 = arith.mulf %315, %319 : vector<8x32xf32>
    %321 = arith.addf %289, %320 : vector<8x32xf32>
    %c1_155 = arith.constant 1 : index
    %c0_156 = arith.constant 0 : index
    %c0_157 = arith.constant 0 : index
    %322 = vector.load %arg9[%c1_155, %c0_156, %c0_157] : memref<8x32x32xbf16, #tpu.memory_space<vmem>>, vector<1x32x32xbf16>
    %323 = vector.shape_cast %322 : vector<1x32x32xbf16> to vector<32x32xbf16>
    %c1_158 = arith.constant 1 : index
    %c0_159 = arith.constant 0 : index
    %c0_160 = arith.constant 0 : index
    %324 = vector.load %arg10[%c1_158, %c0_159, %c0_160] : memref<8x1x32xf32, #tpu.memory_space<vmem>>, vector<1x1x32xf32>
    %325 = vector.shape_cast %324 : vector<1x1x32xf32> to vector<1x32xf32>
    %326 = arith.truncf %318 : vector<8x32xf32> to vector<8x32xbf16>
    %cst_161 = arith.constant dense<0.000000e+00> : vector<8x32xf32>
    %327 = tpu.matmul %326, %323, %cst_161 {dimension_numbers = #tpu.dot_dimension_numbers<[1], [0], [0], [1], [0, 0, 1, 1], [], []>} : vector<8x32xbf16>, vector<32x32xbf16>, vector<8x32xf32> -> vector<8x32xf32>
    %328 = arith.addf %198, %327 : vector<8x32xf32>
    %329 = vector.broadcast %325 : vector<1x32xf32> to vector<8x32xf32>
    %330 = arith.addf %328, %329 : vector<8x32xf32>
    %331 = arith.truncf %321 : vector<8x32xf32> to vector<8x32xbf16>
    %cst_162 = arith.constant dense<0.000000e+00> : vector<8x32xf32>
    %332 = tpu.matmul %331, %323, %cst_162 {dimension_numbers = #tpu.dot_dimension_numbers<[1], [0], [0], [1], [0, 0, 1, 1], [], []>} : vector<8x32xbf16>, vector<32x32xbf16>, vector<8x32xf32> -> vector<8x32xf32>
    %333 = arith.addf %217, %332 : vector<8x32xf32>
    %334 = vector.broadcast %325 : vector<1x32xf32> to vector<8x32xf32>
    %335 = arith.addf %333, %334 : vector<8x32xf32>
    %c3 = arith.constant 3 : index
    %c0_163 = arith.constant 0 : index
    %c0_164 = arith.constant 0 : index
    %336 = vector.load %arg17[%c3, %c0_163, %c0_164] : memref<12x1x32xf32, #tpu.memory_space<vmem>>, vector<1x1x32xf32>
    %337 = vector.shape_cast %336 : vector<1x1x32xf32> to vector<1x32xf32>
    %c3_165 = arith.constant 3 : index
    %c0_166 = arith.constant 0 : index
    %c0_167 = arith.constant 0 : index
    %338 = vector.load %arg18[%c3_165, %c0_166, %c0_167] : memref<12x1x32xf32, #tpu.memory_space<vmem>>, vector<1x1x32xf32>
    %339 = vector.shape_cast %338 : vector<1x1x32xf32> to vector<1x32xf32>
    %cst_168 = arith.constant dense<0.000000e+00> : vector<8xf32>
    %340 = vector.multi_reduction <add>, %330, %cst_168 [1] : vector<8x32xf32> to vector<8xf32>
    %341 = vector.shape_cast %340 : vector<8xf32> to vector<8x1xf32>
    %cst_169 = arith.constant 3.200000e+01 : f32
    %342 = vector.broadcast %cst_169 : f32 to vector<8x1xf32>
    %343 = arith.divf %341, %342 : vector<8x1xf32>
    %344 = vector.broadcast %343 : vector<8x1xf32> to vector<8x32xf32>
    %345 = arith.subf %330, %344 : vector<8x32xf32>
    %346 = arith.mulf %345, %345 : vector<8x32xf32>
    %cst_170 = arith.constant dense<0.000000e+00> : vector<8xf32>
    %347 = vector.multi_reduction <add>, %346, %cst_170 [1] : vector<8x32xf32> to vector<8xf32>
    %348 = vector.shape_cast %347 : vector<8xf32> to vector<8x1xf32>
    %cst_171 = arith.constant 0.0322580636 : f32
    %349 = vector.broadcast %cst_171 : f32 to vector<8x1xf32>
    %350 = arith.mulf %348, %349 : vector<8x1xf32>
    %351 = math.sqrt %350 : vector<8x1xf32>
    %cst_172 = arith.constant 9.99999997E-7 : f32
    %352 = vector.broadcast %cst_172 : f32 to vector<8x1xf32>
    %353 = arith.addf %351, %352 : vector<8x1xf32>
    %354 = tpu.reciprocal %353 {approx = true} : vector<8x1xf32> -> vector<8x1xf32>
    %355 = vector.broadcast %337 : vector<1x32xf32> to vector<8x32xf32>
    %356 = arith.mulf %355, %345 : vector<8x32xf32>
    %357 = vector.broadcast %354 : vector<8x1xf32> to vector<8x32xf32>
    %358 = arith.mulf %356, %357 : vector<8x32xf32>
    %359 = vector.broadcast %339 : vector<1x32xf32> to vector<8x32xf32>
    %360 = arith.addf %358, %359 : vector<8x32xf32>
    %c3_173 = arith.constant 3 : index
    %c0_174 = arith.constant 0 : index
    %c0_175 = arith.constant 0 : index
    %361 = vector.load %arg17[%c3_173, %c0_174, %c0_175] : memref<12x1x32xf32, #tpu.memory_space<vmem>>, vector<1x1x32xf32>
    %362 = vector.shape_cast %361 : vector<1x1x32xf32> to vector<1x32xf32>
    %c3_176 = arith.constant 3 : index
    %c0_177 = arith.constant 0 : index
    %c0_178 = arith.constant 0 : index
    %363 = vector.load %arg18[%c3_176, %c0_177, %c0_178] : memref<12x1x32xf32, #tpu.memory_space<vmem>>, vector<1x1x32xf32>
    %364 = vector.shape_cast %363 : vector<1x1x32xf32> to vector<1x32xf32>
    %cst_179 = arith.constant dense<0.000000e+00> : vector<8xf32>
    %365 = vector.multi_reduction <add>, %335, %cst_179 [1] : vector<8x32xf32> to vector<8xf32>
    %366 = vector.shape_cast %365 : vector<8xf32> to vector<8x1xf32>
    %cst_180 = arith.constant 3.200000e+01 : f32
    %367 = vector.broadcast %cst_180 : f32 to vector<8x1xf32>
    %368 = arith.divf %366, %367 : vector<8x1xf32>
    %369 = vector.broadcast %368 : vector<8x1xf32> to vector<8x32xf32>
    %370 = arith.subf %335, %369 : vector<8x32xf32>
    %371 = arith.mulf %370, %370 : vector<8x32xf32>
    %cst_181 = arith.constant dense<0.000000e+00> : vector<8xf32>
    %372 = vector.multi_reduction <add>, %371, %cst_181 [1] : vector<8x32xf32> to vector<8xf32>
    %373 = vector.shape_cast %372 : vector<8xf32> to vector<8x1xf32>
    %cst_182 = arith.constant 0.0322580636 : f32
    %374 = vector.broadcast %cst_182 : f32 to vector<8x1xf32>
    %375 = arith.mulf %373, %374 : vector<8x1xf32>
    %376 = math.sqrt %375 : vector<8x1xf32>
    %cst_183 = arith.constant 9.99999997E-7 : f32
    %377 = vector.broadcast %cst_183 : f32 to vector<8x1xf32>
    %378 = arith.addf %376, %377 : vector<8x1xf32>
    %379 = tpu.reciprocal %378 {approx = true} : vector<8x1xf32> -> vector<8x1xf32>
    %380 = vector.broadcast %362 : vector<1x32xf32> to vector<8x32xf32>
    %381 = arith.mulf %380, %370 : vector<8x32xf32>
    %382 = vector.broadcast %379 : vector<8x1xf32> to vector<8x32xf32>
    %383 = arith.mulf %381, %382 : vector<8x32xf32>
    %384 = vector.broadcast %364 : vector<1x32xf32> to vector<8x32xf32>
    %385 = arith.addf %383, %384 : vector<8x32xf32>
    %c1_184 = arith.constant 1 : index
    %c0_185 = arith.constant 0 : index
    %c0_186 = arith.constant 0 : index
    %386 = vector.load %arg13[%c1_184, %c0_185, %c0_186] : memref<4x32x64xbf16, #tpu.memory_space<vmem>>, vector<1x32x64xbf16>
    %387 = vector.shape_cast %386 : vector<1x32x64xbf16> to vector<32x64xbf16>
    %388 = arith.truncf %360 : vector<8x32xf32> to vector<8x32xbf16>
    %cst_187 = arith.constant dense<0.000000e+00> : vector<8x64xf32>
    %389 = tpu.matmul %388, %387, %cst_187 {dimension_numbers = #tpu.dot_dimension_numbers<[1], [0], [0], [1], [0, 0, 1, 1], [], []>} : vector<8x32xbf16>, vector<32x64xbf16>, vector<8x64xf32> -> vector<8x64xf32>
    %c1_188 = arith.constant 1 : index
    %c0_189 = arith.constant 0 : index
    %c0_190 = arith.constant 0 : index
    %390 = vector.load %arg14[%c1_188, %c0_189, %c0_190] : memref<4x1x64xf32, #tpu.memory_space<vmem>>, vector<1x1x64xf32>
    %391 = vector.shape_cast %390 : vector<1x1x64xf32> to vector<1x64xf32>
    %392 = vector.broadcast %391 : vector<1x64xf32> to vector<8x64xf32>
    %393 = arith.addf %389, %392 : vector<8x64xf32>
    %cst_191 = arith.constant 0.000000e+00 : f32
    %394 = vector.broadcast %cst_191 : f32 to vector<8x64xf32>
    %395 = arith.maximumf %393, %394 : vector<8x64xf32>
    %c1_192 = arith.constant 1 : index
    %c0_193 = arith.constant 0 : index
    %c0_194 = arith.constant 0 : index
    %396 = vector.load %arg15[%c1_192, %c0_193, %c0_194] : memref<4x64x32xbf16, #tpu.memory_space<vmem>>, vector<1x64x32xbf16>
    %397 = vector.shape_cast %396 : vector<1x64x32xbf16> to vector<64x32xbf16>
    %398 = arith.truncf %395 : vector<8x64xf32> to vector<8x64xbf16>
    %cst_195 = arith.constant dense<0.000000e+00> : vector<8x32xf32>
    %399 = tpu.matmul %398, %397, %cst_195 {dimension_numbers = #tpu.dot_dimension_numbers<[1], [0], [0], [1], [0, 0, 1, 1], [], []>} : vector<8x64xbf16>, vector<64x32xbf16>, vector<8x32xf32> -> vector<8x32xf32>
    %c1_196 = arith.constant 1 : index
    %c0_197 = arith.constant 0 : index
    %c0_198 = arith.constant 0 : index
    %400 = vector.load %arg16[%c1_196, %c0_197, %c0_198] : memref<4x1x32xf32, #tpu.memory_space<vmem>>, vector<1x1x32xf32>
    %401 = vector.shape_cast %400 : vector<1x1x32xf32> to vector<1x32xf32>
    %402 = vector.broadcast %401 : vector<1x32xf32> to vector<8x32xf32>
    %403 = arith.addf %399, %402 : vector<8x32xf32>
    %404 = arith.addf %330, %403 : vector<8x32xf32>
    %c1_199 = arith.constant 1 : index
    %c0_200 = arith.constant 0 : index
    %c0_201 = arith.constant 0 : index
    %405 = vector.load %arg13[%c1_199, %c0_200, %c0_201] : memref<4x32x64xbf16, #tpu.memory_space<vmem>>, vector<1x32x64xbf16>
    %406 = vector.shape_cast %405 : vector<1x32x64xbf16> to vector<32x64xbf16>
    %407 = arith.truncf %385 : vector<8x32xf32> to vector<8x32xbf16>
    %cst_202 = arith.constant dense<0.000000e+00> : vector<8x64xf32>
    %408 = tpu.matmul %407, %406, %cst_202 {dimension_numbers = #tpu.dot_dimension_numbers<[1], [0], [0], [1], [0, 0, 1, 1], [], []>} : vector<8x32xbf16>, vector<32x64xbf16>, vector<8x64xf32> -> vector<8x64xf32>
    %c1_203 = arith.constant 1 : index
    %c0_204 = arith.constant 0 : index
    %c0_205 = arith.constant 0 : index
    %409 = vector.load %arg14[%c1_203, %c0_204, %c0_205] : memref<4x1x64xf32, #tpu.memory_space<vmem>>, vector<1x1x64xf32>
    %410 = vector.shape_cast %409 : vector<1x1x64xf32> to vector<1x64xf32>
    %411 = vector.broadcast %410 : vector<1x64xf32> to vector<8x64xf32>
    %412 = arith.addf %408, %411 : vector<8x64xf32>
    %cst_206 = arith.constant 0.000000e+00 : f32
    %413 = vector.broadcast %cst_206 : f32 to vector<8x64xf32>
    %414 = arith.maximumf %412, %413 : vector<8x64xf32>
    %c1_207 = arith.constant 1 : index
    %c0_208 = arith.constant 0 : index
    %c0_209 = arith.constant 0 : index
    %415 = vector.load %arg15[%c1_207, %c0_208, %c0_209] : memref<4x64x32xbf16, #tpu.memory_space<vmem>>, vector<1x64x32xbf16>
    %416 = vector.shape_cast %415 : vector<1x64x32xbf16> to vector<64x32xbf16>
    %417 = arith.truncf %414 : vector<8x64xf32> to vector<8x64xbf16>
    %cst_210 = arith.constant dense<0.000000e+00> : vector<8x32xf32>
    %418 = tpu.matmul %417, %416, %cst_210 {dimension_numbers = #tpu.dot_dimension_numbers<[1], [0], [0], [1], [0, 0, 1, 1], [], []>} : vector<8x64xbf16>, vector<64x32xbf16>, vector<8x32xf32> -> vector<8x32xf32>
    %c1_211 = arith.constant 1 : index
    %c0_212 = arith.constant 0 : index
    %c0_213 = arith.constant 0 : index
    %419 = vector.load %arg16[%c1_211, %c0_212, %c0_213] : memref<4x1x32xf32, #tpu.memory_space<vmem>>, vector<1x1x32xf32>
    %420 = vector.shape_cast %419 : vector<1x1x32xf32> to vector<1x32xf32>
    %421 = vector.broadcast %420 : vector<1x32xf32> to vector<8x32xf32>
    %422 = arith.addf %418, %421 : vector<8x32xf32>
    %423 = arith.addf %335, %422 : vector<8x32xf32>
    %c4 = arith.constant 4 : index
    %c0_214 = arith.constant 0 : index
    %c0_215 = arith.constant 0 : index
    %424 = vector.load %arg17[%c4, %c0_214, %c0_215] : memref<12x1x32xf32, #tpu.memory_space<vmem>>, vector<1x1x32xf32>
    %425 = vector.shape_cast %424 : vector<1x1x32xf32> to vector<1x32xf32>
    %c4_216 = arith.constant 4 : index
    %c0_217 = arith.constant 0 : index
    %c0_218 = arith.constant 0 : index
    %426 = vector.load %arg18[%c4_216, %c0_217, %c0_218] : memref<12x1x32xf32, #tpu.memory_space<vmem>>, vector<1x1x32xf32>
    %427 = vector.shape_cast %426 : vector<1x1x32xf32> to vector<1x32xf32>
    %cst_219 = arith.constant dense<0.000000e+00> : vector<8xf32>
    %428 = vector.multi_reduction <add>, %404, %cst_219 [1] : vector<8x32xf32> to vector<8xf32>
    %429 = vector.shape_cast %428 : vector<8xf32> to vector<8x1xf32>
    %cst_220 = arith.constant 3.200000e+01 : f32
    %430 = vector.broadcast %cst_220 : f32 to vector<8x1xf32>
    %431 = arith.divf %429, %430 : vector<8x1xf32>
    %432 = vector.broadcast %431 : vector<8x1xf32> to vector<8x32xf32>
    %433 = arith.subf %404, %432 : vector<8x32xf32>
    %434 = arith.mulf %433, %433 : vector<8x32xf32>
    %cst_221 = arith.constant dense<0.000000e+00> : vector<8xf32>
    %435 = vector.multi_reduction <add>, %434, %cst_221 [1] : vector<8x32xf32> to vector<8xf32>
    %436 = vector.shape_cast %435 : vector<8xf32> to vector<8x1xf32>
    %cst_222 = arith.constant 0.0322580636 : f32
    %437 = vector.broadcast %cst_222 : f32 to vector<8x1xf32>
    %438 = arith.mulf %436, %437 : vector<8x1xf32>
    %439 = math.sqrt %438 : vector<8x1xf32>
    %cst_223 = arith.constant 9.99999997E-7 : f32
    %440 = vector.broadcast %cst_223 : f32 to vector<8x1xf32>
    %441 = arith.addf %439, %440 : vector<8x1xf32>
    %442 = tpu.reciprocal %441 {approx = true} : vector<8x1xf32> -> vector<8x1xf32>
    %443 = vector.broadcast %425 : vector<1x32xf32> to vector<8x32xf32>
    %444 = arith.mulf %443, %433 : vector<8x32xf32>
    %445 = vector.broadcast %442 : vector<8x1xf32> to vector<8x32xf32>
    %446 = arith.mulf %444, %445 : vector<8x32xf32>
    %447 = vector.broadcast %427 : vector<1x32xf32> to vector<8x32xf32>
    %448 = arith.addf %446, %447 : vector<8x32xf32>
    %c4_224 = arith.constant 4 : index
    %c0_225 = arith.constant 0 : index
    %c0_226 = arith.constant 0 : index
    %449 = vector.load %arg17[%c4_224, %c0_225, %c0_226] : memref<12x1x32xf32, #tpu.memory_space<vmem>>, vector<1x1x32xf32>
    %450 = vector.shape_cast %449 : vector<1x1x32xf32> to vector<1x32xf32>
    %c4_227 = arith.constant 4 : index
    %c0_228 = arith.constant 0 : index
    %c0_229 = arith.constant 0 : index
    %451 = vector.load %arg18[%c4_227, %c0_228, %c0_229] : memref<12x1x32xf32, #tpu.memory_space<vmem>>, vector<1x1x32xf32>
    %452 = vector.shape_cast %451 : vector<1x1x32xf32> to vector<1x32xf32>
    %cst_230 = arith.constant dense<0.000000e+00> : vector<8xf32>
    %453 = vector.multi_reduction <add>, %423, %cst_230 [1] : vector<8x32xf32> to vector<8xf32>
    %454 = vector.shape_cast %453 : vector<8xf32> to vector<8x1xf32>
    %cst_231 = arith.constant 3.200000e+01 : f32
    %455 = vector.broadcast %cst_231 : f32 to vector<8x1xf32>
    %456 = arith.divf %454, %455 : vector<8x1xf32>
    %457 = vector.broadcast %456 : vector<8x1xf32> to vector<8x32xf32>
    %458 = arith.subf %423, %457 : vector<8x32xf32>
    %459 = arith.mulf %458, %458 : vector<8x32xf32>
    %cst_232 = arith.constant dense<0.000000e+00> : vector<8xf32>
    %460 = vector.multi_reduction <add>, %459, %cst_232 [1] : vector<8x32xf32> to vector<8xf32>
    %461 = vector.shape_cast %460 : vector<8xf32> to vector<8x1xf32>
    %cst_233 = arith.constant 0.0322580636 : f32
    %462 = vector.broadcast %cst_233 : f32 to vector<8x1xf32>
    %463 = arith.mulf %461, %462 : vector<8x1xf32>
    %464 = math.sqrt %463 : vector<8x1xf32>
    %cst_234 = arith.constant 9.99999997E-7 : f32
    %465 = vector.broadcast %cst_234 : f32 to vector<8x1xf32>
    %466 = arith.addf %464, %465 : vector<8x1xf32>
    %467 = tpu.reciprocal %466 {approx = true} : vector<8x1xf32> -> vector<8x1xf32>
    %468 = vector.broadcast %450 : vector<1x32xf32> to vector<8x32xf32>
    %469 = arith.mulf %468, %458 : vector<8x32xf32>
    %470 = vector.broadcast %467 : vector<8x1xf32> to vector<8x32xf32>
    %471 = arith.mulf %469, %470 : vector<8x32xf32>
    %472 = vector.broadcast %452 : vector<1x32xf32> to vector<8x32xf32>
    %473 = arith.addf %471, %472 : vector<8x32xf32>
    %c5 = arith.constant 5 : index
    %c0_235 = arith.constant 0 : index
    %c0_236 = arith.constant 0 : index
    %474 = vector.load %arg17[%c5, %c0_235, %c0_236] : memref<12x1x32xf32, #tpu.memory_space<vmem>>, vector<1x1x32xf32>
    %475 = vector.shape_cast %474 : vector<1x1x32xf32> to vector<1x32xf32>
    %c5_237 = arith.constant 5 : index
    %c0_238 = arith.constant 0 : index
    %c0_239 = arith.constant 0 : index
    %476 = vector.load %arg18[%c5_237, %c0_238, %c0_239] : memref<12x1x32xf32, #tpu.memory_space<vmem>>, vector<1x1x32xf32>
    %477 = vector.shape_cast %476 : vector<1x1x32xf32> to vector<1x32xf32>
    %cst_240 = arith.constant dense<0.000000e+00> : vector<8xf32>
    %478 = vector.multi_reduction <add>, %5, %cst_240 [1] : vector<8x32xf32> to vector<8xf32>
    %479 = vector.shape_cast %478 : vector<8xf32> to vector<8x1xf32>
    %cst_241 = arith.constant 3.200000e+01 : f32
    %480 = vector.broadcast %cst_241 : f32 to vector<8x1xf32>
    %481 = arith.divf %479, %480 : vector<8x1xf32>
    %482 = vector.broadcast %481 : vector<8x1xf32> to vector<8x32xf32>
    %483 = arith.subf %5, %482 : vector<8x32xf32>
    %484 = arith.mulf %483, %483 : vector<8x32xf32>
    %cst_242 = arith.constant dense<0.000000e+00> : vector<8xf32>
    %485 = vector.multi_reduction <add>, %484, %cst_242 [1] : vector<8x32xf32> to vector<8xf32>
    %486 = vector.shape_cast %485 : vector<8xf32> to vector<8x1xf32>
    %cst_243 = arith.constant 0.0322580636 : f32
    %487 = vector.broadcast %cst_243 : f32 to vector<8x1xf32>
    %488 = arith.mulf %486, %487 : vector<8x1xf32>
    %489 = math.sqrt %488 : vector<8x1xf32>
    %cst_244 = arith.constant 9.99999997E-7 : f32
    %490 = vector.broadcast %cst_244 : f32 to vector<8x1xf32>
    %491 = arith.addf %489, %490 : vector<8x1xf32>
    %492 = tpu.reciprocal %491 {approx = true} : vector<8x1xf32> -> vector<8x1xf32>
    %493 = vector.broadcast %475 : vector<1x32xf32> to vector<8x32xf32>
    %494 = arith.mulf %493, %483 : vector<8x32xf32>
    %495 = vector.broadcast %492 : vector<8x1xf32> to vector<8x32xf32>
    %496 = arith.mulf %494, %495 : vector<8x32xf32>
    %497 = vector.broadcast %477 : vector<1x32xf32> to vector<8x32xf32>
    %498 = arith.addf %496, %497 : vector<8x32xf32>
    %c2_245 = arith.constant 2 : index
    %c0_246 = arith.constant 0 : index
    %c0_247 = arith.constant 0 : index
    %499 = vector.load %arg9[%c2_245, %c0_246, %c0_247] : memref<8x32x32xbf16, #tpu.memory_space<vmem>>, vector<1x32x32xbf16>
    %500 = vector.shape_cast %499 : vector<1x32x32xbf16> to vector<32x32xbf16>
    %501 = arith.truncf %498 : vector<8x32xf32> to vector<8x32xbf16>
    %cst_248 = arith.constant dense<0.000000e+00> : vector<8x32xf32>
    %502 = tpu.matmul %501, %500, %cst_248 {dimension_numbers = #tpu.dot_dimension_numbers<[1], [0], [0], [1], [0, 0, 1, 1], [], []>} : vector<8x32xbf16>, vector<32x32xbf16>, vector<8x32xf32> -> vector<8x32xf32>
    %503 = arith.addf %5, %502 : vector<8x32xf32>
    %c2_249 = arith.constant 2 : index
    %c0_250 = arith.constant 0 : index
    %c0_251 = arith.constant 0 : index
    %504 = vector.load %arg10[%c2_249, %c0_250, %c0_251] : memref<8x1x32xf32, #tpu.memory_space<vmem>>, vector<1x1x32xf32>
    %505 = vector.shape_cast %504 : vector<1x1x32xf32> to vector<1x32xf32>
    %506 = vector.broadcast %505 : vector<1x32xf32> to vector<8x32xf32>
    %507 = arith.addf %503, %506 : vector<8x32xf32>
    %c6 = arith.constant 6 : index
    %c0_252 = arith.constant 0 : index
    %c0_253 = arith.constant 0 : index
    %508 = vector.load %arg17[%c6, %c0_252, %c0_253] : memref<12x1x32xf32, #tpu.memory_space<vmem>>, vector<1x1x32xf32>
    %509 = vector.shape_cast %508 : vector<1x1x32xf32> to vector<1x32xf32>
    %c6_254 = arith.constant 6 : index
    %c0_255 = arith.constant 0 : index
    %c0_256 = arith.constant 0 : index
    %510 = vector.load %arg18[%c6_254, %c0_255, %c0_256] : memref<12x1x32xf32, #tpu.memory_space<vmem>>, vector<1x1x32xf32>
    %511 = vector.shape_cast %510 : vector<1x1x32xf32> to vector<1x32xf32>
    %cst_257 = arith.constant dense<0.000000e+00> : vector<8xf32>
    %512 = vector.multi_reduction <add>, %507, %cst_257 [1] : vector<8x32xf32> to vector<8xf32>
    %513 = vector.shape_cast %512 : vector<8xf32> to vector<8x1xf32>
    %cst_258 = arith.constant 3.200000e+01 : f32
    %514 = vector.broadcast %cst_258 : f32 to vector<8x1xf32>
    %515 = arith.divf %513, %514 : vector<8x1xf32>
    %516 = vector.broadcast %515 : vector<8x1xf32> to vector<8x32xf32>
    %517 = arith.subf %507, %516 : vector<8x32xf32>
    %518 = arith.mulf %517, %517 : vector<8x32xf32>
    %cst_259 = arith.constant dense<0.000000e+00> : vector<8xf32>
    %519 = vector.multi_reduction <add>, %518, %cst_259 [1] : vector<8x32xf32> to vector<8xf32>
    %520 = vector.shape_cast %519 : vector<8xf32> to vector<8x1xf32>
    %cst_260 = arith.constant 0.0322580636 : f32
    %521 = vector.broadcast %cst_260 : f32 to vector<8x1xf32>
    %522 = arith.mulf %520, %521 : vector<8x1xf32>
    %523 = math.sqrt %522 : vector<8x1xf32>
    %cst_261 = arith.constant 9.99999997E-7 : f32
    %524 = vector.broadcast %cst_261 : f32 to vector<8x1xf32>
    %525 = arith.addf %523, %524 : vector<8x1xf32>
    %526 = tpu.reciprocal %525 {approx = true} : vector<8x1xf32> -> vector<8x1xf32>
    %527 = vector.broadcast %509 : vector<1x32xf32> to vector<8x32xf32>
    %528 = arith.mulf %527, %517 : vector<8x32xf32>
    %529 = vector.broadcast %526 : vector<8x1xf32> to vector<8x32xf32>
    %530 = arith.mulf %528, %529 : vector<8x32xf32>
    %531 = vector.broadcast %511 : vector<1x32xf32> to vector<8x32xf32>
    %532 = arith.addf %530, %531 : vector<8x32xf32>
    %c4_262 = arith.constant 4 : index
    %c0_263 = arith.constant 0 : index
    %c0_264 = arith.constant 0 : index
    %533 = vector.load %arg9[%c4_262, %c0_263, %c0_264] : memref<8x32x32xbf16, #tpu.memory_space<vmem>>, vector<1x32x32xbf16>
    %534 = vector.shape_cast %533 : vector<1x32x32xbf16> to vector<32x32xbf16>
    %535 = arith.truncf %532 : vector<8x32xf32> to vector<8x32xbf16>
    %cst_265 = arith.constant dense<0.000000e+00> : vector<8x32xf32>
    %536 = tpu.matmul %535, %534, %cst_265 {dimension_numbers = #tpu.dot_dimension_numbers<[1], [0], [0], [1], [0, 0, 1, 1], [], []>} : vector<8x32xbf16>, vector<32x32xbf16>, vector<8x32xf32> -> vector<8x32xf32>
    %c4_266 = arith.constant 4 : index
    %c0_267 = arith.constant 0 : index
    %c0_268 = arith.constant 0 : index
    %537 = vector.load %arg10[%c4_266, %c0_267, %c0_268] : memref<8x1x32xf32, #tpu.memory_space<vmem>>, vector<1x1x32xf32>
    %538 = vector.shape_cast %537 : vector<1x1x32xf32> to vector<1x32xf32>
    %539 = vector.broadcast %538 : vector<1x32xf32> to vector<8x32xf32>
    %540 = arith.addf %536, %539 : vector<8x32xf32>
    %c0_269 = arith.constant 0 : index
    %c0_270 = arith.constant 0 : index
    %c0_271 = arith.constant 0 : index
    %541 = vector.load %arg11[%c0_269, %c0_270, %c0_271] : memref<2x32x64xbf16, #tpu.memory_space<vmem>>, vector<1x32x64xbf16>
    %542 = vector.shape_cast %541 : vector<1x32x64xbf16> to vector<32x64xbf16>
    %543 = arith.truncf %448 : vector<8x32xf32> to vector<8x32xbf16>
    %cst_272 = arith.constant dense<0.000000e+00> : vector<8x64xf32>
    %544 = tpu.matmul %543, %542, %cst_272 {dimension_numbers = #tpu.dot_dimension_numbers<[1], [0], [0], [1], [0, 0, 1, 1], [], []>} : vector<8x32xbf16>, vector<32x64xbf16>, vector<8x64xf32> -> vector<8x64xf32>
    %c0_273 = arith.constant 0 : index
    %c0_274 = arith.constant 0 : index
    %c0_275 = arith.constant 0 : index
    %545 = vector.load %arg12[%c0_273, %c0_274, %c0_275] : memref<2x1x64xf32, #tpu.memory_space<vmem>>, vector<1x1x64xf32>
    %546 = vector.shape_cast %545 : vector<1x1x64xf32> to vector<1x64xf32>
    %547 = vector.broadcast %546 : vector<1x64xf32> to vector<8x64xf32>
    %548 = arith.addf %544, %547 : vector<8x64xf32>
    %c0_276 = arith.constant 0 : index
    %c0_277 = arith.constant 0 : index
    %c0_278 = arith.constant 0 : index
    %549 = vector.load %arg11[%c0_276, %c0_277, %c0_278] : memref<2x32x64xbf16, #tpu.memory_space<vmem>>, vector<1x32x64xbf16>
    %550 = vector.shape_cast %549 : vector<1x32x64xbf16> to vector<32x64xbf16>
    %551 = arith.truncf %473 : vector<8x32xf32> to vector<8x32xbf16>
    %cst_279 = arith.constant dense<0.000000e+00> : vector<8x64xf32>
    %552 = tpu.matmul %551, %550, %cst_279 {dimension_numbers = #tpu.dot_dimension_numbers<[1], [0], [0], [1], [0, 0, 1, 1], [], []>} : vector<8x32xbf16>, vector<32x64xbf16>, vector<8x64xf32> -> vector<8x64xf32>
    %c0_280 = arith.constant 0 : index
    %c0_281 = arith.constant 0 : index
    %c0_282 = arith.constant 0 : index
    %553 = vector.load %arg12[%c0_280, %c0_281, %c0_282] : memref<2x1x64xf32, #tpu.memory_space<vmem>>, vector<1x1x64xf32>
    %554 = vector.shape_cast %553 : vector<1x1x64xf32> to vector<1x64xf32>
    %555 = vector.broadcast %554 : vector<1x64xf32> to vector<8x64xf32>
    %556 = arith.addf %552, %555 : vector<8x64xf32>
    %557 = vector.extract_strided_slice %548 {offsets = [0, 0], sizes = [8, 32], strides = [1, 1]} : vector<8x64xf32> to vector<8x32xf32>
    %558 = vector.extract_strided_slice %548 {offsets = [0, 32], sizes = [8, 32], strides = [1, 1]} : vector<8x64xf32> to vector<8x32xf32>
    %559 = vector.extract_strided_slice %556 {offsets = [0, 0], sizes = [8, 32], strides = [1, 1]} : vector<8x64xf32> to vector<8x32xf32>
    %560 = vector.extract_strided_slice %556 {offsets = [0, 32], sizes = [8, 32], strides = [1, 1]} : vector<8x64xf32> to vector<8x32xf32>
    %561 = arith.subf %559, %557 : vector<8x32xf32>
    %562 = arith.mulf %540, %561 : vector<8x32xf32>
    %563 = arith.truncf %562 : vector<8x32xf32> to vector<8x32xbf16>
    %cst_283 = arith.constant dense<0.000000e+00> : vector<8x32xf32>
    %564 = tpu.matmul %563, %7, %cst_283 {dimension_numbers = #tpu.dot_dimension_numbers<[1], [0], [0], [1], [0, 0, 1, 1], [], []>} : vector<8x32xbf16>, vector<32x32xbf16>, vector<8x32xf32> -> vector<8x32xf32>
    %565 = vector.broadcast %10 : vector<8x1xf32> to vector<8x32xf32>
    %566 = arith.addf %564, %565 : vector<8x32xf32>
    %cst_284 = arith.constant 0.000000e+00 : f32
    %567 = vector.broadcast %cst_284 : f32 to vector<8x32xf32>
    %568 = arith.subf %567, %566 : vector<8x32xf32>
    %569 = math.exp %568 : vector<8x32xf32>
    %cst_285 = arith.constant 1.000000e+00 : f32
    %570 = vector.broadcast %cst_285 : f32 to vector<8x32xf32>
    %571 = arith.addf %570, %569 : vector<8x32xf32>
    %cst_286 = arith.constant 1.000000e+00 : f32
    %572 = vector.broadcast %cst_286 : f32 to vector<8x32xf32>
    %573 = arith.divf %572, %571 : vector<8x32xf32>
    %574 = arith.subf %560, %558 : vector<8x32xf32>
    %575 = arith.mulf %573, %574 : vector<8x32xf32>
    %576 = arith.addf %558, %575 : vector<8x32xf32>
    %c6_287 = arith.constant 6 : index
    %c0_288 = arith.constant 0 : index
    %c0_289 = arith.constant 0 : index
    %577 = vector.load %arg9[%c6_287, %c0_288, %c0_289] : memref<8x32x32xbf16, #tpu.memory_space<vmem>>, vector<1x32x32xbf16>
    %578 = vector.shape_cast %577 : vector<1x32x32xbf16> to vector<32x32xbf16>
    %579 = arith.truncf %576 : vector<8x32xf32> to vector<8x32xbf16>
    %cst_290 = arith.constant dense<0.000000e+00> : vector<8x32xf32>
    %580 = tpu.matmul %579, %578, %cst_290 {dimension_numbers = #tpu.dot_dimension_numbers<[1], [0], [0], [1], [0, 0, 1, 1], [], []>} : vector<8x32xbf16>, vector<32x32xbf16>, vector<8x32xf32> -> vector<8x32xf32>
    %581 = arith.addf %507, %580 : vector<8x32xf32>
    %c6_291 = arith.constant 6 : index
    %c0_292 = arith.constant 0 : index
    %c0_293 = arith.constant 0 : index
    %582 = vector.load %arg10[%c6_291, %c0_292, %c0_293] : memref<8x1x32xf32, #tpu.memory_space<vmem>>, vector<1x1x32xf32>
    %583 = vector.shape_cast %582 : vector<1x1x32xf32> to vector<1x32xf32>
    %584 = vector.broadcast %583 : vector<1x32xf32> to vector<8x32xf32>
    %585 = arith.addf %581, %584 : vector<8x32xf32>
    %c7 = arith.constant 7 : index
    %c0_294 = arith.constant 0 : index
    %c0_295 = arith.constant 0 : index
    %586 = vector.load %arg17[%c7, %c0_294, %c0_295] : memref<12x1x32xf32, #tpu.memory_space<vmem>>, vector<1x1x32xf32>
    %587 = vector.shape_cast %586 : vector<1x1x32xf32> to vector<1x32xf32>
    %c7_296 = arith.constant 7 : index
    %c0_297 = arith.constant 0 : index
    %c0_298 = arith.constant 0 : index
    %588 = vector.load %arg18[%c7_296, %c0_297, %c0_298] : memref<12x1x32xf32, #tpu.memory_space<vmem>>, vector<1x1x32xf32>
    %589 = vector.shape_cast %588 : vector<1x1x32xf32> to vector<1x32xf32>
    %cst_299 = arith.constant dense<0.000000e+00> : vector<8xf32>
    %590 = vector.multi_reduction <add>, %585, %cst_299 [1] : vector<8x32xf32> to vector<8xf32>
    %591 = vector.shape_cast %590 : vector<8xf32> to vector<8x1xf32>
    %cst_300 = arith.constant 3.200000e+01 : f32
    %592 = vector.broadcast %cst_300 : f32 to vector<8x1xf32>
    %593 = arith.divf %591, %592 : vector<8x1xf32>
    %594 = vector.broadcast %593 : vector<8x1xf32> to vector<8x32xf32>
    %595 = arith.subf %585, %594 : vector<8x32xf32>
    %596 = arith.mulf %595, %595 : vector<8x32xf32>
    %cst_301 = arith.constant dense<0.000000e+00> : vector<8xf32>
    %597 = vector.multi_reduction <add>, %596, %cst_301 [1] : vector<8x32xf32> to vector<8xf32>
    %598 = vector.shape_cast %597 : vector<8xf32> to vector<8x1xf32>
    %cst_302 = arith.constant 0.0322580636 : f32
    %599 = vector.broadcast %cst_302 : f32 to vector<8x1xf32>
    %600 = arith.mulf %598, %599 : vector<8x1xf32>
    %601 = math.sqrt %600 : vector<8x1xf32>
    %cst_303 = arith.constant 9.99999997E-7 : f32
    %602 = vector.broadcast %cst_303 : f32 to vector<8x1xf32>
    %603 = arith.addf %601, %602 : vector<8x1xf32>
    %604 = tpu.reciprocal %603 {approx = true} : vector<8x1xf32> -> vector<8x1xf32>
    %605 = vector.broadcast %587 : vector<1x32xf32> to vector<8x32xf32>
    %606 = arith.mulf %605, %595 : vector<8x32xf32>
    %607 = vector.broadcast %604 : vector<8x1xf32> to vector<8x32xf32>
    %608 = arith.mulf %606, %607 : vector<8x32xf32>
    %609 = vector.broadcast %589 : vector<1x32xf32> to vector<8x32xf32>
    %610 = arith.addf %608, %609 : vector<8x32xf32>
    %c2_304 = arith.constant 2 : index
    %c0_305 = arith.constant 0 : index
    %c0_306 = arith.constant 0 : index
    %611 = vector.load %arg13[%c2_304, %c0_305, %c0_306] : memref<4x32x64xbf16, #tpu.memory_space<vmem>>, vector<1x32x64xbf16>
    %612 = vector.shape_cast %611 : vector<1x32x64xbf16> to vector<32x64xbf16>
    %613 = arith.truncf %610 : vector<8x32xf32> to vector<8x32xbf16>
    %cst_307 = arith.constant dense<0.000000e+00> : vector<8x64xf32>
    %614 = tpu.matmul %613, %612, %cst_307 {dimension_numbers = #tpu.dot_dimension_numbers<[1], [0], [0], [1], [0, 0, 1, 1], [], []>} : vector<8x32xbf16>, vector<32x64xbf16>, vector<8x64xf32> -> vector<8x64xf32>
    %c2_308 = arith.constant 2 : index
    %c0_309 = arith.constant 0 : index
    %c0_310 = arith.constant 0 : index
    %615 = vector.load %arg14[%c2_308, %c0_309, %c0_310] : memref<4x1x64xf32, #tpu.memory_space<vmem>>, vector<1x1x64xf32>
    %616 = vector.shape_cast %615 : vector<1x1x64xf32> to vector<1x64xf32>
    %617 = vector.broadcast %616 : vector<1x64xf32> to vector<8x64xf32>
    %618 = arith.addf %614, %617 : vector<8x64xf32>
    %cst_311 = arith.constant 0.000000e+00 : f32
    %619 = vector.broadcast %cst_311 : f32 to vector<8x64xf32>
    %620 = arith.maximumf %618, %619 : vector<8x64xf32>
    %c2_312 = arith.constant 2 : index
    %c0_313 = arith.constant 0 : index
    %c0_314 = arith.constant 0 : index
    %621 = vector.load %arg15[%c2_312, %c0_313, %c0_314] : memref<4x64x32xbf16, #tpu.memory_space<vmem>>, vector<1x64x32xbf16>
    %622 = vector.shape_cast %621 : vector<1x64x32xbf16> to vector<64x32xbf16>
    %623 = arith.truncf %620 : vector<8x64xf32> to vector<8x64xbf16>
    %cst_315 = arith.constant dense<0.000000e+00> : vector<8x32xf32>
    %624 = tpu.matmul %623, %622, %cst_315 {dimension_numbers = #tpu.dot_dimension_numbers<[1], [0], [0], [1], [0, 0, 1, 1], [], []>} : vector<8x64xbf16>, vector<64x32xbf16>, vector<8x32xf32> -> vector<8x32xf32>
    %c2_316 = arith.constant 2 : index
    %c0_317 = arith.constant 0 : index
    %c0_318 = arith.constant 0 : index
    %625 = vector.load %arg16[%c2_316, %c0_317, %c0_318] : memref<4x1x32xf32, #tpu.memory_space<vmem>>, vector<1x1x32xf32>
    %626 = vector.shape_cast %625 : vector<1x1x32xf32> to vector<1x32xf32>
    %627 = vector.broadcast %626 : vector<1x32xf32> to vector<8x32xf32>
    %628 = arith.addf %624, %627 : vector<8x32xf32>
    %629 = arith.addf %585, %628 : vector<8x32xf32>
    %c8 = arith.constant 8 : index
    %c0_319 = arith.constant 0 : index
    %c0_320 = arith.constant 0 : index
    %630 = vector.load %arg17[%c8, %c0_319, %c0_320] : memref<12x1x32xf32, #tpu.memory_space<vmem>>, vector<1x1x32xf32>
    %631 = vector.shape_cast %630 : vector<1x1x32xf32> to vector<1x32xf32>
    %c8_321 = arith.constant 8 : index
    %c0_322 = arith.constant 0 : index
    %c0_323 = arith.constant 0 : index
    %632 = vector.load %arg18[%c8_321, %c0_322, %c0_323] : memref<12x1x32xf32, #tpu.memory_space<vmem>>, vector<1x1x32xf32>
    %633 = vector.shape_cast %632 : vector<1x1x32xf32> to vector<1x32xf32>
    %cst_324 = arith.constant dense<0.000000e+00> : vector<8xf32>
    %634 = vector.multi_reduction <add>, %629, %cst_324 [1] : vector<8x32xf32> to vector<8xf32>
    %635 = vector.shape_cast %634 : vector<8xf32> to vector<8x1xf32>
    %cst_325 = arith.constant 3.200000e+01 : f32
    %636 = vector.broadcast %cst_325 : f32 to vector<8x1xf32>
    %637 = arith.divf %635, %636 : vector<8x1xf32>
    %638 = vector.broadcast %637 : vector<8x1xf32> to vector<8x32xf32>
    %639 = arith.subf %629, %638 : vector<8x32xf32>
    %640 = arith.mulf %639, %639 : vector<8x32xf32>
    %cst_326 = arith.constant dense<0.000000e+00> : vector<8xf32>
    %641 = vector.multi_reduction <add>, %640, %cst_326 [1] : vector<8x32xf32> to vector<8xf32>
    %642 = vector.shape_cast %641 : vector<8xf32> to vector<8x1xf32>
    %cst_327 = arith.constant 0.0322580636 : f32
    %643 = vector.broadcast %cst_327 : f32 to vector<8x1xf32>
    %644 = arith.mulf %642, %643 : vector<8x1xf32>
    %645 = math.sqrt %644 : vector<8x1xf32>
    %cst_328 = arith.constant 9.99999997E-7 : f32
    %646 = vector.broadcast %cst_328 : f32 to vector<8x1xf32>
    %647 = arith.addf %645, %646 : vector<8x1xf32>
    %648 = tpu.reciprocal %647 {approx = true} : vector<8x1xf32> -> vector<8x1xf32>
    %649 = vector.broadcast %631 : vector<1x32xf32> to vector<8x32xf32>
    %650 = arith.mulf %649, %639 : vector<8x32xf32>
    %651 = vector.broadcast %648 : vector<8x1xf32> to vector<8x32xf32>
    %652 = arith.mulf %650, %651 : vector<8x32xf32>
    %653 = vector.broadcast %633 : vector<1x32xf32> to vector<8x32xf32>
    %654 = arith.addf %652, %653 : vector<8x32xf32>
    %c3_329 = arith.constant 3 : index
    %c0_330 = arith.constant 0 : index
    %c0_331 = arith.constant 0 : index
    %655 = vector.load %arg9[%c3_329, %c0_330, %c0_331] : memref<8x32x32xbf16, #tpu.memory_space<vmem>>, vector<1x32x32xbf16>
    %656 = vector.shape_cast %655 : vector<1x32x32xbf16> to vector<32x32xbf16>
    %657 = arith.truncf %654 : vector<8x32xf32> to vector<8x32xbf16>
    %cst_332 = arith.constant dense<0.000000e+00> : vector<8x32xf32>
    %658 = tpu.matmul %657, %656, %cst_332 {dimension_numbers = #tpu.dot_dimension_numbers<[1], [0], [0], [1], [0, 0, 1, 1], [], []>} : vector<8x32xbf16>, vector<32x32xbf16>, vector<8x32xf32> -> vector<8x32xf32>
    %659 = arith.addf %629, %658 : vector<8x32xf32>
    %c3_333 = arith.constant 3 : index
    %c0_334 = arith.constant 0 : index
    %c0_335 = arith.constant 0 : index
    %660 = vector.load %arg10[%c3_333, %c0_334, %c0_335] : memref<8x1x32xf32, #tpu.memory_space<vmem>>, vector<1x1x32xf32>
    %661 = vector.shape_cast %660 : vector<1x1x32xf32> to vector<1x32xf32>
    %662 = vector.broadcast %661 : vector<1x32xf32> to vector<8x32xf32>
    %663 = arith.addf %659, %662 : vector<8x32xf32>
    %c9 = arith.constant 9 : index
    %c0_336 = arith.constant 0 : index
    %c0_337 = arith.constant 0 : index
    %664 = vector.load %arg17[%c9, %c0_336, %c0_337] : memref<12x1x32xf32, #tpu.memory_space<vmem>>, vector<1x1x32xf32>
    %665 = vector.shape_cast %664 : vector<1x1x32xf32> to vector<1x32xf32>
    %c9_338 = arith.constant 9 : index
    %c0_339 = arith.constant 0 : index
    %c0_340 = arith.constant 0 : index
    %666 = vector.load %arg18[%c9_338, %c0_339, %c0_340] : memref<12x1x32xf32, #tpu.memory_space<vmem>>, vector<1x1x32xf32>
    %667 = vector.shape_cast %666 : vector<1x1x32xf32> to vector<1x32xf32>
    %cst_341 = arith.constant dense<0.000000e+00> : vector<8xf32>
    %668 = vector.multi_reduction <add>, %663, %cst_341 [1] : vector<8x32xf32> to vector<8xf32>
    %669 = vector.shape_cast %668 : vector<8xf32> to vector<8x1xf32>
    %cst_342 = arith.constant 3.200000e+01 : f32
    %670 = vector.broadcast %cst_342 : f32 to vector<8x1xf32>
    %671 = arith.divf %669, %670 : vector<8x1xf32>
    %672 = vector.broadcast %671 : vector<8x1xf32> to vector<8x32xf32>
    %673 = arith.subf %663, %672 : vector<8x32xf32>
    %674 = arith.mulf %673, %673 : vector<8x32xf32>
    %cst_343 = arith.constant dense<0.000000e+00> : vector<8xf32>
    %675 = vector.multi_reduction <add>, %674, %cst_343 [1] : vector<8x32xf32> to vector<8xf32>
    %676 = vector.shape_cast %675 : vector<8xf32> to vector<8x1xf32>
    %cst_344 = arith.constant 0.0322580636 : f32
    %677 = vector.broadcast %cst_344 : f32 to vector<8x1xf32>
    %678 = arith.mulf %676, %677 : vector<8x1xf32>
    %679 = math.sqrt %678 : vector<8x1xf32>
    %cst_345 = arith.constant 9.99999997E-7 : f32
    %680 = vector.broadcast %cst_345 : f32 to vector<8x1xf32>
    %681 = arith.addf %679, %680 : vector<8x1xf32>
    %682 = tpu.reciprocal %681 {approx = true} : vector<8x1xf32> -> vector<8x1xf32>
    %683 = vector.broadcast %665 : vector<1x32xf32> to vector<8x32xf32>
    %684 = arith.mulf %683, %673 : vector<8x32xf32>
    %685 = vector.broadcast %682 : vector<8x1xf32> to vector<8x32xf32>
    %686 = arith.mulf %684, %685 : vector<8x32xf32>
    %687 = vector.broadcast %667 : vector<1x32xf32> to vector<8x32xf32>
    %688 = arith.addf %686, %687 : vector<8x32xf32>
    %c5_346 = arith.constant 5 : index
    %c0_347 = arith.constant 0 : index
    %c0_348 = arith.constant 0 : index
    %689 = vector.load %arg9[%c5_346, %c0_347, %c0_348] : memref<8x32x32xbf16, #tpu.memory_space<vmem>>, vector<1x32x32xbf16>
    %690 = vector.shape_cast %689 : vector<1x32x32xbf16> to vector<32x32xbf16>
    %691 = arith.truncf %688 : vector<8x32xf32> to vector<8x32xbf16>
    %cst_349 = arith.constant dense<0.000000e+00> : vector<8x32xf32>
    %692 = tpu.matmul %691, %690, %cst_349 {dimension_numbers = #tpu.dot_dimension_numbers<[1], [0], [0], [1], [0, 0, 1, 1], [], []>} : vector<8x32xbf16>, vector<32x32xbf16>, vector<8x32xf32> -> vector<8x32xf32>
    %c5_350 = arith.constant 5 : index
    %c0_351 = arith.constant 0 : index
    %c0_352 = arith.constant 0 : index
    %693 = vector.load %arg10[%c5_350, %c0_351, %c0_352] : memref<8x1x32xf32, #tpu.memory_space<vmem>>, vector<1x1x32xf32>
    %694 = vector.shape_cast %693 : vector<1x1x32xf32> to vector<1x32xf32>
    %695 = vector.broadcast %694 : vector<1x32xf32> to vector<8x32xf32>
    %696 = arith.addf %692, %695 : vector<8x32xf32>
    %c1_353 = arith.constant 1 : index
    %c0_354 = arith.constant 0 : index
    %c0_355 = arith.constant 0 : index
    %697 = vector.load %arg11[%c1_353, %c0_354, %c0_355] : memref<2x32x64xbf16, #tpu.memory_space<vmem>>, vector<1x32x64xbf16>
    %698 = vector.shape_cast %697 : vector<1x32x64xbf16> to vector<32x64xbf16>
    %699 = arith.truncf %448 : vector<8x32xf32> to vector<8x32xbf16>
    %cst_356 = arith.constant dense<0.000000e+00> : vector<8x64xf32>
    %700 = tpu.matmul %699, %698, %cst_356 {dimension_numbers = #tpu.dot_dimension_numbers<[1], [0], [0], [1], [0, 0, 1, 1], [], []>} : vector<8x32xbf16>, vector<32x64xbf16>, vector<8x64xf32> -> vector<8x64xf32>
    %c1_357 = arith.constant 1 : index
    %c0_358 = arith.constant 0 : index
    %c0_359 = arith.constant 0 : index
    %701 = vector.load %arg12[%c1_357, %c0_358, %c0_359] : memref<2x1x64xf32, #tpu.memory_space<vmem>>, vector<1x1x64xf32>
    %702 = vector.shape_cast %701 : vector<1x1x64xf32> to vector<1x64xf32>
    %703 = vector.broadcast %702 : vector<1x64xf32> to vector<8x64xf32>
    %704 = arith.addf %700, %703 : vector<8x64xf32>
    %c1_360 = arith.constant 1 : index
    %c0_361 = arith.constant 0 : index
    %c0_362 = arith.constant 0 : index
    %705 = vector.load %arg11[%c1_360, %c0_361, %c0_362] : memref<2x32x64xbf16, #tpu.memory_space<vmem>>, vector<1x32x64xbf16>
    %706 = vector.shape_cast %705 : vector<1x32x64xbf16> to vector<32x64xbf16>
    %707 = arith.truncf %473 : vector<8x32xf32> to vector<8x32xbf16>
    %cst_363 = arith.constant dense<0.000000e+00> : vector<8x64xf32>
    %708 = tpu.matmul %707, %706, %cst_363 {dimension_numbers = #tpu.dot_dimension_numbers<[1], [0], [0], [1], [0, 0, 1, 1], [], []>} : vector<8x32xbf16>, vector<32x64xbf16>, vector<8x64xf32> -> vector<8x64xf32>
    %c1_364 = arith.constant 1 : index
    %c0_365 = arith.constant 0 : index
    %c0_366 = arith.constant 0 : index
    %709 = vector.load %arg12[%c1_364, %c0_365, %c0_366] : memref<2x1x64xf32, #tpu.memory_space<vmem>>, vector<1x1x64xf32>
    %710 = vector.shape_cast %709 : vector<1x1x64xf32> to vector<1x64xf32>
    %711 = vector.broadcast %710 : vector<1x64xf32> to vector<8x64xf32>
    %712 = arith.addf %708, %711 : vector<8x64xf32>
    %713 = vector.extract_strided_slice %704 {offsets = [0, 0], sizes = [8, 32], strides = [1, 1]} : vector<8x64xf32> to vector<8x32xf32>
    %714 = vector.extract_strided_slice %704 {offsets = [0, 32], sizes = [8, 32], strides = [1, 1]} : vector<8x64xf32> to vector<8x32xf32>
    %715 = vector.extract_strided_slice %712 {offsets = [0, 0], sizes = [8, 32], strides = [1, 1]} : vector<8x64xf32> to vector<8x32xf32>
    %716 = vector.extract_strided_slice %712 {offsets = [0, 32], sizes = [8, 32], strides = [1, 1]} : vector<8x64xf32> to vector<8x32xf32>
    %717 = arith.subf %715, %713 : vector<8x32xf32>
    %718 = arith.mulf %696, %717 : vector<8x32xf32>
    %719 = arith.truncf %718 : vector<8x32xf32> to vector<8x32xbf16>
    %cst_367 = arith.constant dense<0.000000e+00> : vector<8x32xf32>
    %720 = tpu.matmul %719, %7, %cst_367 {dimension_numbers = #tpu.dot_dimension_numbers<[1], [0], [0], [1], [0, 0, 1, 1], [], []>} : vector<8x32xbf16>, vector<32x32xbf16>, vector<8x32xf32> -> vector<8x32xf32>
    %721 = vector.broadcast %10 : vector<8x1xf32> to vector<8x32xf32>
    %722 = arith.addf %720, %721 : vector<8x32xf32>
    %cst_368 = arith.constant 0.000000e+00 : f32
    %723 = vector.broadcast %cst_368 : f32 to vector<8x32xf32>
    %724 = arith.subf %723, %722 : vector<8x32xf32>
    %725 = math.exp %724 : vector<8x32xf32>
    %cst_369 = arith.constant 1.000000e+00 : f32
    %726 = vector.broadcast %cst_369 : f32 to vector<8x32xf32>
    %727 = arith.addf %726, %725 : vector<8x32xf32>
    %cst_370 = arith.constant 1.000000e+00 : f32
    %728 = vector.broadcast %cst_370 : f32 to vector<8x32xf32>
    %729 = arith.divf %728, %727 : vector<8x32xf32>
    %730 = arith.subf %716, %714 : vector<8x32xf32>
    %731 = arith.mulf %729, %730 : vector<8x32xf32>
    %732 = arith.addf %714, %731 : vector<8x32xf32>
    %c7_371 = arith.constant 7 : index
    %c0_372 = arith.constant 0 : index
    %c0_373 = arith.constant 0 : index
    %733 = vector.load %arg9[%c7_371, %c0_372, %c0_373] : memref<8x32x32xbf16, #tpu.memory_space<vmem>>, vector<1x32x32xbf16>
    %734 = vector.shape_cast %733 : vector<1x32x32xbf16> to vector<32x32xbf16>
    %735 = arith.truncf %732 : vector<8x32xf32> to vector<8x32xbf16>
    %cst_374 = arith.constant dense<0.000000e+00> : vector<8x32xf32>
    %736 = tpu.matmul %735, %734, %cst_374 {dimension_numbers = #tpu.dot_dimension_numbers<[1], [0], [0], [1], [0, 0, 1, 1], [], []>} : vector<8x32xbf16>, vector<32x32xbf16>, vector<8x32xf32> -> vector<8x32xf32>
    %737 = arith.addf %663, %736 : vector<8x32xf32>
    %c7_375 = arith.constant 7 : index
    %c0_376 = arith.constant 0 : index
    %c0_377 = arith.constant 0 : index
    %738 = vector.load %arg10[%c7_375, %c0_376, %c0_377] : memref<8x1x32xf32, #tpu.memory_space<vmem>>, vector<1x1x32xf32>
    %739 = vector.shape_cast %738 : vector<1x1x32xf32> to vector<1x32xf32>
    %740 = vector.broadcast %739 : vector<1x32xf32> to vector<8x32xf32>
    %741 = arith.addf %737, %740 : vector<8x32xf32>
    %c10 = arith.constant 10 : index
    %c0_378 = arith.constant 0 : index
    %c0_379 = arith.constant 0 : index
    %742 = vector.load %arg17[%c10, %c0_378, %c0_379] : memref<12x1x32xf32, #tpu.memory_space<vmem>>, vector<1x1x32xf32>
    %743 = vector.shape_cast %742 : vector<1x1x32xf32> to vector<1x32xf32>
    %c10_380 = arith.constant 10 : index
    %c0_381 = arith.constant 0 : index
    %c0_382 = arith.constant 0 : index
    %744 = vector.load %arg18[%c10_380, %c0_381, %c0_382] : memref<12x1x32xf32, #tpu.memory_space<vmem>>, vector<1x1x32xf32>
    %745 = vector.shape_cast %744 : vector<1x1x32xf32> to vector<1x32xf32>
    %cst_383 = arith.constant dense<0.000000e+00> : vector<8xf32>
    %746 = vector.multi_reduction <add>, %741, %cst_383 [1] : vector<8x32xf32> to vector<8xf32>
    %747 = vector.shape_cast %746 : vector<8xf32> to vector<8x1xf32>
    %cst_384 = arith.constant 3.200000e+01 : f32
    %748 = vector.broadcast %cst_384 : f32 to vector<8x1xf32>
    %749 = arith.divf %747, %748 : vector<8x1xf32>
    %750 = vector.broadcast %749 : vector<8x1xf32> to vector<8x32xf32>
    %751 = arith.subf %741, %750 : vector<8x32xf32>
    %752 = arith.mulf %751, %751 : vector<8x32xf32>
    %cst_385 = arith.constant dense<0.000000e+00> : vector<8xf32>
    %753 = vector.multi_reduction <add>, %752, %cst_385 [1] : vector<8x32xf32> to vector<8xf32>
    %754 = vector.shape_cast %753 : vector<8xf32> to vector<8x1xf32>
    %cst_386 = arith.constant 0.0322580636 : f32
    %755 = vector.broadcast %cst_386 : f32 to vector<8x1xf32>
    %756 = arith.mulf %754, %755 : vector<8x1xf32>
    %757 = math.sqrt %756 : vector<8x1xf32>
    %cst_387 = arith.constant 9.99999997E-7 : f32
    %758 = vector.broadcast %cst_387 : f32 to vector<8x1xf32>
    %759 = arith.addf %757, %758 : vector<8x1xf32>
    %760 = tpu.reciprocal %759 {approx = true} : vector<8x1xf32> -> vector<8x1xf32>
    %761 = vector.broadcast %743 : vector<1x32xf32> to vector<8x32xf32>
    %762 = arith.mulf %761, %751 : vector<8x32xf32>
    %763 = vector.broadcast %760 : vector<8x1xf32> to vector<8x32xf32>
    %764 = arith.mulf %762, %763 : vector<8x32xf32>
    %765 = vector.broadcast %745 : vector<1x32xf32> to vector<8x32xf32>
    %766 = arith.addf %764, %765 : vector<8x32xf32>
    %c3_388 = arith.constant 3 : index
    %c0_389 = arith.constant 0 : index
    %c0_390 = arith.constant 0 : index
    %767 = vector.load %arg13[%c3_388, %c0_389, %c0_390] : memref<4x32x64xbf16, #tpu.memory_space<vmem>>, vector<1x32x64xbf16>
    %768 = vector.shape_cast %767 : vector<1x32x64xbf16> to vector<32x64xbf16>
    %769 = arith.truncf %766 : vector<8x32xf32> to vector<8x32xbf16>
    %cst_391 = arith.constant dense<0.000000e+00> : vector<8x64xf32>
    %770 = tpu.matmul %769, %768, %cst_391 {dimension_numbers = #tpu.dot_dimension_numbers<[1], [0], [0], [1], [0, 0, 1, 1], [], []>} : vector<8x32xbf16>, vector<32x64xbf16>, vector<8x64xf32> -> vector<8x64xf32>
    %c3_392 = arith.constant 3 : index
    %c0_393 = arith.constant 0 : index
    %c0_394 = arith.constant 0 : index
    %771 = vector.load %arg14[%c3_392, %c0_393, %c0_394] : memref<4x1x64xf32, #tpu.memory_space<vmem>>, vector<1x1x64xf32>
    %772 = vector.shape_cast %771 : vector<1x1x64xf32> to vector<1x64xf32>
    %773 = vector.broadcast %772 : vector<1x64xf32> to vector<8x64xf32>
    %774 = arith.addf %770, %773 : vector<8x64xf32>
    %cst_395 = arith.constant 0.000000e+00 : f32
    %775 = vector.broadcast %cst_395 : f32 to vector<8x64xf32>
    %776 = arith.maximumf %774, %775 : vector<8x64xf32>
    %c3_396 = arith.constant 3 : index
    %c0_397 = arith.constant 0 : index
    %c0_398 = arith.constant 0 : index
    %777 = vector.load %arg15[%c3_396, %c0_397, %c0_398] : memref<4x64x32xbf16, #tpu.memory_space<vmem>>, vector<1x64x32xbf16>
    %778 = vector.shape_cast %777 : vector<1x64x32xbf16> to vector<64x32xbf16>
    %779 = arith.truncf %776 : vector<8x64xf32> to vector<8x64xbf16>
    %cst_399 = arith.constant dense<0.000000e+00> : vector<8x32xf32>
    %780 = tpu.matmul %779, %778, %cst_399 {dimension_numbers = #tpu.dot_dimension_numbers<[1], [0], [0], [1], [0, 0, 1, 1], [], []>} : vector<8x64xbf16>, vector<64x32xbf16>, vector<8x32xf32> -> vector<8x32xf32>
    %c3_400 = arith.constant 3 : index
    %c0_401 = arith.constant 0 : index
    %c0_402 = arith.constant 0 : index
    %781 = vector.load %arg16[%c3_400, %c0_401, %c0_402] : memref<4x1x32xf32, #tpu.memory_space<vmem>>, vector<1x1x32xf32>
    %782 = vector.shape_cast %781 : vector<1x1x32xf32> to vector<1x32xf32>
    %783 = vector.broadcast %782 : vector<1x32xf32> to vector<8x32xf32>
    %784 = arith.addf %780, %783 : vector<8x32xf32>
    %785 = arith.addf %741, %784 : vector<8x32xf32>
    %c11 = arith.constant 11 : index
    %c0_403 = arith.constant 0 : index
    %c0_404 = arith.constant 0 : index
    %786 = vector.load %arg17[%c11, %c0_403, %c0_404] : memref<12x1x32xf32, #tpu.memory_space<vmem>>, vector<1x1x32xf32>
    %787 = vector.shape_cast %786 : vector<1x1x32xf32> to vector<1x32xf32>
    %c11_405 = arith.constant 11 : index
    %c0_406 = arith.constant 0 : index
    %c0_407 = arith.constant 0 : index
    %788 = vector.load %arg18[%c11_405, %c0_406, %c0_407] : memref<12x1x32xf32, #tpu.memory_space<vmem>>, vector<1x1x32xf32>
    %789 = vector.shape_cast %788 : vector<1x1x32xf32> to vector<1x32xf32>
    %cst_408 = arith.constant dense<0.000000e+00> : vector<8xf32>
    %790 = vector.multi_reduction <add>, %785, %cst_408 [1] : vector<8x32xf32> to vector<8xf32>
    %791 = vector.shape_cast %790 : vector<8xf32> to vector<8x1xf32>
    %cst_409 = arith.constant 3.200000e+01 : f32
    %792 = vector.broadcast %cst_409 : f32 to vector<8x1xf32>
    %793 = arith.divf %791, %792 : vector<8x1xf32>
    %794 = vector.broadcast %793 : vector<8x1xf32> to vector<8x32xf32>
    %795 = arith.subf %785, %794 : vector<8x32xf32>
    %796 = arith.mulf %795, %795 : vector<8x32xf32>
    %cst_410 = arith.constant dense<0.000000e+00> : vector<8xf32>
    %797 = vector.multi_reduction <add>, %796, %cst_410 [1] : vector<8x32xf32> to vector<8xf32>
    %798 = vector.shape_cast %797 : vector<8xf32> to vector<8x1xf32>
    %cst_411 = arith.constant 0.0322580636 : f32
    %799 = vector.broadcast %cst_411 : f32 to vector<8x1xf32>
    %800 = arith.mulf %798, %799 : vector<8x1xf32>
    %801 = math.sqrt %800 : vector<8x1xf32>
    %cst_412 = arith.constant 9.99999997E-7 : f32
    %802 = vector.broadcast %cst_412 : f32 to vector<8x1xf32>
    %803 = arith.addf %801, %802 : vector<8x1xf32>
    %804 = tpu.reciprocal %803 {approx = true} : vector<8x1xf32> -> vector<8x1xf32>
    %805 = vector.broadcast %787 : vector<1x32xf32> to vector<8x32xf32>
    %806 = arith.mulf %805, %795 : vector<8x32xf32>
    %807 = vector.broadcast %804 : vector<8x1xf32> to vector<8x32xf32>
    %808 = arith.mulf %806, %807 : vector<8x32xf32>
    %809 = vector.broadcast %789 : vector<1x32xf32> to vector<8x32xf32>
    %810 = arith.addf %808, %809 : vector<8x32xf32>
    %811 = tpu.iota {dimensions = array<i32: 0>} : vector<8x1xi32>
    %c1_i32 = arith.constant 1 : i32
    %812 = arith.muli %arg0, %c1_i32 : i32
    %813 = arith.addi %812, %arg1 : i32
    %c8_i32 = arith.constant 8 : i32
    %814 = arith.muli %813, %c8_i32 : i32
    %815 = vector.broadcast %814 : i32 to vector<8x1xi32>
    %816 = arith.addi %815, %811 : vector<8x1xi32>
    %c0_413 = arith.constant 0 : index
    %817 = memref.load %arg2[%c0_413] : memref<1xi32, #tpu.memory_space<smem>>
    %818 = vector.broadcast %817 : i32 to vector<8x1xi32>
    %819 = arith.cmpi slt, %816, %818 : vector<8x1xi32>
    %cst_414 = arith.constant -1.000000e+30 : f32
    %820 = vector.shape_cast %819 : vector<8x1xi1> to vector<8x1xi1>
    %821 = vector.broadcast %820 : vector<8x1xi1> to vector<8x32xi1>
    %822 = vector.broadcast %cst_414 : f32 to vector<8x32xf32>
    %823 = arith.select %821, %810, %822 : vector<8x32xi1>, vector<8x32xf32>
    %cst_415 = arith.constant dense<0xFF800000> : vector<32xf32>
    %824 = vector.multi_reduction <maximumf>, %823, %cst_415 [0] : vector<8x32xf32> to vector<32xf32>
    %825 = vector.shape_cast %824 : vector<32xf32> to vector<1x32xf32>
    %cst_416 = arith.constant 1.000000e+30 : f32
    %826 = vector.shape_cast %819 : vector<8x1xi1> to vector<8x1xi1>
    %827 = vector.broadcast %826 : vector<8x1xi1> to vector<8x32xi1>
    %828 = vector.broadcast %cst_416 : f32 to vector<8x32xf32>
    %829 = arith.select %827, %810, %828 : vector<8x32xi1>, vector<8x32xf32>
    %cst_417 = arith.constant dense<0x7F800000> : vector<32xf32>
    %830 = vector.multi_reduction <minimumf>, %829, %cst_417 [0] : vector<8x32xf32> to vector<32xf32>
    %831 = vector.shape_cast %830 : vector<32xf32> to vector<1x32xf32>
    %c0_418 = arith.constant 0 : index
    %c0_419 = arith.constant 0 : index
    %832 = vector.load %arg20[%c0_418, %c0_419] : memref<8x32xf32, #tpu.memory_space<vmem>>, vector<8x32xf32>
    %833 = vector.broadcast %825 : vector<1x32xf32> to vector<8x32xf32>
    %834 = arith.maximumf %832, %833 : vector<8x32xf32>
    %c0_420 = arith.constant 0 : index
    %c0_421 = arith.constant 0 : index
    %835 = vector.load %arg20[%c0_420, %c0_421] : memref<8x32xf32, #tpu.memory_space<vmem>>, vector<8x32xf32>
    tpu.vector_store %arg20[%c0_420, %c0_421], %834 {strides = array<i32>} : memref<8x32xf32, #tpu.memory_space<vmem>>, vector<8x32xf32>,
    %c0_422 = arith.constant 0 : index
    %c0_423 = arith.constant 0 : index
    %836 = vector.load %arg21[%c0_422, %c0_423] : memref<8x32xf32, #tpu.memory_space<vmem>>, vector<8x32xf32>
    %837 = vector.broadcast %831 : vector<1x32xf32> to vector<8x32xf32>
    %838 = arith.minimumf %836, %837 : vector<8x32xf32>
    %c0_424 = arith.constant 0 : index
    %c0_425 = arith.constant 0 : index
    %839 = vector.load %arg21[%c0_424, %c0_425] : memref<8x32xf32, #tpu.memory_space<vmem>>, vector<8x32xf32>
    tpu.vector_store %arg21[%c0_424, %c0_425], %838 {strides = array<i32>} : memref<8x32xf32, #tpu.memory_space<vmem>>, vector<8x32xf32>,
    return
  }
  func.func @transform_0(%arg0: i32, %arg1: i32, %arg2: memref<1xi32, #tpu.memory_space<smem>>) -> (i32, i32) {
    %c1_i32 = arith.constant 1 : i32
    %0 = arith.muli %arg0, %c1_i32 : i32
    %1 = arith.addi %0, %arg1 : i32
    %c0_i32 = arith.constant 0 : i32
    %c0_i32_0 = arith.constant 0 : i32
    return %1, %c0_i32 : i32, i32
  }
  func.func @transform_1(%arg0: i32, %arg1: i32, %arg2: memref<1xi32, #tpu.memory_space<smem>>) -> (i32, i32) {
    %c1_i32 = arith.constant 1 : i32
    %0 = arith.muli %arg0, %c1_i32 : i32
    %1 = arith.addi %0, %arg1 : i32
    %c0_i32 = arith.constant 0 : i32
    %c0_i32_0 = arith.constant 0 : i32
    return %1, %c0_i32 : i32, i32
  }
  func.func @transform_2(%arg0: i32, %arg1: i32, %arg2: memref<1xi32, #tpu.memory_space<smem>>) -> (i32, i32) {
    %c1_i32 = arith.constant 1 : i32
    %0 = arith.muli %arg0, %c1_i32 : i32
    %1 = arith.addi %0, %arg1 : i32
    %c0_i32 = arith.constant 0 : i32
    %c0_i32_0 = arith.constant 0 : i32
    return %1, %c0_i32 : i32, i32
  }
  func.func @transform_3(%arg0: i32, %arg1: i32, %arg2: memref<1xi32, #tpu.memory_space<smem>>) -> (i32, i32) {
    %c1_i32 = arith.constant 1 : i32
    %0 = arith.muli %arg0, %c1_i32 : i32
    %1 = arith.addi %0, %arg1 : i32
    %c0_i32 = arith.constant 0 : i32
    %c0_i32_0 = arith.constant 0 : i32
    return %1, %c0_i32 : i32, i32
  }
  func.func @transform_4(%arg0: i32, %arg1: i32, %arg2: memref<1xi32, #tpu.memory_space<smem>>) -> (i32, i32, i32) {
    %c0_i32 = arith.constant 0 : i32
    %c0_i32_0 = arith.constant 0 : i32
    %c0_i32_1 = arith.constant 0 : i32
    %c0_i32_2 = arith.constant 0 : i32
    return %c0_i32, %c0_i32_0, %c0_i32_1 : i32, i32, i32
  }
  func.func @transform_5(%arg0: i32, %arg1: i32, %arg2: memref<1xi32, #tpu.memory_space<smem>>) -> (i32, i32, i32) {
    %c0_i32 = arith.constant 0 : i32
    %c0_i32_0 = arith.constant 0 : i32
    %c0_i32_1 = arith.constant 0 : i32
    %c0_i32_2 = arith.constant 0 : i32
    return %c0_i32, %c0_i32_0, %c0_i32_1 : i32, i32, i32
  }
  func.func @transform_6(%arg0: i32, %arg1: i32, %arg2: memref<1xi32, #tpu.memory_space<smem>>) -> (i32, i32, i32) {
    %c0_i32 = arith.constant 0 : i32
    %c0_i32_0 = arith.constant 0 : i32
    %c0_i32_1 = arith.constant 0 : i32
    %c0_i32_2 = arith.constant 0 : i32
    return %c0_i32, %c0_i32_0, %c0_i32_1 : i32, i32, i32
  }
  func.func @transform_7(%arg0: i32, %arg1: i32, %arg2: memref<1xi32, #tpu.memory_space<smem>>) -> (i32, i32, i32) {
    %c0_i32 = arith.constant 0 : i32
    %c0_i32_0 = arith.constant 0 : i32
    %c0_i32_1 = arith.constant 0 : i32
    %c0_i32_2 = arith.constant 0 : i32
    return %c0_i32, %c0_i32_0, %c0_i32_1 : i32, i32, i32
  }
  func.func @transform_8(%arg0: i32, %arg1: i32, %arg2: memref<1xi32, #tpu.memory_space<smem>>) -> (i32, i32, i32) {
    %c0_i32 = arith.constant 0 : i32
    %c0_i32_0 = arith.constant 0 : i32
    %c0_i32_1 = arith.constant 0 : i32
    %c0_i32_2 = arith.constant 0 : i32
    return %c0_i32, %c0_i32_0, %c0_i32_1 : i32, i32, i32
  }
  func.func @transform_9(%arg0: i32, %arg1: i32, %arg2: memref<1xi32, #tpu.memory_space<smem>>) -> (i32, i32, i32) {
    %c0_i32 = arith.constant 0 : i32
    %c0_i32_0 = arith.constant 0 : i32
    %c0_i32_1 = arith.constant 0 : i32
    %c0_i32_2 = arith.constant 0 : i32
    return %c0_i32, %c0_i32_0, %c0_i32_1 : i32, i32, i32
  }
  func.func @transform_10(%arg0: i32, %arg1: i32, %arg2: memref<1xi32, #tpu.memory_space<smem>>) -> (i32, i32, i32) {
    %c0_i32 = arith.constant 0 : i32
    %c0_i32_0 = arith.constant 0 : i32
    %c0_i32_1 = arith.constant 0 : i32
    %c0_i32_2 = arith.constant 0 : i32
    return %c0_i32, %c0_i32_0, %c0_i32_1 : i32, i32, i32
  }
  func.func @transform_11(%arg0: i32, %arg1: i32, %arg2: memref<1xi32, #tpu.memory_space<smem>>) -> (i32, i32, i32) {
    %c0_i32 = arith.constant 0 : i32
    %c0_i32_0 = arith.constant 0 : i32
    %c0_i32_1 = arith.constant 0 : i32
    %c0_i32_2 = arith.constant 0 : i32
    return %c0_i32, %c0_i32_0, %c0_i32_1 : i32, i32, i32
  }
  func.func @transform_12(%arg0: i32, %arg1: i32, %arg2: memref<1xi32, #tpu.memory_space<smem>>) -> (i32, i32, i32) {
    %c0_i32 = arith.constant 0 : i32
    %c0_i32_0 = arith.constant 0 : i32
    %c0_i32_1 = arith.constant 0 : i32
    %c0_i32_2 = arith.constant 0 : i32
    return %c0_i32, %c0_i32_0, %c0_i32_1 : i32, i32, i32
  }
  func.func @transform_13(%arg0: i32, %arg1: i32, %arg2: memref<1xi32, #tpu.memory_space<smem>>) -> (i32, i32, i32) {
    %c0_i32 = arith.constant 0 : i32
    %c0_i32_0 = arith.constant 0 : i32
    %c0_i32_1 = arith.constant 0 : i32
    %c0_i32_2 = arith.constant 0 : i32
    return %c0_i32, %c0_i32_0, %c0_i32_1 : i32, i32, i32
  }
  func.func @transform_14(%arg0: i32, %arg1: i32, %arg2: memref<1xi32, #tpu.memory_space<smem>>) -> (i32, i32, i32) {
    %c0_i32 = arith.constant 0 : i32
    %c0_i32_0 = arith.constant 0 : i32
    %c0_i32_1 = arith.constant 0 : i32
    %c0_i32_2 = arith.constant 0 : i32
    return %c0_i32, %c0_i32_0, %c0_i32_1 : i32, i32, i32
  }
  func.func @transform_15(%arg0: i32, %arg1: i32, %arg2: memref<1xi32, #tpu.memory_space<smem>>) -> (i32, i32, i32) {
    %c0_i32 = arith.constant 0 : i32
    %c0_i32_0 = arith.constant 0 : i32
    %c0_i32_1 = arith.constant 0 : i32
    %c0_i32_2 = arith.constant 0 : i32
    return %c0_i32, %c0_i32_0, %c0_i32_1 : i32, i32, i32
  }
  func.func @transform_16(%arg0: i32, %arg1: i32, %arg2: memref<1xi32, #tpu.memory_space<smem>>) -> (i32, i32) {
    %c0_i32 = arith.constant 0 : i32
    %c0_i32_0 = arith.constant 0 : i32
    %c0_i32_1 = arith.constant 0 : i32
    return %c0_i32, %c0_i32_0 : i32, i32
  }
  func.func @transform_17(%arg0: i32, %arg1: i32, %arg2: memref<1xi32, #tpu.memory_space<smem>>) -> (i32, i32) {
    %c0_i32 = arith.constant 0 : i32
    %c0_i32_0 = arith.constant 0 : i32
    return %arg0, %c0_i32 : i32, i32
  }
  func.func @transform_18(%arg0: i32, %arg1: i32, %arg2: memref<1xi32, #tpu.memory_space<smem>>) -> (i32, i32) {
    %c0_i32 = arith.constant 0 : i32
    %c0_i32_0 = arith.constant 0 : i32
    return %arg0, %c0_i32 : i32, i32
  }
}

</mosaic_0001>

<llo_original>
// kernel: tpu_custom_call.1
$region0: #{tpu_custom_call.1}
  #allocation0 [shape = 'u32[]', space=smem, size = 0x4, offset = 0x4, fixed_abs, tag = 'smem constant byte address 0x4 - core index']
  #allocation1 [shape = 'u32[144,128]{1,0:T(1,128)}', space=vmem, size = 0x12000, scoped, tag = 'internal scratch']
  #allocation2 [shape = 's32[1]{0}', space=sflag, size = 0x4, scoped, tag = 'scoped memory for tpu_custom_call.1']
  #allocation3 [shape = 's32[1]{0:T(128)S(6)}', space=smem, size = 0x200, scoped, tag = 'prefetched SMEM operand 0']
  %s0 = inlined_call_operand.<no memory space> [shape: s32[1], index: 0, kind: input, shape index: {}]
  %s1 = inlined_call_operand.hbm [shape: f32[16,32], index: 1, kind: input, shape index: {}]
  %s2 = inlined_call_operand.hbm [shape: f32[16,32], index: 2, kind: input, shape index: {}]
  %s3 = inlined_call_operand.hbm [shape: f32[16,32], index: 3, kind: input, shape index: {}]
  %s4 = inlined_call_operand.vmem [shape: f32[16,2], index: 4, kind: input, shape index: {}]
  %s5 = inlined_call_operand.hbm [shape: bf16[2,32,96], index: 5, kind: input, shape index: {}]
  %s6 = inlined_call_operand.vmem [shape: f32[2,1,96], index: 6, kind: input, shape index: {}]
  %s7 = inlined_call_operand.vmem [shape: bf16[8,32,32], index: 7, kind: input, shape index: {}]
  %s8 = inlined_call_operand.hbm [shape: f32[8,1,32], index: 8, kind: input, shape index: {}]
  %s9 = inlined_call_operand.hbm [shape: bf16[2,32,64], index: 9, kind: input, shape index: {}]
  %s10 = inlined_call_operand.hbm [shape: f32[2,1,64], index: 10, kind: input, shape index: {}]
  %s11 = inlined_call_operand.vmem [shape: bf16[4,32,64], index: 11, kind: input, shape index: {}]
  %s12 = inlined_call_operand.hbm [shape: f32[4,1,64], index: 12, kind: input, shape index: {}]
  %s13 = inlined_call_operand.vmem [shape: bf16[4,64,32], index: 13, kind: input, shape index: {}]
  %s14 = inlined_call_operand.hbm [shape: f32[4,1,32], index: 14, kind: input, shape index: {}]
  %s15 = inlined_call_operand.hbm [shape: f32[12,1,32], index: 15, kind: input, shape index: {}]
  %s16 = inlined_call_operand.hbm [shape: f32[12,1,32], index: 16, kind: input, shape index: {}]
  %s17 = inlined_call_operand.vmem [shape: bf16[32,32], index: 17, kind: input, shape index: {}]
  %s18 = inlined_call_operand.hbm [shape: f32[16,32], index: 18, kind: output, shape index: {0}]
  %s19 = inlined_call_operand.hbm [shape: f32[16,32], index: 19, kind: output, shape index: {1}]
  %20 = xla_tuple %s18, %s19
  %s21 = sld [smem:[#allocation0]]
  $region157: #{tpu_custom_call.1} parent=0
    _
  %s23 = ssub.s32 1, %s21
  %s24 = scalar_select 0, %s23, %s21
  %25 = sst [smem:[#allocation3]] %s0
  $region1: #{tpu_custom_call.1} parent=0
    #allocation4 [shape = 'u8[8192]{0}', space=vmem, size = 0x2000, scoped, tag = 'input window, operand 1']
    #allocation5 [shape = 's32[2]{0}', space=sflag, size = 0x8, scoped, tag = 'scoped memory for tpu_custom_call.1']
    #allocation6 [shape = 's32[2]{0}', space=sflag, size = 0x8, scoped, tag = 'scoped memory for tpu_custom_call.1']
    #allocation7 [shape = 'u8[8192]{0}', space=vmem, size = 0x2000, scoped, tag = 'input window, operand 2']
    #allocation8 [shape = 's32[2]{0}', space=sflag, size = 0x8, scoped, tag = 'scoped memory for tpu_custom_call.1']
    #allocation9 [shape = 'u8[8192]{0}', space=vmem, size = 0x2000, scoped, tag = 'input window, operand 3']
    #allocation10 [shape = 'u8[16384]{0}', space=vmem, size = 0x4000, scoped, tag = 'input window, operand 5, single buffered']
    #allocation11 [shape = 's32[1]{0}', space=sflag, size = 0x4, scoped, tag = 'scoped memory for tpu_custom_call.1']
    #allocation12 [shape = 'u8[4096]{0}', space=vmem, size = 0x1000, scoped, tag = 'input window, operand 8, single buffered']
    #allocation13 [shape = 'u8[16384]{0}', space=vmem, size = 0x4000, scoped, tag = 'input window, operand 9, single buffered']
    #allocation14 [shape = 's32[1]{0}', space=sflag, size = 0x4, scoped, tag = 'scoped memory for tpu_custom_call.1']
    #allocation15 [shape = 'u8[1024]{0}', space=vmem, size = 0x400, scoped, tag = 'input window, operand 10, single buffered']
    #allocation16 [shape = 'u8[2048]{0}', space=vmem, size = 0x800, scoped, tag = 'input window, operand 12, single buffered']
    #allocation17 [shape = 's32[1]{0}', space=sflag, size = 0x4, scoped, tag = 'scoped memory for tpu_custom_call.1']
    #allocation18 [shape = 'u8[2048]{0}', space=vmem, size = 0x800, scoped, tag = 'input window, operand 14, single buffered']
    #allocation19 [shape = 'u8[6144]{0}', space=vmem, size = 0x1800, scoped, tag = 'input window, operand 15, single buffered']
    #allocation20 [shape = 's32[1]{0}', space=sflag, size = 0x4, scoped, tag = 'scoped memory for tpu_custom_call.1']
    #allocation21 [shape = 'u8[6144]{0}', space=vmem, size = 0x1800, scoped, tag = 'input window, operand 16, single buffered']
    #allocation22 [shape = 'u8[8192]{0}', space=vmem, size = 0x2000, scoped, tag = 'output window, operand 0']
    #allocation23 [shape = 'u8[8192]{0}', space=vmem, size = 0x2000, scoped, tag = 'output window, operand 1']
    #allocation24 [shape = 's32[2]{0}', space=sflag, size = 0x8, scoped, tag = 'scoped memory for tpu_custom_call.1']
    %26 = vsyncpa [#allocation5], 0
    %s27 = scalar_lea.sflag [#allocation5], 1
    %28 = vsyncpa %s27, 0
    %29 = vsyncpa [#allocation8], 0
    %s30 = scalar_lea.sflag [#allocation8], 1
    %31 = vsyncpa %s30, 0
    %32 = vsyncpa [#allocation11], 0
    %33 = vsyncpa [#allocation14], 0
    %34 = vsyncpa [#allocation17], 0
    %35 = vsyncpa [#allocation20], 0
    %36 = vsyncpa [#allocation6], 0
    %s37 = scalar_lea.sflag [#allocation6], 1
    %38 = vsyncpa %s37, 0
    %39 = vsyncpa [#allocation24], 0
    %s40 = scalar_lea.sflag [#allocation24], 1
    %41 = vsyncpa %s40, 0
    loop: start=0, step=1, limit=4
    $region2: #{tpu_custom_call.1} parent=1 // loop_pre_header
      _
    $region3: #{tpu_custom_call.1} parent=1 // loop_header
      %s43 = sphi 0, %s47
      %p44 = scmp.ge.s32.totalorder %s43, 4
      %s50 = sphi 0, %s62
      %s51 = sphi 0, %s58
      %s52 = sphi 0, %s50
      %s53 = sphi 0, %s51
      %s54 = sphi 0, %s52
      %s55 = sphi 0, %s53
      %s67 = sphi 0, %s69
      %s70 = sphi 0, %s67
      %s71 = sphi 0, %s70
      %s87 = sphi 0, %s71
      %s95 = sphi 0, %s97
      %s98 = sphi 0, %s95
      %s99 = sphi 0, %s98
      %s115 = sphi 0, %s99
      %s123 = sphi 0, %s125
      %s126 = sphi 0, %s123
      %s127 = sphi 0, %s126
      %s143 = sphi 0, %s127
      %s151 = sphi 0, %s153
      %s154 = sphi 0, %s151
      %s155 = sphi 0, %s154
      %s171 = sphi 0, %s155
      %s175 = sphi 0, %s175
      %s177 = sphi 0, %s175
      %s178 = sphi 0, %s177
      %s192 = sphi 0, %s178
      %s196 = sphi 0, %s196
      %s198 = sphi 0, %s196
      %s199 = sphi 0, %s198
      %s213 = sphi 0, %s199
      %s217 = sphi 0, %s217
      %s219 = sphi 0, %s217
      %s220 = sphi 0, %s219
      %s234 = sphi 0, %s220
      %s238 = sphi 0, %s238
      %s240 = sphi 0, %s238
      %s241 = sphi 0, %s240
      %s255 = sphi 0, %s241
      %s259 = sphi 0, %s259
      %s261 = sphi 0, %s259
      %s262 = sphi 0, %s261
      %s276 = sphi 0, %s262
      %s280 = sphi 0, %s280
      %s282 = sphi 0, %s280
      %s283 = sphi 0, %s282
      %s297 = sphi 0, %s283
      %s301 = sphi 0, %s301
      %s303 = sphi 0, %s301
      %s304 = sphi 0, %s303
      %s318 = sphi 0, %s304
      %s322 = sphi 0, %s322
      %s324 = sphi 0, %s322
      %s325 = sphi 0, %s324
      %s339 = sphi 0, %s325
      %s343 = sphi 0, %s343
      %s345 = sphi 0, %s343
      %s346 = sphi 0, %s345
      %s360 = sphi 0, %s346
      %s364 = sphi 0, %s364
      %s366 = sphi 0, %s364
      %s367 = sphi 0, %s366
      %s381 = sphi 0, %s367
      %s385 = sphi 0, %s385
      %s387 = sphi 0, %s385
      %s388 = sphi 0, %s387
      %s402 = sphi 0, %s388
      %s406 = sphi 0, %s406
      %s408 = sphi 0, %s406
      %s409 = sphi 0, %s408
      %s423 = sphi 0, %s409
      %s427 = sphi 0, %s427
      %s429 = sphi 0, %s427
      %s430 = sphi 0, %s429
      %s444 = sphi 0, %s430
      %s450 = sphi 0, %s452
      %s453 = sphi 0, %s450
      %s454 = sphi 0, %s453
      %s470 = sphi 0, %s454
      %s476 = sphi 0, %s478
      %s479 = sphi 0, %s476
      %s480 = sphi 0, %s479
      %s496 = sphi 0, %s480
    $region4: #{tpu_custom_call.1} parent=1 // loop_header_branch
      %46 = sbr.rel (%p44) target = $region8
    $region5: #{tpu_custom_call.1} parent=1 // loop_body
      %s48 = ssub.s32 %s43, 1
      %s49 = ssub.s32 %s43, 2
      %s56 = sadd.s32 1, %s51
      %p57 = scmp.ge.s32.totalorder %s56, 1
      %s58 = scalar_select %p57, 0, %s56
      %s59 = sadd.s32 1, %s50
      %s60 = scalar_select %p57, %s59, %s50
      %p61 = scmp.ge.s32.totalorder %s60, 2
      %s62 = scalar_select %p61, 0, %s60
      %s63 = sadd.s32 %s50, %s51
      %s64 = sadd.s32 %s62, %s58
      %s65 = ssub.s32 %s63, %s64
      %p66 = scmp.eq.s32.totalorder %s65, 0
      %s68 = sadd.s32 %s67, 1
      %s69 = scalar_select %p66, %s67, %s68
      %p72 = pneg %p66
      %p73 = scmp.eq.s32.totalorder %s43, 1
      %p74 = por %p72, %p73
      %p75 = scmp.ne.s32.totalorder %s67, %s70
      %p76 = scmp.eq.s32.totalorder %s43, 0
      %p77 = por %p75, %p76
      %p78 = scmp.ne.s32.totalorder %s67, %s70
      %p79 = scmp.eq.s32.totalorder %s48, 1
      %p80 = por %p78, %p79
      %p81 = scmp.ne.s32.totalorder %s70, %s71
      %p82 = scmp.eq.s32.totalorder %s48, 0
      %p83 = por %p81, %p82
      %p84 = scmp.ne.s32.totalorder %s70, %s71
      %p85 = scmp.eq.s32.totalorder %s49, 1
      %p86 = por %p84, %p85
      %p88 = scmp.ne.s32.totalorder %s71, %s87
      %p89 = scmp.eq.s32.totalorder %s49, 0
      %p90 = por %p88, %p89
      %s91 = sadd.s32 %s50, %s51
      %s92 = sadd.s32 %s62, %s58
      %s93 = ssub.s32 %s91, %s92
      %p94 = scmp.eq.s32.totalorder %s93, 0
      %s96 = sadd.s32 %s95, 1
      %s97 = scalar_select %p94, %s95, %s96
      %p100 = pneg %p94
      %p101 = scmp.eq.s32.totalorder %s43, 1
      %p102 = por %p100, %p101
      %p103 = scmp.ne.s32.totalorder %s95, %s98
      %p104 = scmp.eq.s32.totalorder %s43, 0
      %p105 = por %p103, %p104
      %p106 = scmp.ne.s32.totalorder %s95, %s98
      %p107 = scmp.eq.s32.totalorder %s48, 1
      %p108 = por %p106, %p107
      %p109 = scmp.ne.s32.totalorder %s98, %s99
      %p110 = scmp.eq.s32.totalorder %s48, 0
      %p111 = por %p109, %p110
      %p112 = scmp.ne.s32.totalorder %s98, %s99
      %p113 = scmp.eq.s32.totalorder %s49, 1
      %p114 = por %p112, %p113
      %p116 = scmp.ne.s32.totalorder %s99, %s115
      %p117 = scmp.eq.s32.totalorder %s49, 0
      %p118 = por %p116, %p117
      %s119 = sadd.s32 %s50, %s51
      %s120 = sadd.s32 %s62, %s58
      %s121 = ssub.s32 %s119, %s120
      %p122 = scmp.eq.s32.totalorder %s121, 0
      %s124 = sadd.s32 %s123, 1
      %s125 = scalar_select %p122, %s123, %s124
      %p128 = pneg %p122
      %p129 = scmp.eq.s32.totalorder %s43, 1
      %p130 = por %p128, %p129
      %p131 = scmp.ne.s32.totalorder %s123, %s126
      %p132 = scmp.eq.s32.totalorder %s43, 0
      %p133 = por %p131, %p132
      %p134 = scmp.ne.s32.totalorder %s123, %s126
      %p135 = scmp.eq.s32.totalorder %s48, 1
      %p136 = por %p134, %p135
      %p137 = scmp.ne.s32.totalorder %s126, %s127
      %p138 = scmp.eq.s32.totalorder %s48, 0
      %p139 = por %p137, %p138
      %p140 = scmp.ne.s32.totalorder %s126, %s127
      %p141 = scmp.eq.s32.totalorder %s49, 1
      %p142 = por %p140, %p141
      %p144 = scmp.ne.s32.totalorder %s127, %s143
      %p145 = scmp.eq.s32.totalorder %s49, 0
      %p146 = por %p144, %p145
      %s147 = sadd.s32 %s50, %s51
      %s148 = sadd.s32 %s62, %s58
      %s149 = ssub.s32 %s147, %s148
      %p150 = scmp.eq.s32.totalorder %s149, 0
      %s152 = sadd.s32 %s151, 1
      %s153 = scalar_select %p150, %s151, %s152
      %p156 = pneg %p150
      %p157 = scmp.eq.s32.totalorder %s43, 1
      %p158 = por %p156, %p157
      %p159 = scmp.ne.s32.totalorder %s151, %s154
      %p160 = scmp.eq.s32.totalorder %s43, 0
      %p161 = por %p159, %p160
      %p162 = scmp.ne.s32.totalorder %s151, %s154
      %p163 = scmp.eq.s32.totalorder %s48, 1
      %p164 = por %p162, %p163
      %p165 = scmp.ne.s32.totalorder %s154, %s155
      %p166 = scmp.eq.s32.totalorder %s48, 0
      %p167 = por %p165, %p166
      %p168 = scmp.ne.s32.totalorder %s154, %s155
      %p169 = scmp.eq.s32.totalorder %s49, 1
      %p170 = por %p168, %p169
      %p172 = scmp.ne.s32.totalorder %s155, %s171
      %p173 = scmp.eq.s32.totalorder %s49, 0
      %p174 = por %p172, %p173
      %s176 = sadd.s32 %s175, 1
      %p179 = scmp.eq.s32.totalorder %s43, 1
      %p180 = scmp.ne.s32.totalorder %s175, %s177
      %p181 = scmp.eq.s32.totalorder %s43, 0
      %p182 = por %p180, %p181
      %p183 = scmp.ne.s32.totalorder %s175, %s177
      %p184 = scmp.eq.s32.totalorder %s48, 1
      %p185 = por %p183, %p184
      %p186 = scmp.ne.s32.totalorder %s177, %s178
      %p187 = scmp.eq.s32.totalorder %s48, 0
      %p188 = por %p186, %p187
      %p189 = scmp.ne.s32.totalorder %s177, %s178
      %p190 = scmp.eq.s32.totalorder %s49, 1
      %p191 = por %p189, %p190
      %p193 = scmp.ne.s32.totalorder %s178, %s192
      %p194 = scmp.eq.s32.totalorder %s49, 0
      %p195 = por %p193, %p194
      %s197 = sadd.s32 %s196, 1
      %p200 = scmp.eq.s32.totalorder %s43, 1
      %p201 = scmp.ne.s32.totalorder %s196, %s198
      %p202 = scmp.eq.s32.totalorder %s43, 0
      %p203 = por %p201, %p202
      %p204 = scmp.ne.s32.totalorder %s196, %s198
      %p205 = scmp.eq.s32.totalorder %s48, 1
      %p206 = por %p204, %p205
      %p207 = scmp.ne.s32.totalorder %s198, %s199
      %p208 = scmp.eq.s32.totalorder %s48, 0
      %p209 = por %p207, %p208
      %p210 = scmp.ne.s32.totalorder %s198, %s199
      %p211 = scmp.eq.s32.totalorder %s49, 1
      %p212 = por %p210, %p211
      %p214 = scmp.ne.s32.totalorder %s199, %s213
      %p215 = scmp.eq.s32.totalorder %s49, 0
      %p216 = por %p214, %p215
      %s218 = sadd.s32 %s217, 1
      %p221 = scmp.eq.s32.totalorder %s43, 1
      %p222 = scmp.ne.s32.totalorder %s217, %s219
      %p223 = scmp.eq.s32.totalorder %s43, 0
      %p224 = por %p222, %p223
      %p225 = scmp.ne.s32.totalorder %s217, %s219
      %p226 = scmp.eq.s32.totalorder %s48, 1
      %p227 = por %p225, %p226
      %p228 = scmp.ne.s32.totalorder %s219, %s220
      %p229 = scmp.eq.s32.totalorder %s48, 0
      %p230 = por %p228, %p229
      %p231 = scmp.ne.s32.totalorder %s219, %s220
      %p232 = scmp.eq.s32.totalorder %s49, 1
      %p233 = por %p231, %p232
      %p235 = scmp.ne.s32.totalorder %s220, %s234
      %p236 = scmp.eq.s32.totalorder %s49, 0
      %p237 = por %p235, %p236
      %s239 = sadd.s32 %s238, 1
      %p242 = scmp.eq.s32.totalorder %s43, 1
      %p243 = scmp.ne.s32.totalorder %s238, %s240
      %p244 = scmp.eq.s32.totalorder %s43, 0
      %p245 = por %p243, %p244
      %p246 = scmp.ne.s32.totalorder %s238, %s240
      %p247 = scmp.eq.s32.totalorder %s48, 1
      %p248 = por %p246, %p247
      %p249 = scmp.ne.s32.totalorder %s240, %s241
      %p250 = scmp.eq.s32.totalorder %s48, 0
      %p251 = por %p249, %p250
      %p252 = scmp.ne.s32.totalorder %s240, %s241
      %p253 = scmp.eq.s32.totalorder %s49, 1
      %p254 = por %p252, %p253
      %p256 = scmp.ne.s32.totalorder %s241, %s255
      %p257 = scmp.eq.s32.totalorder %s49, 0
      %p258 = por %p256, %p257
      %s260 = sadd.s32 %s259, 1
      %p263 = scmp.eq.s32.totalorder %s43, 1
      %p264 = scmp.ne.s32.totalorder %s259, %s261
      %p265 = scmp.eq.s32.totalorder %s43, 0
      %p266 = por %p264, %p265
      %p267 = scmp.ne.s32.totalorder %s259, %s261
      %p268 = scmp.eq.s32.totalorder %s48, 1
      %p269 = por %p267, %p268
      %p270 = scmp.ne.s32.totalorder %s261, %s262
      %p271 = scmp.eq.s32.totalorder %s48, 0
      %p272 = por %p270, %p271
      %p273 = scmp.ne.s32.totalorder %s261, %s262
      %p274 = scmp.eq.s32.totalorder %s49, 1
      %p275 = por %p273, %p274
      %p277 = scmp.ne.s32.totalorder %s262, %s276
      %p278 = scmp.eq.s32.totalorder %s49, 0
      %p279 = por %p277, %p278
      %s281 = sadd.s32 %s280, 1
      %p284 = scmp.eq.s32.totalorder %s43, 1
      %p285 = scmp.ne.s32.totalorder %s280, %s282
      %p286 = scmp.eq.s32.totalorder %s43, 0
      %p287 = por %p285, %p286
      %p288 = scmp.ne.s32.totalorder %s280, %s282
      %p289 = scmp.eq.s32.totalorder %s48, 1
      %p290 = por %p288, %p289
      %p291 = scmp.ne.s32.totalorder %s282, %s283
      %p292 = scmp.eq.s32.totalorder %s48, 0
      %p293 = por %p291, %p292
      %p294 = scmp.ne.s32.totalorder %s282, %s283
      %p295 = scmp.eq.s32.totalorder %s49, 1
      %p296 = por %p294, %p295
      %p298 = scmp.ne.s32.totalorder %s283, %s297
      %p299 = scmp.eq.s32.totalorder %s49, 0
      %p300 = por %p298, %p299
      %s302 = sadd.s32 %s301, 1
      %p305 = scmp.eq.s32.totalorder %s43, 1
      %p306 = scmp.ne.s32.totalorder %s301, %s303
      %p307 = scmp.eq.s32.totalorder %s43, 0
      %p308 = por %p306, %p307
      %p309 = scmp.ne.s32.totalorder %s301, %s303
      %p310 = scmp.eq.s32.totalorder %s48, 1
      %p311 = por %p309, %p310
      %p312 = scmp.ne.s32.totalorder %s303, %s304
      %p313 = scmp.eq.s32.totalorder %s48, 0
      %p314 = por %p312, %p313
      %p315 = scmp.ne.s32.totalorder %s303, %s304
      %p316 = scmp.eq.s32.totalorder %s49, 1
      %p317 = por %p315, %p316
      %p319 = scmp.ne.s32.totalorder %s304, %s318
      %p320 = scmp.eq.s32.totalorder %s49, 0
      %p321 = por %p319, %p320
      %s323 = sadd.s32 %s322, 1
      %p326 = scmp.eq.s32.totalorder %s43, 1
      %p327 = scmp.ne.s32.totalorder %s322, %s324
      %p328 = scmp.eq.s32.totalorder %s43, 0
      %p329 = por %p327, %p328
      %p330 = scmp.ne.s32.totalorder %s322, %s324
      %p331 = scmp.eq.s32.totalorder %s48, 1
      %p332 = por %p330, %p331
      %p333 = scmp.ne.s32.totalorder %s324, %s325
      %p334 = scmp.eq.s32.totalorder %s48, 0
      %p335 = por %p333, %p334
      %p336 = scmp.ne.s32.totalorder %s324, %s325
      %p337 = scmp.eq.s32.totalorder %s49, 1
      %p338 = por %p336, %p337
      %p340 = scmp.ne.s32.totalorder %s325, %s339
      %p341 = scmp.eq.s32.totalorder %s49, 0
      %p342 = por %p340, %p341
      %s344 = sadd.s32 %s343, 1
      %p347 = scmp.eq.s32.totalorder %s43, 1
      %p348 = scmp.ne.s32.totalorder %s343, %s345
      %p349 = scmp.eq.s32.totalorder %s43, 0
      %p350 = por %p348, %p349
      %p351 = scmp.ne.s32.totalorder %s343, %s345
      %p352 = scmp.eq.s32.totalorder %s48, 1
      %p353 = por %p351, %p352
      %p354 = scmp.ne.s32.totalorder %s345, %s346
      %p355 = scmp.eq.s32.totalorder %s48, 0
      %p356 = por %p354, %p355
      %p357 = scmp.ne.s32.totalorder %s345, %s346
      %p358 = scmp.eq.s32.totalorder %s49, 1
      %p359 = por %p357, %p358
      %p361 = scmp.ne.s32.totalorder %s346, %s360
      %p362 = scmp.eq.s32.totalorder %s49, 0
      %p363 = por %p361, %p362
      %s365 = sadd.s32 %s364, 1
      %p368 = scmp.eq.s32.totalorder %s43, 1
      %p369 = scmp.ne.s32.totalorder %s364, %s366
      %p370 = scmp.eq.s32.totalorder %s43, 0
      %p371 = por %p369, %p370
      %p372 = scmp.ne.s32.totalorder %s364, %s366
      %p373 = scmp.eq.s32.totalorder %s48, 1
      %p374 = por %p372, %p373
      %p375 = scmp.ne.s32.totalorder %s366, %s367
      %p376 = scmp.eq.s32.totalorder %s48, 0
      %p377 = por %p375, %p376
      %p378 = scmp.ne.s32.totalorder %s366, %s367
      %p379 = scmp.eq.s32.totalorder %s49, 1
      %p380 = por %p378, %p379
      %p382 = scmp.ne.s32.totalorder %s367, %s381
      %p383 = scmp.eq.s32.totalorder %s49, 0
      %p384 = por %p382, %p383
      %s386 = sadd.s32 %s385, 1
      %p389 = scmp.eq.s32.totalorder %s43, 1
      %p390 = scmp.ne.s32.totalorder %s385, %s387
      %p391 = scmp.eq.s32.totalorder %s43, 0
      %p392 = por %p390, %p391
      %p393 = scmp.ne.s32.totalorder %s385, %s387
      %p394 = scmp.eq.s32.totalorder %s48, 1
      %p395 = por %p393, %p394
      %p396 = scmp.ne.s32.totalorder %s387, %s388
      %p397 = scmp.eq.s32.totalorder %s48, 0
      %p398 = por %p396, %p397
      %p399 = scmp.ne.s32.totalorder %s387, %s388
      %p400 = scmp.eq.s32.totalorder %s49, 1
      %p401 = por %p399, %p400
      %p403 = scmp.ne.s32.totalorder %s388, %s402
      %p404 = scmp.eq.s32.totalorder %s49, 0
      %p405 = por %p403, %p404
      %s407 = sadd.s32 %s406, 1
      %p410 = scmp.eq.s32.totalorder %s43, 1
      %p411 = scmp.ne.s32.totalorder %s406, %s408
      %p412 = scmp.eq.s32.totalorder %s43, 0
      %p413 = por %p411, %p412
      %p414 = scmp.ne.s32.totalorder %s406, %s408
      %p415 = scmp.eq.s32.totalorder %s48, 1
      %p416 = por %p414, %p415
      %p417 = scmp.ne.s32.totalorder %s408, %s409
      %p418 = scmp.eq.s32.totalorder %s48, 0
      %p419 = por %p417, %p418
      %p420 = scmp.ne.s32.totalorder %s408, %s409
      %p421 = scmp.eq.s32.totalorder %s49, 1
      %p422 = por %p420, %p421
      %p424 = scmp.ne.s32.totalorder %s409, %s423
      %p425 = scmp.eq.s32.totalorder %s49, 0
      %p426 = por %p424, %p425
      %s428 = sadd.s32 %s427, 1
      %p431 = scmp.eq.s32.totalorder %s43, 1
      %p432 = scmp.ne.s32.totalorder %s427, %s429
      %p433 = scmp.eq.s32.totalorder %s43, 0
      %p434 = por %p432, %p433
      %p435 = scmp.ne.s32.totalorder %s427, %s429
      %p436 = scmp.eq.s32.totalorder %s48, 1
      %p437 = por %p435, %p436
      %p438 = scmp.ne.s32.totalorder %s429, %s430
      %p439 = scmp.eq.s32.totalorder %s48, 0
      %p440 = por %p438, %p439
      %p441 = scmp.ne.s32.totalorder %s429, %s430
      %p442 = scmp.eq.s32.totalorder %s49, 1
      %p443 = por %p441, %p442
      %p445 = scmp.ne.s32.totalorder %s430, %s444
      %p446 = scmp.eq.s32.totalorder %s49, 0
      %p447 = por %p445, %p446
      %s448 = ssub.s32 %s50, %s62
      %p449 = scmp.eq.s32.totalorder %s448, 0
      %s451 = sadd.s32 %s450, 1
      %s452 = scalar_select %p449, %s450, %s451
      %p455 = pneg %p449
      %p456 = scmp.eq.s32.totalorder %s43, 1
      %p457 = por %p455, %p456
      %p458 = scmp.ne.s32.totalorder %s450, %s453
      %p459 = scmp.eq.s32.totalorder %s43, 0
      %p460 = por %p458, %p459
      %p461 = scmp.ne.s32.totalorder %s450, %s453
      %p462 = scmp.eq.s32.totalorder %s48, 1
      %p463 = por %p461, %p462
      %p464 = scmp.ne.s32.totalorder %s453, %s454
      %p465 = scmp.eq.s32.totalorder %s48, 0
      %p466 = por %p464, %p465
      %p467 = scmp.ne.s32.totalorder %s453, %s454
      %p468 = scmp.eq.s32.totalorder %s49, 1
      %p469 = por %p467, %p468
      %p471 = scmp.ne.s32.totalorder %s454, %s470
      %p472 = scmp.eq.s32.totalorder %s49, 0
      %p473 = por %p471, %p472
      %s474 = ssub.s32 %s50, %s62
      %p475 = scmp.eq.s32.totalorder %s474, 0
      %s477 = sadd.s32 %s476, 1
      %s478 = scalar_select %p475, %s476, %s477
      %p481 = pneg %p475
      %p482 = scmp.eq.s32.totalorder %s43, 1
      %p483 = por %p481, %p482
      %p484 = scmp.ne.s32.totalorder %s476, %s479
      %p485 = scmp.eq.s32.totalorder %s43, 0
      %p486 = por %p484, %p485
      %p487 = scmp.ne.s32.totalorder %s476, %s479
      %p488 = scmp.eq.s32.totalorder %s48, 1
      %p489 = por %p487, %p488
      %p490 = scmp.ne.s32.totalorder %s479, %s480
      %p491 = scmp.eq.s32.totalorder %s48, 0
      %p492 = por %p490, %p491
      %p493 = scmp.ne.s32.totalorder %s479, %s480
      %p494 = scmp.eq.s32.totalorder %s49, 1
      %p495 = por %p493, %p494
      %p497 = scmp.ne.s32.totalorder %s480, %s496
      %p498 = scmp.eq.s32.totalorder %s49, 0
      %p499 = por %p497, %p498
      %p500 = scmp.le.s32.totalorder 1, %s43
      %p501 = scmp.lt.s32.totalorder %s43, 3
      %p502 = pnand %p500, %p501
      %p503 = pneg %p502
      // Predicated region
      $region9: #{tpu_custom_call.1} parent=5 // pred_check
        _
      $region10: #{tpu_custom_call.1} parent=5 // pred_check_branch
        %505 = sbr.rel (%p502) target = $region12
      $region11: #{tpu_custom_call.1} parent=5 // pred_region
        %s506 = ssub.s32 %s43, 1
        // Predicated region
        $region13: #{tpu_custom_call.1} parent=11 // pred_check
          %p507 = pneg %p188
        $region14: #{tpu_custom_call.1} parent=11 // pred_check_branch
          %509 = sbr.rel (%p507) target = $region16
        $region15: #{tpu_custom_call.1} parent=11 // pred_region
          %s511 = ssub.s32 512, 512
          %512 = vsyncadd [#allocation11], %s511
          %s513 = sshll.u32 [#allocation10], 4
          %s514 = int_to_ptr.vmem [resolvable:$true] %s513
          %519 = dma.hbm_to_vmem [thread:$0]  %s5, 512, %s514, [#allocation11], 64, 64, 4
        $region16: #{tpu_custom_call.1} parent=11 // pred_fallthru
          _
        // Predicated region
        $region17: #{tpu_custom_call.1} parent=11 // pred_check
          %p520 = pneg %p209
        $region18: #{tpu_custom_call.1} parent=11 // pred_check_branch
          %522 = sbr.rel (%p520) target = $region20
        $region19: #{tpu_custom_call.1} parent=11 // pred_region
          _
        $region20: #{tpu_custom_call.1} parent=11 // pred_fallthru
          _
        // Predicated region
        $region21: #{tpu_custom_call.1} parent=11 // pred_check
          %p523 = pneg %p230
        $region22: #{tpu_custom_call.1} parent=11 // pred_check_branch
          %525 = sbr.rel (%p523) target = $region24
        $region23: #{tpu_custom_call.1} parent=11 // pred_region
          _
        $region24: #{tpu_custom_call.1} parent=11 // pred_fallthru
          _
        // Predicated region
        $region25: #{tpu_custom_call.1} parent=11 // pred_check
          %p526 = pneg %p251
        $region26: #{tpu_custom_call.1} parent=11 // pred_check_branch
          %528 = sbr.rel (%p526) target = $region28
        $region27: #{tpu_custom_call.1} parent=11 // pred_region
          %s530 = ssub.s32 128, 128
          %531 = vsyncadd [#allocation11], %s530
          %s532 = sshll.u32 [#allocation12], 4
          %s533 = int_to_ptr.vmem [resolvable:$true] %s532
          %538 = dma.hbm_to_vmem [thread:$0]  %s8, 128, %s533, [#allocation11], 16, 16, 1
        $region28: #{tpu_custom_call.1} parent=11 // pred_fallthru
          _
        // Predicated region
        $region29: #{tpu_custom_call.1} parent=11 // pred_check
          %p539 = pneg %p272
        $region30: #{tpu_custom_call.1} parent=11 // pred_check_branch
          %541 = sbr.rel (%p539) target = $region32
        $region31: #{tpu_custom_call.1} parent=11 // pred_region
          %s543 = ssub.s32 512, 512
          %544 = vsyncadd [#allocation14], %s543
          %s545 = sshll.u32 [#allocation13], 4
          %s546 = int_to_ptr.vmem [resolvable:$true] %s545
          %551 = dma.hbm_to_vmem [thread:$0]  %s9, 512, %s546, [#allocation14], 64, 64, 4
        $region32: #{tpu_custom_call.1} parent=11 // pred_fallthru
          _
        // Predicated region
        $region33: #{tpu_custom_call.1} parent=11 // pred_check
          %p552 = pneg %p293
        $region34: #{tpu_custom_call.1} parent=11 // pred_check_branch
          %554 = sbr.rel (%p552) target = $region36
        $region35: #{tpu_custom_call.1} parent=11 // pred_region
          %s556 = ssub.s32 32, 32
          %557 = vsyncadd [#allocation14], %s556
          %s558 = sshll.u32 [#allocation15], 4
          %s559 = int_to_ptr.vmem [resolvable:$true] %s558
          %564 = dma.hbm_to_vmem [thread:$0]  %s10, 32, %s559, [#allocation14], 16, 16, 1
        $region36: #{tpu_custom_call.1} parent=11 // pred_fallthru
          _
        // Predicated region
        $region37: #{tpu_custom_call.1} parent=11 // pred_check
          %p565 = pneg %p314
        $region38: #{tpu_custom_call.1} parent=11 // pred_check_branch
          %567 = sbr.rel (%p565) target = $region40
        $region39: #{tpu_custom_call.1} parent=11 // pred_region
          _
        $region40: #{tpu_custom_call.1} parent=11 // pred_fallthru
          _
        // Predicated region
        $region41: #{tpu_custom_call.1} parent=11 // pred_check
          %p568 = pneg %p335
        $region42: #{tpu_custom_call.1} parent=11 // pred_check_branch
          %570 = sbr.rel (%p568) target = $region44
        $region43: #{tpu_custom_call.1} parent=11 // pred_region
          %s572 = ssub.s32 64, 64
          %573 = vsyncadd [#allocation17], %s572
          %s574 = sshll.u32 [#allocation16], 4
          %s575 = int_to_ptr.vmem [resolvable:$true] %s574
          %580 = dma.hbm_to_vmem [thread:$0]  %s12, 64, %s575, [#allocation17], 16, 16, 1
        $region44: #{tpu_custom_call.1} parent=11 // pred_fallthru
          _
        // Predicated region
        $region45: #{tpu_custom_call.1} parent=11 // pred_check
          %p581 = pneg %p356
        $region46: #{tpu_custom_call.1} parent=11 // pred_check_branch
          %583 = sbr.rel (%p581) target = $region48
        $region47: #{tpu_custom_call.1} parent=11 // pred_region
          _
        $region48: #{tpu_custom_call.1} parent=11 // pred_fallthru
          _
        // Predicated region
        $region49: #{tpu_custom_call.1} parent=11 // pred_check
          %p584 = pneg %p377
        $region50: #{tpu_custom_call.1} parent=11 // pred_check_branch
          %586 = sbr.rel (%p584) target = $region52
        $region51: #{tpu_custom_call.1} parent=11 // pred_region
          %s588 = ssub.s32 64, 64
          %589 = vsyncadd [#allocation17], %s588
          %s590 = sshll.u32 [#allocation18], 4
          %s591 = int_to_ptr.vmem [resolvable:$true] %s590
          %596 = dma.hbm_to_vmem [thread:$0]  %s14, 64, %s591, [#allocation17], 16, 16, 1
        $region52: #{tpu_custom_call.1} parent=11 // pred_fallthru
          _
        // Predicated region
        $region53: #{tpu_custom_call.1} parent=11 // pred_check
          %p597 = pneg %p398
        $region54: #{tpu_custom_call.1} parent=11 // pred_check_branch
          %599 = sbr.rel (%p597) target = $region56
        $region55: #{tpu_custom_call.1} parent=11 // pred_region
          %s601 = ssub.s32 192, 192
          %602 = vsyncadd [#allocation20], %s601
          %s603 = sshll.u32 [#allocation19], 4
          %s604 = int_to_ptr.vmem [resolvable:$true] %s603
          %609 = dma.hbm_to_vmem [thread:$0]  %s15, 192, %s604, [#allocation20], 16, 16, 1
        $region56: #{tpu_custom_call.1} parent=11 // pred_fallthru
          _
        // Predicated region
        $region57: #{tpu_custom_call.1} parent=11 // pred_check
          %p610 = pneg %p419
        $region58: #{tpu_custom_call.1} parent=11 // pred_check_branch
          %612 = sbr.rel (%p610) target = $region60
        $region59: #{tpu_custom_call.1} parent=11 // pred_region
          %s614 = ssub.s32 192, 192
          %615 = vsyncadd [#allocation20], %s614
          %s616 = sshll.u32 [#allocation21], 4
          %s617 = int_to_ptr.vmem [resolvable:$true] %s616
          %622 = dma.hbm_to_vmem [thread:$0]  %s16, 192, %s617, [#allocation20], 16, 16, 1
        $region60: #{tpu_custom_call.1} parent=11 // pred_fallthru
          _
        // Predicated region
        $region61: #{tpu_custom_call.1} parent=11 // pred_check
          %p623 = pneg %p440
        $region62: #{tpu_custom_call.1} parent=11 // pred_check_branch
          %625 = sbr.rel (%p623) target = $region64
        $region63: #{tpu_custom_call.1} parent=11 // pred_region
          _
        $region64: #{tpu_custom_call.1} parent=11 // pred_fallthru
          _
      $region12: #{tpu_custom_call.1} parent=5 // pred_fallthru
        _
      %p626 = scmp.lt.s32.totalorder %s43, 2
      // Predicated region
      $region65: #{tpu_custom_call.1} parent=5 // pred_check
        %p627 = pneg %p626
      $region66: #{tpu_custom_call.1} parent=5 // pred_check_branch
        %629 = sbr.rel (%p627) target = $region68
      $region67: #{tpu_custom_call.1} parent=5 // pred_region
        // Predicated region
        $region69: #{tpu_custom_call.1} parent=67 // pred_check
          %p630 = pneg %p77
        $region70: #{tpu_custom_call.1} parent=67 // pred_check_branch
          %632 = sbr.rel (%p630) target = $region72
        $region71: #{tpu_custom_call.1} parent=67 // pred_region
          %s633 = sand.u32 %s67, 1
          %s634 = scalar_lea.sflag [#allocation5], %s633
          %s635 = sand.u32 %s67, 1
          %s636 = smul.addr %s635, 8
          %s637 = scalar_lea.vmem [#allocation4], %s636
          %s638 = sadd.s32 %s50, %s51
          %s640 = ssub.s32 128, 128
          %641 = vsyncadd %s634, %s640
          %s642 = smul.addr %s638, 128
          %s643 = scalar_lea.hbm %s1, %s642
          %s645 = sshll.u32 %s637, 4
          %s646 = int_to_ptr.vmem [resolvable:$true] %s645
          %648 = dma.hbm_to_vmem [thread:$0]  %s643, 128, %s646, %s634
        $region72: #{tpu_custom_call.1} parent=67 // pred_fallthru
          _
        // Predicated region
        $region73: #{tpu_custom_call.1} parent=67 // pred_check
          %p649 = pneg %p105
        $region74: #{tpu_custom_call.1} parent=67 // pred_check_branch
          %651 = sbr.rel (%p649) target = $region76
        $region75: #{tpu_custom_call.1} parent=67 // pred_region
          %s652 = sand.u32 %s43, 1
          %s653 = scalar_lea.sflag [#allocation8], %s652
          %s654 = sand.u32 %s95, 1
          %s655 = smul.addr %s654, 8
          %s656 = scalar_lea.vmem [#allocation7], %s655
          %s657 = sadd.s32 %s50, %s51
          %s659 = ssub.s32 128, 128
          %660 = vsyncadd %s653, %s659
          %s661 = smul.addr %s657, 128
          %s662 = scalar_lea.hbm %s2, %s661
          %s664 = sshll.u32 %s656, 4
          %s665 = int_to_ptr.vmem [resolvable:$true] %s664
          %667 = dma.hbm_to_vmem [thread:$0]  %s662, 128, %s665, %s653
        $region76: #{tpu_custom_call.1} parent=67 // pred_fallthru
          _
        // Predicated region
        $region77: #{tpu_custom_call.1} parent=67 // pred_check
          %p668 = pneg %p133
        $region78: #{tpu_custom_call.1} parent=67 // pred_check_branch
          %670 = sbr.rel (%p668) target = $region80
        $region79: #{tpu_custom_call.1} parent=67 // pred_region
          %s671 = sand.u32 %s43, 1
          %s672 = scalar_lea.sflag [#allocation8], %s671
          %s673 = sand.u32 %s123, 1
          %s674 = smul.addr %s673, 8
          %s675 = scalar_lea.vmem [#allocation9], %s674
          %s676 = sadd.s32 %s50, %s51
          %s678 = ssub.s32 128, 128
          %679 = vsyncadd %s672, %s678
          %s680 = smul.addr %s676, 128
          %s681 = scalar_lea.hbm %s3, %s680
          %s683 = sshll.u32 %s675, 4
          %s684 = int_to_ptr.vmem [resolvable:$true] %s683
          %686 = dma.hbm_to_vmem [thread:$0]  %s681, 128, %s684, %s672
        $region80: #{tpu_custom_call.1} parent=67 // pred_fallthru
          _
        // Predicated region
        $region81: #{tpu_custom_call.1} parent=67 // pred_check
          %p687 = pneg %p161
        $region82: #{tpu_custom_call.1} parent=67 // pred_check_branch
          %689 = sbr.rel (%p687) target = $region84
        $region83: #{tpu_custom_call.1} parent=67 // pred_region
          %s690 = sadd.s32 %s50, %s51
          %p691 = scmp.lt.s32.totalorder %s690, 1
          %s692 = scalar_select %p691, %s690, 1
          %s693 = smul.addr %s692, 8
          %s694 = scalar_lea.vmem %s4, %s693
          %s695 = sadd.s32 %s50, %s51
        $region84: #{tpu_custom_call.1} parent=67 // pred_fallthru
          _
      $region68: #{tpu_custom_call.1} parent=5 // pred_fallthru
        _
      %p696 = scmp.le.s32.totalorder 1, %s43
      %p697 = scmp.lt.s32.totalorder %s43, 3
      %p698 = pnand %p696, %p697
      %p699 = pneg %p698
      // Predicated region
      $region85: #{tpu_custom_call.1} parent=5 // pred_check
        _
      $region86: #{tpu_custom_call.1} parent=5 // pred_check_branch
        %701 = sbr.rel (%p698) target = $region88
      $region87: #{tpu_custom_call.1} parent=5 // pred_region
        %s702 = ssub.s32 %s43, 1
        %s703 = sand.u32 %s70, 1
        %s704 = scalar_lea.sflag [#allocation5], %s703
        %s705 = sand.u32 %s70, 1
        %s706 = smul.addr %s705, 8
        %s707 = scalar_lea.vmem [#allocation4], %s706
        // Predicated region
        $region89: #{tpu_custom_call.1} parent=87 // pred_check
          %p708 = pneg %p83
        $region90: #{tpu_custom_call.1} parent=87 // pred_check_branch
          %710 = sbr.rel (%p708) target = $region92
        $region91: #{tpu_custom_call.1} parent=87 // pred_region
          %711 = dma.done %s704, 128
        $region92: #{tpu_custom_call.1} parent=87 // pred_fallthru
          _
        %s712 = sand.u32 %s48, 1
        %s713 = scalar_lea.sflag [#allocation8], %s712
        %s714 = sand.u32 %s98, 1
        %s715 = smul.addr %s714, 8
        %s716 = scalar_lea.vmem [#allocation7], %s715
        // Predicated region
        $region93: #{tpu_custom_call.1} parent=87 // pred_check
          %p717 = pneg %p111
        $region94: #{tpu_custom_call.1} parent=87 // pred_check_branch
          %719 = sbr.rel (%p717) target = $region96
        $region95: #{tpu_custom_call.1} parent=87 // pred_region
          %720 = dma.done %s713, 128
        $region96: #{tpu_custom_call.1} parent=87 // pred_fallthru
          _
        %s721 = sand.u32 %s48, 1
        %s722 = scalar_lea.sflag [#allocation8], %s721
        %s723 = sand.u32 %s126, 1
        %s724 = smul.addr %s723, 8
        %s725 = scalar_lea.vmem [#allocation9], %s724
        // Predicated region
        $region97: #{tpu_custom_call.1} parent=87 // pred_check
          %p726 = pneg %p139
        $region98: #{tpu_custom_call.1} parent=87 // pred_check_branch
          %728 = sbr.rel (%p726) target = $region100
        $region99: #{tpu_custom_call.1} parent=87 // pred_region
          %729 = dma.done %s722, 128
        $region100: #{tpu_custom_call.1} parent=87 // pred_fallthru
          _
        // Predicated region
        $region101: #{tpu_custom_call.1} parent=87 // pred_check
          %p730 = pneg %p188
        $region102: #{tpu_custom_call.1} parent=87 // pred_check_branch
          %732 = sbr.rel (%p730) target = $region104
        $region103: #{tpu_custom_call.1} parent=87 // pred_region
          %733 = dma.done [#allocation11], 512
        $region104: #{tpu_custom_call.1} parent=87 // pred_fallthru
          _
        // Predicated region
        $region105: #{tpu_custom_call.1} parent=87 // pred_check
          %p734 = pneg %p251
        $region106: #{tpu_custom_call.1} parent=87 // pred_check_branch
          %736 = sbr.rel (%p734) target = $region108
        $region107: #{tpu_custom_call.1} parent=87 // pred_region
          %737 = dma.done [#allocation11], 128
        $region108: #{tpu_custom_call.1} parent=87 // pred_fallthru
          _
        // Predicated region
        $region109: #{tpu_custom_call.1} parent=87 // pred_check
          %p738 = pneg %p272
        $region110: #{tpu_custom_call.1} parent=87 // pred_check_branch
          %740 = sbr.rel (%p738) target = $region112
        $region111: #{tpu_custom_call.1} parent=87 // pred_region
          %741 = dma.done [#allocation14], 512
        $region112: #{tpu_custom_call.1} parent=87 // pred_fallthru
          _
        // Predicated region
        $region113: #{tpu_custom_call.1} parent=87 // pred_check
          %p742 = pneg %p293
        $region114: #{tpu_custom_call.1} parent=87 // pred_check_branch
          %744 = sbr.rel (%p742) target = $region116
        $region115: #{tpu_custom_call.1} parent=87 // pred_region
          %745 = dma.done [#allocation14], 32
        $region116: #{tpu_custom_call.1} parent=87 // pred_fallthru
          _
        // Predicated region
        $region117: #{tpu_custom_call.1} parent=87 // pred_check
          %p746 = pneg %p335
        $region118: #{tpu_custom_call.1} parent=87 // pred_check_branch
          %748 = sbr.rel (%p746) target = $region120
        $region119: #{tpu_custom_call.1} parent=87 // pred_region
          %749 = dma.done [#allocation17], 64
        $region120: #{tpu_custom_call.1} parent=87 // pred_fallthru
          _
        // Predicated region
        $region121: #{tpu_custom_call.1} parent=87 // pred_check
          %p750 = pneg %p377
        $region122: #{tpu_custom_call.1} parent=87 // pred_check_branch
          %752 = sbr.rel (%p750) target = $region124
        $region123: #{tpu_custom_call.1} parent=87 // pred_region
          %753 = dma.done [#allocation17], 64
        $region124: #{tpu_custom_call.1} parent=87 // pred_fallthru
          _
        // Predicated region
        $region125: #{tpu_custom_call.1} parent=87 // pred_check
          %p754 = pneg %p398
        $region126: #{tpu_custom_call.1} parent=87 // pred_check_branch
          %756 = sbr.rel (%p754) target = $region128
        $region127: #{tpu_custom_call.1} parent=87 // pred_region
          %757 = dma.done [#allocation20], 192
        $region128: #{tpu_custom_call.1} parent=87 // pred_fallthru
          _
        // Predicated region
        $region129: #{tpu_custom_call.1} parent=87 // pred_check
          %p758 = pneg %p419
        $region130: #{tpu_custom_call.1} parent=87 // pred_check_branch
          %760 = sbr.rel (%p758) target = $region132
        $region131: #{tpu_custom_call.1} parent=87 // pred_region
          %761 = dma.done [#allocation20], 192
        $region132: #{tpu_custom_call.1} parent=87 // pred_fallthru
          _
        %s762 = sand.u32 %s70, 1
        %s763 = scalar_lea.sflag [#allocation5], %s762
        %s764 = sand.u32 %s70, 1
        %s765 = smul.addr %s764, 8
        %s766 = scalar_lea.vmem [#allocation4], %s765
        %p767 = pneg %p83
        %p768 = pneg %p80
        %s769 = sand.u32 %s48, 1
        %s770 = scalar_lea.sflag [#allocation8], %s769
        %s771 = sand.u32 %s98, 1
        %s772 = smul.addr %s771, 8
        %s773 = scalar_lea.vmem [#allocation7], %s772
        %p774 = pneg %p111
        %p775 = pneg %p108
        %s776 = sand.u32 %s48, 1
        %s777 = scalar_lea.sflag [#allocation8], %s776
        %s778 = sand.u32 %s126, 1
        %s779 = smul.addr %s778, 8
        %s780 = scalar_lea.vmem [#allocation9], %s779
        %p781 = pneg %p139
        %p782 = pneg %p136
        %s783 = sadd.s32 %s52, %s53
        %p784 = scmp.lt.s32.totalorder %s783, 1
        %s785 = scalar_select %p784, %s783, 1
        %s786 = smul.addr %s785, 8
        %s787 = scalar_lea.vmem %s4, %s786
        %p788 = pneg %p167
        %p789 = pneg %p164
        %p790 = pneg %p188
        %p791 = pneg %p185
        %p792 = pneg %p209
        %p793 = pneg %p206
        %p794 = pneg %p230
        %p795 = pneg %p227
        %p796 = pneg %p251
        %p797 = pneg %p248
        %p798 = pneg %p272
        %p799 = pneg %p269
        %p800 = pneg %p293
        %p801 = pneg %p290
        %p802 = pneg %p314
        %p803 = pneg %p311
        %p804 = pneg %p335
        %p805 = pneg %p332
        %p806 = pneg %p356
        %p807 = pneg %p353
        %p808 = pneg %p377
        %p809 = pneg %p374
        %p810 = pneg %p398
        %p811 = pneg %p395
        %p812 = pneg %p419
        %p813 = pneg %p416
        %p814 = pneg %p440
        %p815 = pneg %p437
        %p816 = pneg %p466
        %p817 = pneg %p463
        %s818 = sand.u32 %s453, 1
        %s819 = scalar_lea.sflag [#allocation6], %s818
        %s820 = sand.u32 %s453, 1
        %s821 = smul.addr %s820, 8
        %s822 = scalar_lea.vmem [#allocation22], %s821
        %p823 = pneg %p492
        %p824 = pneg %p489
        %s825 = sand.u32 %s479, 1
        %s826 = scalar_lea.sflag [#allocation24], %s825
        %s827 = sand.u32 %s479, 1
        %s828 = smul.addr %s827, 8
        %s829 = scalar_lea.vmem [#allocation23], %s828
        %s830 = sadd.s32 %s52, %s53
        %s831 = sadd.s32 %s52, %s53
        %s832 = sadd.s32 %s52, %s53
        %s833 = sadd.s32 %s52, %s53
        %p834 = scmp.lt.s32.totalorder %s833, 1
        %s835 = scalar_select %p834, %s833, 1
        %s836 = smul.addr %s835, 8
        %s837 = scalar_lea.vmem %s4, %s836
        %s838 = sadd.s32 %s52, %s53
        %p840 = scmp.eq.s32.totalorder %s53, 0
        // Predicated region
        $region133: #{tpu_custom_call.1} parent=87 // pred_check
          %p841 = pneg %p840
        $region134: #{tpu_custom_call.1} parent=87 // pred_check_branch
          %843 = sbr.rel (%p841) target = $region136
        $region135: #{tpu_custom_call.1} parent=87 // pred_region
          %vm844 = vcmask 261120
          %845 = vst.msk [vmem:[%s822] sm:$0xff] %vm844, -1e+30
          %846 = vst.msk [vmem:[%s829] sm:$0xff] %vm844, 1e+30
        $region136: #{tpu_custom_call.1} parent=87 // pred_fallthru
          _
        %v847 = vld [vmem:[%s707] sm:$0xff]
        %v848 = vld [vmem:[%s716] sm:$0xff]
        %v849 = vld [vmem:[%s725] sm:$0xff]
        %v850 = vld [vmem:[%s837] sm:$0xff]
        %v851 = vld [vmem:[%s17] sm:$0xf]
        %v852 = vld [vmem:[%s17 + $0x4] sm:$0xf]
        %v853 = vld [vmem:[%s17 + $0x8] sm:$0xf]
        %v854 = vld [vmem:[%s17 + $0xc] sm:$0xf]
        %856 = vrot.lane.b32.xlu0 %v850, 1
        %v857 = vpop.permute.xlu0 %856
        %v859 = vsub.f32 %v850, %v857
        %860 = vrot.lane.b32.xlu0 %v850, 127
        %v861 = vpop.permute.xlu0 %860
        %v863 = vsub.f32 %v850, %v861
        %v864 = vld [vmem:[#allocation19] sm:$0x1]
        %v865 = vld [vmem:[#allocation21] sm:$0x1]
        %vm866 = vcmask 261120
        %v867 = vsel %vm866, %v847, 0.0
        %868 = vadd.xlane.f32.xlu0 %v867
        %v869 = vpop.xlane.xlu0 %868
        %v870 = vrcp.pop 32.0
        %v871 = vmul.f32 %v869, %v870
        %v872 = vsub.f32 %v847, %v871
        %v873 = vmul.f32 %v872, %v872
        %v874 = vsel %vm866, %v873, 0.0
        %875 = vadd.xlane.f32.xlu0 %v874
        %v876 = vpop.xlane.xlu0 %875
        %v877 = vmul.f32 %v876, 0.032258064
        %v878 = vrsqrt.pop %v877
        %v879 = vmul.f32 %v877, %v878
        %vm880 = vcmp.eq.f32.partialorder %v877, inf
        %v881 = vsel %vm880, %v877, %v879
        %vm882 = vcmp.eq.f32.partialorder %v877, 0.0
        %v883 = vand.u32 %v877, 2147483648
        %v884 = vsel %vm882, %v883, %v881
        %v885 = vadd.f32 %v884, 1e-06
        %v886 = vrcp.pop %v885
        %v888 = vlaneseq
        %v889 = vshrl.u32 %v888, 7
        %v890 = vsub.s32 0, %v889
        %v891 = vrot.slane %v864, %v890
        %v893 = vmul.f32 %v891, %v872
        %v894 = vmul.f32 %v893, %v886
        %v896 = vlaneseq
        %v897 = vshrl.u32 %v896, 7
        %v898 = vsub.s32 0, %v897
        %v899 = vrot.slane %v865, %v898
        %v901 = vadd.f32 %v894, %v899
        %v902 = vsel %vm866, %v848, 0.0
        %903 = vadd.xlane.f32.xlu0 %v902
        %v904 = vpop.xlane.xlu0 %903
        %v905 = vmul.f32 %v904, %v870
        %v906 = vsub.f32 %v848, %v905
        %v907 = vmul.f32 %v906, %v906
        %v908 = vsel %vm866, %v907, 0.0
        %909 = vadd.xlane.f32.xlu0 %v908
        %v910 = vpop.xlane.xlu0 %909
        %v911 = vmul.f32 %v910, 0.032258064
        %v912 = vrsqrt.pop %v911
        %v913 = vmul.f32 %v911, %v912
        %vm914 = vcmp.eq.f32.partialorder %v911, inf
        %v915 = vsel %vm914, %v911, %v913
        %vm916 = vcmp.eq.f32.partialorder %v911, 0.0
        %v917 = vand.u32 %v911, 2147483648
        %v918 = vsel %vm916, %v917, %v915
        %v919 = vadd.f32 %v918, 1e-06
        %v920 = vrcp.pop %v919
        %v921 = vmul.f32 %v891, %v906
        %v922 = vmul.f32 %v921, %v920
        %v923 = vadd.f32 %v922, %v899
        %v924 = vld [vmem:[#allocation10] sm:$0xf]
        %v925 = vld [vmem:[#allocation10 + $0x4] sm:$0xf]
        %v926 = vld [vmem:[#allocation10 + $0x8] sm:$0xf]
        %v927 = vld [vmem:[#allocation10 + $0xc] sm:$0xf]
        %v928 = vpack.c.bf16 %v901, %v901
        %v929 = vld [vmem:[%s6] sm:$0x1]
        %v931 = vlaneseq
        %v932 = vshrl.u32 %v931, 7
        %v933 = vsub.s32 0, %v932
        %v934 = vrot.slane %v929, %v933
        %v940 = vunpack.c.l.b16 %v924
        %v941 = vunpack.c.l.b16 %v925
        %v942 = vunpack.c.l.b16 %v926
        %v943 = vunpack.c.l.b16 %v927
        %v944 = vpack.c.b16 %v941, %v940
        %v945 = vpack.c.b16 %v943, %v942
        %v949 = vsel %vm866, %v928, 0
        %951 = vmatprep.subr.bf16.mxu0 0
        %952 = vmatpush1.bf16.msra.mxu0 %v944
        %953 = vmatprep.subr.bf16.mxu0 0
        %954 = vmatpush1.bf16.msra.mxu0 %v945
        %955 = vmatprep.subr.bf16.mxu0 0
        %956 = vmatpush1.bf16.msra.mxu0 0
        %957 = vmatprep.subr.bf16.mxu0 0
        %958 = vmatpush1.bf16.msra.mxu0 0
        %959 = vmatprep.subr.bf16.mxu0 0
        %960 = vmatpush1.bf16.msra.mxu0 0
        %961 = vmatprep.subr.bf16.mxu0 0
        %962 = vmatpush1.bf16.msra.mxu0 0
        %963 = vmatprep.subr.bf16.mxu0 0
        %964 = vmatpush1.bf16.msra.mxu0 0
        %965 = vmatprep.subr.bf16.mxu0 0
        %966 = vmatpush1.bf16.msra.mxu0 0
        %967 = vmatprep.subr.bf16.mxu0 0
        %968 = vmatpush1.bf16.msra.mxu0 0
        %969 = vmatprep.subr.bf16.mxu0 0
        %970 = vmatpush1.bf16.msra.mxu0 0
        %971 = vmatprep.subr.bf16.mxu0 0
        %972 = vmatpush1.bf16.msra.mxu0 0
        %973 = vmatprep.subr.bf16.mxu0 0
        %974 = vmatpush1.bf16.msra.mxu0 0
        %975 = vmatprep.subr.bf16.mxu0 0
        %976 = vmatpush1.bf16.msra.mxu0 0
        %977 = vmatprep.subr.bf16.mxu0 0
        %978 = vmatpush1.bf16.msra.mxu0 0
        %979 = vmatprep.subr.bf16.mxu0 0
        %980 = vmatpush1.bf16.msra.mxu0 0
        %981 = vmatprep.subr.bf16.mxu0 0
        %982 = vmatpush1.bf16.msra.mxu0 0
        %983 = vmatprep.mubr.bf16.mxu0 0
        %984 = vmatmul.mubr.bf16.gmra.mrb[0].mxu0 %v949
        %v985 = vpop.f32.mrb[0].mxu0
        %v986 = vadd.f32 %v934, %v985
        %v987 = vpop.f32.mrb[0].mxu0
        %v988 = vpop.f32.mrb[0].mxu0
        %v989 = vpop.f32.mrb[0].mxu0
        %990 = vdwg.mxu0
        %v991 = vpack.c.bf16 %v923, %v923
        %v993 = vsel %vm866, %v991, 0
        %995 = vmatprep.subr.bf16.mxu0 0
        %996 = vmatpush1.bf16.msra.mxu0 %v944
        %997 = vmatprep.subr.bf16.mxu0 0
        %998 = vmatpush1.bf16.msra.mxu0 %v945
        %999 = vmatprep.subr.bf16.mxu0 0
        %1000 = vmatpush1.bf16.msra.mxu0 0
        %1001 = vmatprep.subr.bf16.mxu0 0
        %1002 = vmatpush1.bf16.msra.mxu0 0
        %1003 = vmatprep.subr.bf16.mxu0 0
        %1004 = vmatpush1.bf16.msra.mxu0 0
        %1005 = vmatprep.subr.bf16.mxu0 0
        %1006 = vmatpush1.bf16.msra.mxu0 0
        %1007 = vmatprep.subr.bf16.mxu0 0
        %1008 = vmatpush1.bf16.msra.mxu0 0
        %1009 = vmatprep.subr.bf16.mxu0 0
        %1010 = vmatpush1.bf16.msra.mxu0 0
        %1011 = vmatprep.subr.bf16.mxu0 0
        %1012 = vmatpush1.bf16.msra.mxu0 0
        %1013 = vmatprep.subr.bf16.mxu0 0
        %1014 = vmatpush1.bf16.msra.mxu0 0
        %1015 = vmatprep.subr.bf16.mxu0 0
        %1016 = vmatpush1.bf16.msra.mxu0 0
        %1017 = vmatprep.subr.bf16.mxu0 0
        %1018 = vmatpush1.bf16.msra.mxu0 0
        %1019 = vmatprep.subr.bf16.mxu0 0
        %1020 = vmatpush1.bf16.msra.mxu0 0
        %1021 = vmatprep.subr.bf16.mxu0 0
        %1022 = vmatpush1.bf16.msra.mxu0 0
        %1023 = vmatprep.subr.bf16.mxu0 0
        %1024 = vmatpush1.bf16.msra.mxu0 0
        %1025 = vmatprep.subr.bf16.mxu0 0
        %1026 = vmatpush1.bf16.msra.mxu0 0
        %1027 = vmatprep.mubr.bf16.mxu0 0
        %1028 = vmatmul.mubr.bf16.gmra.mrb[0].mxu0 %v993
        %v1029 = vpop.f32.mrb[0].mxu0
        %v1030 = vadd.f32 %v934, %v1029
        %v1031 = vpop.f32.mrb[0].mxu0
        %v1032 = vpop.f32.mrb[0].mxu0
        %v1033 = vpop.f32.mrb[0].mxu0
        %1034 = vdwg.mxu0
        %v1035 = vsub.f32 %v1030, %v986
        %1037 = vrot.lane.b32.xlu0 %v1035, 96
        %v1038 = vpop.permute.xlu0 %1037
        %v1040 = vmul.f32 %v986, %v1038
        %v1041 = vpack.c.bf16 %v1040, %v1040
        %1043 = vset.pattern.permute.xlu0 1
        %1044 = vperm.xlu0 %1043, %v859
        %v1045 = vpop.permute.xlu0 %1044
        %v1051 = vunpack.c.l.b16 %v851
        %v1052 = vunpack.c.l.b16 %v852
        %v1053 = vunpack.c.l.b16 %v853
        %v1054 = vunpack.c.l.b16 %v854
        %v1055 = vpack.c.b16 %v1052, %v1051
        %v1056 = vpack.c.b16 %v1054, %v1053
        %v1060 = vsel %vm866, %v1041, 0
        %1062 = vmatprep.subr.bf16.mxu0 0
        %1063 = vmatpush1.bf16.msra.mxu0 %v1055
        %1064 = vmatprep.subr.bf16.mxu0 0
        %1065 = vmatpush1.bf16.msra.mxu0 %v1056
        %1066 = vmatprep.subr.bf16.mxu0 0
        %1067 = vmatpush1.bf16.msra.mxu0 0
        %1068 = vmatprep.subr.bf16.mxu0 0
        %1069 = vmatpush1.bf16.msra.mxu0 0
        %1070 = vmatprep.subr.bf16.mxu0 0
        %1071 = vmatpush1.bf16.msra.mxu0 0
        %1072 = vmatprep.subr.bf16.mxu0 0
        %1073 = vmatpush1.bf16.msra.mxu0 0
        %1074 = vmatprep.subr.bf16.mxu0 0
        %1075 = vmatpush1.bf16.msra.mxu0 0
        %1076 = vmatprep.subr.bf16.mxu0 0
        %1077 = vmatpush1.bf16.msra.mxu0 0
        %1078 = vmatprep.subr.bf16.mxu0 0
        %1079 = vmatpush1.bf16.msra.mxu0 0
        %1080 = vmatprep.subr.bf16.mxu0 0
        %1081 = vmatpush1.bf16.msra.mxu0 0
        %1082 = vmatprep.subr.bf16.mxu0 0
        %1083 = vmatpush1.bf16.msra.mxu0 0
        %1084 = vmatprep.subr.bf16.mxu0 0
        %1085 = vmatpush1.bf16.msra.mxu0 0
        %1086 = vmatprep.subr.bf16.mxu0 0
        %1087 = vmatpush1.bf16.msra.mxu0 0
        %1088 = vmatprep.subr.bf16.mxu0 0
        %1089 = vmatpush1.bf16.msra.mxu0 0
        %1090 = vmatprep.subr.bf16.mxu0 0
        %1091 = vmatpush1.bf16.msra.mxu0 0
        %1092 = vmatprep.subr.bf16.mxu0 0
        %1093 = vmatpush1.bf16.msra.mxu0 0
        %1094 = vmatprep.mubr.bf16.mxu0 0
        %1095 = vmatmul.mubr.bf16.gmra.mrb[0].mxu0 %v1060
        %v1096 = vpop.f32.mrb[0].mxu0
        %v1097 = vadd.f32 %v1045, %v1096
        %v1098 = vpop.f32.mrb[0].mxu0
        %v1099 = vpop.f32.mrb[0].mxu0
        %v1100 = vpop.f32.mrb[0].mxu0
        %1101 = vdwg.mxu0
        %v1102 = vsub.f32 %v986, %v1030
        %1104 = vrot.lane.b32.xlu0 %v1102, 96
        %v1105 = vpop.permute.xlu0 %1104
        %v1107 = vmul.f32 %v1030, %v1105
        %v1108 = vpack.c.bf16 %v1107, %v1107
        %1110 = vset.pattern.permute.xlu0 0
        %1111 = vperm.xlu0 %1110, %v863
        %v1112 = vpop.permute.xlu0 %1111
        %v1115 = vsel %vm866, %v1108, 0
        %1117 = vmatprep.subr.bf16.mxu0 0
        %1118 = vmatpush1.bf16.msra.mxu0 %v1055
        %1119 = vmatprep.subr.bf16.mxu0 0
        %1120 = vmatpush1.bf16.msra.mxu0 %v1056
        %1121 = vmatprep.subr.bf16.mxu0 0
        %1122 = vmatpush1.bf16.msra.mxu0 0
        %1123 = vmatprep.subr.bf16.mxu0 0
        %1124 = vmatpush1.bf16.msra.mxu0 0
        %1125 = vmatprep.subr.bf16.mxu0 0
        %1126 = vmatpush1.bf16.msra.mxu0 0
        %1127 = vmatprep.subr.bf16.mxu0 0
        %1128 = vmatpush1.bf16.msra.mxu0 0
        %1129 = vmatprep.subr.bf16.mxu0 0
        %1130 = vmatpush1.bf16.msra.mxu0 0
        %1131 = vmatprep.subr.bf16.mxu0 0
        %1132 = vmatpush1.bf16.msra.mxu0 0
        %1133 = vmatprep.subr.bf16.mxu0 0
        %1134 = vmatpush1.bf16.msra.mxu0 0
        %1135 = vmatprep.subr.bf16.mxu0 0
        %1136 = vmatpush1.bf16.msra.mxu0 0
        %1137 = vmatprep.subr.bf16.mxu0 0
        %1138 = vmatpush1.bf16.msra.mxu0 0
        %1139 = vmatprep.subr.bf16.mxu0 0
        %1140 = vmatpush1.bf16.msra.mxu0 0
        %1141 = vmatprep.subr.bf16.mxu0 0
        %1142 = vmatpush1.bf16.msra.mxu0 0
        %1143 = vmatprep.subr.bf16.mxu0 0
        %1144 = vmatpush1.bf16.msra.mxu0 0
        %1145 = vmatprep.subr.bf16.mxu0 0
        %1146 = vmatpush1.bf16.msra.mxu0 0
        %1147 = vmatprep.subr.bf16.mxu0 0
        %1148 = vmatpush1.bf16.msra.mxu0 0
        %1149 = vmatprep.mubr.bf16.mxu0 0
        %1150 = vmatmul.mubr.bf16.gmra.mrb[0].mxu0 %v1115
        %v1151 = vpop.f32.mrb[0].mxu0
        %v1152 = vadd.f32 %v1112, %v1151
        %v1153 = vpop.f32.mrb[0].mxu0
        %v1154 = vpop.f32.mrb[0].mxu0
        %v1155 = vpop.f32.mrb[0].mxu0
        %1156 = vdwg.mxu0
        %v1157 = vsub.f32 0.0, %v1097
        %v1158 = vmul.f32 %v1157, 1.442695
        %v1159 = vpow.pop %v1158
        %v1160 = vadd.f32 %v1159, 1.0
        %v1161 = vrcp.pop %v1160
        %v1162 = vmul.f32 1.0, %v1161
        %v1163 = vsub.f32 0.0, %v1152
        %v1164 = vmul.f32 %v1163, 1.442695
        %v1165 = vpow.pop %v1164
        %v1166 = vadd.f32 %v1165, 1.0
        %v1167 = vrcp.pop %v1166
        %v1168 = vmul.f32 1.0, %v1167
        %1169 = vrot.lane.b32.xlu0 %v1035, 64
        %v1170 = vpop.permute.xlu0 %1169
        %v1172 = vmul.f32 %v1162, %v1170
        %1174 = vrot.lane.b32.xlu0 %v1172, 64
        %v1175 = vpop.permute.xlu0 %1174
        %v1177 = vadd.f32 %v986, %v1175
        %1178 = vrot.lane.b32.xlu0 %v1102, 64
        %v1179 = vpop.permute.xlu0 %1178
        %v1181 = vmul.f32 %v1168, %v1179
        %1183 = vrot.lane.b32.xlu0 %v1181, 64
        %v1184 = vpop.permute.xlu0 %1183
        %v1186 = vadd.f32 %v1030, %v1184
        %v1187 = vld [vmem:[%s7] sm:$0xf]
        %v1188 = vld [vmem:[%s7 + $0x4] sm:$0xf]
        %v1189 = vld [vmem:[%s7 + $0x8] sm:$0xf]
        %v1190 = vld [vmem:[%s7 + $0xc] sm:$0xf]
        %v1191 = vld [vmem:[#allocation12] sm:$0x1]
        %v1192 = vpack.c.bf16 %v1177, %v1177
        %1194 = vrot.lane.b32.xlu0 %v1192, 64
        %v1195 = vpop.permute.xlu0 %1194
        %v1200 = vunpack.c.l.b16 %v1187
        %v1201 = vunpack.c.l.b16 %v1188
        %v1202 = vunpack.c.l.b16 %v1189
        %v1203 = vunpack.c.l.b16 %v1190
        %v1204 = vpack.c.b16 %v1201, %v1200
        %v1205 = vpack.c.b16 %v1203, %v1202
        %v1209 = vsel %vm866, %v1195, 0
        %1211 = vmatprep.subr.bf16.mxu0 0
        %1212 = vmatpush1.bf16.msra.mxu0 %v1204
        %1213 = vmatprep.subr.bf16.mxu0 0
        %1214 = vmatpush1.bf16.msra.mxu0 %v1205
        %1215 = vmatprep.subr.bf16.mxu0 0
        %1216 = vmatpush1.bf16.msra.mxu0 0
        %1217 = vmatprep.subr.bf16.mxu0 0
        %1218 = vmatpush1.bf16.msra.mxu0 0
        %1219 = vmatprep.subr.bf16.mxu0 0
        %1220 = vmatpush1.bf16.msra.mxu0 0
        %1221 = vmatprep.subr.bf16.mxu0 0
        %1222 = vmatpush1.bf16.msra.mxu0 0
        %1223 = vmatprep.subr.bf16.mxu0 0
        %1224 = vmatpush1.bf16.msra.mxu0 0
        %1225 = vmatprep.subr.bf16.mxu0 0
        %1226 = vmatpush1.bf16.msra.mxu0 0
        %1227 = vmatprep.subr.bf16.mxu0 0
        %1228 = vmatpush1.bf16.msra.mxu0 0
        %1229 = vmatprep.subr.bf16.mxu0 0
        %1230 = vmatpush1.bf16.msra.mxu0 0
        %1231 = vmatprep.subr.bf16.mxu0 0
        %1232 = vmatpush1.bf16.msra.mxu0 0
        %1233 = vmatprep.subr.bf16.mxu0 0
        %1234 = vmatpush1.bf16.msra.mxu0 0
        %1235 = vmatprep.subr.bf16.mxu0 0
        %1236 = vmatpush1.bf16.msra.mxu0 0
        %1237 = vmatprep.subr.bf16.mxu0 0
        %1238 = vmatpush1.bf16.msra.mxu0 0
        %1239 = vmatprep.subr.bf16.mxu0 0
        %1240 = vmatpush1.bf16.msra.mxu0 0
        %1241 = vmatprep.subr.bf16.mxu0 0
        %1242 = vmatpush1.bf16.msra.mxu0 0
        %1243 = vmatprep.mubr.bf16.mxu0 0
        %1244 = vmatmul.mubr.bf16.gmra.mrb[0].mxu0 %v1209
        %v1245 = vpop.f32.mrb[0].mxu0
        %v1246 = vadd.f32 0.0, %v1245
        %v1247 = vpop.f32.mrb[0].mxu0
        %v1248 = vpop.f32.mrb[0].mxu0
        %v1249 = vpop.f32.mrb[0].mxu0
        %1250 = vdwg.mxu0
        %v1251 = vadd.f32 %v847, %v1246
        %v1253 = vlaneseq
        %v1254 = vshrl.u32 %v1253, 7
        %v1255 = vsub.s32 0, %v1254
        %v1256 = vrot.slane %v1191, %v1255
        %v1258 = vadd.f32 %v1251, %v1256
        %v1259 = vpack.c.bf16 %v1186, %v1186
        %1261 = vrot.lane.b32.xlu0 %v1259, 64
        %v1262 = vpop.permute.xlu0 %1261
        %v1264 = vsel %vm866, %v1262, 0
        %1266 = vmatprep.subr.bf16.mxu0 0
        %1267 = vmatpush1.bf16.msra.mxu0 %v1204
        %1268 = vmatprep.subr.bf16.mxu0 0
        %1269 = vmatpush1.bf16.msra.mxu0 %v1205
        %1270 = vmatprep.subr.bf16.mxu0 0
        %1271 = vmatpush1.bf16.msra.mxu0 0
        %1272 = vmatprep.subr.bf16.mxu0 0
        %1273 = vmatpush1.bf16.msra.mxu0 0
        %1274 = vmatprep.subr.bf16.mxu0 0
        %1275 = vmatpush1.bf16.msra.mxu0 0
        %1276 = vmatprep.subr.bf16.mxu0 0
        %1277 = vmatpush1.bf16.msra.mxu0 0
        %1278 = vmatprep.subr.bf16.mxu0 0
        %1279 = vmatpush1.bf16.msra.mxu0 0
        %1280 = vmatprep.subr.bf16.mxu0 0
        %1281 = vmatpush1.bf16.msra.mxu0 0
        %1282 = vmatprep.subr.bf16.mxu0 0
        %1283 = vmatpush1.bf16.msra.mxu0 0
        %1284 = vmatprep.subr.bf16.mxu0 0
        %1285 = vmatpush1.bf16.msra.mxu0 0
        %1286 = vmatprep.subr.bf16.mxu0 0
        %1287 = vmatpush1.bf16.msra.mxu0 0
        %1288 = vmatprep.subr.bf16.mxu0 0
        %1289 = vmatpush1.bf16.msra.mxu0 0
        %1290 = vmatprep.subr.bf16.mxu0 0
        %1291 = vmatpush1.bf16.msra.mxu0 0
        %1292 = vmatprep.subr.bf16.mxu0 0
        %1293 = vmatpush1.bf16.msra.mxu0 0
        %1294 = vmatprep.subr.bf16.mxu0 0
        %1295 = vmatpush1.bf16.msra.mxu0 0
        %1296 = vmatprep.subr.bf16.mxu0 0
        %1297 = vmatpush1.bf16.msra.mxu0 0
        %1298 = vmatprep.mubr.bf16.mxu0 0
        %1299 = vmatmul.mubr.bf16.gmra.mrb[0].mxu0 %v1264
        %v1300 = vpop.f32.mrb[0].mxu0
        %v1301 = vadd.f32 0.0, %v1300
        %v1302 = vpop.f32.mrb[0].mxu0
        %v1303 = vpop.f32.mrb[0].mxu0
        %v1304 = vpop.f32.mrb[0].mxu0
        %1305 = vdwg.mxu0
        %v1306 = vadd.f32 %v848, %v1301
        %v1307 = vadd.f32 %v1306, %v1256
        %s1308 = scalar_lea.vmem [#allocation19], 1
        %v1309 = vld [vmem:[%s1308] sm:$0x1]
        %s1310 = scalar_lea.vmem [#allocation21], 1
        %v1311 = vld [vmem:[%s1310] sm:$0x1]
        %v1312 = vsel %vm866, %v1258, 0.0
        %1313 = vadd.xlane.f32.xlu0 %v1312
        %v1314 = vpop.xlane.xlu0 %1313
        %v1315 = vmul.f32 %v1314, %v870
        %v1316 = vsub.f32 %v1258, %v1315
        %v1317 = vmul.f32 %v1316, %v1316
        %v1318 = vsel %vm866, %v1317, 0.0
        %1319 = vadd.xlane.f32.xlu0 %v1318
        %v1320 = vpop.xlane.xlu0 %1319
        %v1321 = vmul.f32 %v1320, 0.032258064
        %v1322 = vrsqrt.pop %v1321
        %v1323 = vmul.f32 %v1321, %v1322
        %vm1324 = vcmp.eq.f32.partialorder %v1321, inf
        %v1325 = vsel %vm1324, %v1321, %v1323
        %vm1326 = vcmp.eq.f32.partialorder %v1321, 0.0
        %v1327 = vand.u32 %v1321, 2147483648
        %v1328 = vsel %vm1326, %v1327, %v1325
        %v1329 = vadd.f32 %v1328, 1e-06
        %v1330 = vrcp.pop %v1329
        %v1332 = vlaneseq
        %v1333 = vshrl.u32 %v1332, 7
        %v1334 = vsub.s32 0, %v1333
        %v1335 = vrot.slane %v1309, %v1334
        %v1337 = vmul.f32 %v1335, %v1316
        %v1338 = vmul.f32 %v1337, %v1330
        %v1340 = vlaneseq
        %v1341 = vshrl.u32 %v1340, 7
        %v1342 = vsub.s32 0, %v1341
        %v1343 = vrot.slane %v1311, %v1342
        %v1345 = vadd.f32 %v1338, %v1343
        %v1346 = vsel %vm866, %v1307, 0.0
        %1347 = vadd.xlane.f32.xlu0 %v1346
        %v1348 = vpop.xlane.xlu0 %1347
        %v1349 = vmul.f32 %v1348, %v870
        %v1350 = vsub.f32 %v1307, %v1349
        %v1351 = vmul.f32 %v1350, %v1350
        %v1352 = vsel %vm866, %v1351, 0.0
        %1353 = vadd.xlane.f32.xlu0 %v1352
        %v1354 = vpop.xlane.xlu0 %1353
        %v1355 = vmul.f32 %v1354, 0.032258064
        %v1356 = vrsqrt.pop %v1355
        %v1357 = vmul.f32 %v1355, %v1356
        %vm1358 = vcmp.eq.f32.partialorder %v1355, inf
        %v1359 = vsel %vm1358, %v1355, %v1357
        %vm1360 = vcmp.eq.f32.partialorder %v1355, 0.0
        %v1361 = vand.u32 %v1355, 2147483648
        %v1362 = vsel %vm1360, %v1361, %v1359
        %v1363 = vadd.f32 %v1362, 1e-06
        %v1364 = vrcp.pop %v1363
        %v1365 = vmul.f32 %v1335, %v1350
        %v1366 = vmul.f32 %v1365, %v1364
        %v1367 = vadd.f32 %v1366, %v1343
        %v1368 = vld [vmem:[%s11] sm:$0xf]
        %v1369 = vld [vmem:[%s11 + $0x4] sm:$0xf]
        %v1370 = vld [vmem:[%s11 + $0x8] sm:$0xf]
        %v1371 = vld [vmem:[%s11 + $0xc] sm:$0xf]
        %v1372 = vpack.c.bf16 %v1345, %v1345
        %v1373 = vld [vmem:[#allocation16] sm:$0x1]
        %v1375 = vlaneseq
        %v1376 = vshrl.u32 %v1375, 7
        %v1377 = vsub.s32 0, %v1376
        %v1378 = vrot.slane %v1373, %v1377
        %v1384 = vunpack.c.l.b16 %v1368
        %v1385 = vunpack.c.l.b16 %v1369
        %v1386 = vunpack.c.l.b16 %v1370
        %v1387 = vunpack.c.l.b16 %v1371
        %v1388 = vpack.c.b16 %v1385, %v1384
        %v1389 = vpack.c.b16 %v1387, %v1386
        %v1393 = vsel %vm866, %v1372, 0
        %1395 = vmatprep.subr.bf16.mxu0 0
        %1396 = vmatpush1.bf16.msra.mxu0 %v1388
        %1397 = vmatprep.subr.bf16.mxu0 0
        %1398 = vmatpush1.bf16.msra.mxu0 %v1389
        %1399 = vmatprep.subr.bf16.mxu0 0
        %1400 = vmatpush1.bf16.msra.mxu0 0
        %1401 = vmatprep.subr.bf16.mxu0 0
        %1402 = vmatpush1.bf16.msra.mxu0 0
        %1403 = vmatprep.subr.bf16.mxu0 0
        %1404 = vmatpush1.bf16.msra.mxu0 0
        %1405 = vmatprep.subr.bf16.mxu0 0
        %1406 = vmatpush1.bf16.msra.mxu0 0
        %1407 = vmatprep.subr.bf16.mxu0 0
        %1408 = vmatpush1.bf16.msra.mxu0 0
        %1409 = vmatprep.subr.bf16.mxu0 0
        %1410 = vmatpush1.bf16.msra.mxu0 0
        %1411 = vmatprep.subr.bf16.mxu0 0
        %1412 = vmatpush1.bf16.msra.mxu0 0
        %1413 = vmatprep.subr.bf16.mxu0 0
        %1414 = vmatpush1.bf16.msra.mxu0 0
        %1415 = vmatprep.subr.bf16.mxu0 0
        %1416 = vmatpush1.bf16.msra.mxu0 0
        %1417 = vmatprep.subr.bf16.mxu0 0
        %1418 = vmatpush1.bf16.msra.mxu0 0
        %1419 = vmatprep.subr.bf16.mxu0 0
        %1420 = vmatpush1.bf16.msra.mxu0 0
        %1421 = vmatprep.subr.bf16.mxu0 0
        %1422 = vmatpush1.bf16.msra.mxu0 0
        %1423 = vmatprep.subr.bf16.mxu0 0
        %1424 = vmatpush1.bf16.msra.mxu0 0
        %1425 = vmatprep.subr.bf16.mxu0 0
        %1426 = vmatpush1.bf16.msra.mxu0 0
        %1427 = vmatprep.mubr.bf16.mxu0 0
        %1428 = vmatmul.mubr.bf16.gmra.mrb[0].mxu0 %v1393
        %v1429 = vpop.f32.mrb[0].mxu0
        %v1430 = vadd.f32 %v1378, %v1429
        %v1431 = vpop.f32.mrb[0].mxu0
        %v1432 = vpop.f32.mrb[0].mxu0
        %v1433 = vpop.f32.mrb[0].mxu0
        %1434 = vdwg.mxu0
        %v1435 = vmax.f32 %v1430, 0.0
        %v1436 = vld [vmem:[%s13] sm:$0xf]
        %v1437 = vld [vmem:[%s13 + $0x4] sm:$0xf]
        %v1438 = vld [vmem:[%s13 + $0x8] sm:$0xf]
        %v1439 = vld [vmem:[%s13 + $0xc] sm:$0xf]
        %v1440 = vld [vmem:[%s13 + $0x10] sm:$0xf]
        %v1441 = vld [vmem:[%s13 + $0x14] sm:$0xf]
        %v1442 = vld [vmem:[%s13 + $0x18] sm:$0xf]
        %v1443 = vld [vmem:[%s13 + $0x1c] sm:$0xf]
        %v1444 = vpack.c.bf16 %v1435, %v1435
        %v1445 = vld [vmem:[#allocation18] sm:$0x1]
        %v1447 = vlaneseq
        %v1448 = vshrl.u32 %v1447, 7
        %v1449 = vsub.s32 0, %v1448
        %v1450 = vrot.slane %v1445, %v1449
        %v1460 = vunpack.c.l.b16 %v1436
        %v1461 = vunpack.c.l.b16 %v1437
        %v1462 = vunpack.c.l.b16 %v1438
        %v1463 = vunpack.c.l.b16 %v1439
        %v1464 = vunpack.c.l.b16 %v1440
        %v1465 = vunpack.c.l.b16 %v1441
        %v1466 = vunpack.c.l.b16 %v1442
        %v1467 = vunpack.c.l.b16 %v1443
        %v1468 = vpack.c.b16 %v1461, %v1460
        %v1469 = vpack.c.b16 %v1463, %v1462
        %v1470 = vpack.c.b16 %v1465, %v1464
        %v1471 = vpack.c.b16 %v1467, %v1466
        %vm1476 = vcmask 523264
        %v1478 = vsel %vm1476, %v1444, 0
        %1480 = vmatprep.subr.bf16.mxu0 0
        %1481 = vmatpush1.bf16.msra.mxu0 %v1468
        %1482 = vmatprep.subr.bf16.mxu0 0
        %1483 = vmatpush1.bf16.msra.mxu0 %v1469
        %1484 = vmatprep.subr.bf16.mxu0 0
        %1485 = vmatpush1.bf16.msra.mxu0 %v1470
        %1486 = vmatprep.subr.bf16.mxu0 0
        %1487 = vmatpush1.bf16.msra.mxu0 %v1471
        %1488 = vmatprep.subr.bf16.mxu0 0
        %1489 = vmatpush1.bf16.msra.mxu0 0
        %1490 = vmatprep.subr.bf16.mxu0 0
        %1491 = vmatpush1.bf16.msra.mxu0 0
        %1492 = vmatprep.subr.bf16.mxu0 0
        %1493 = vmatpush1.bf16.msra.mxu0 0
        %1494 = vmatprep.subr.bf16.mxu0 0
        %1495 = vmatpush1.bf16.msra.mxu0 0
        %1496 = vmatprep.subr.bf16.mxu0 0
        %1497 = vmatpush1.bf16.msra.mxu0 0
        %1498 = vmatprep.subr.bf16.mxu0 0
        %1499 = vmatpush1.bf16.msra.mxu0 0
        %1500 = vmatprep.subr.bf16.mxu0 0
        %1501 = vmatpush1.bf16.msra.mxu0 0
        %1502 = vmatprep.subr.bf16.mxu0 0
        %1503 = vmatpush1.bf16.msra.mxu0 0
        %1504 = vmatprep.subr.bf16.mxu0 0
        %1505 = vmatpush1.bf16.msra.mxu0 0
        %1506 = vmatprep.subr.bf16.mxu0 0
        %1507 = vmatpush1.bf16.msra.mxu0 0
        %1508 = vmatprep.subr.bf16.mxu0 0
        %1509 = vmatpush1.bf16.msra.mxu0 0
        %1510 = vmatprep.subr.bf16.mxu0 0
        %1511 = vmatpush1.bf16.msra.mxu0 0
        %1512 = vmatprep.mubr.bf16.mxu0 0
        %1513 = vmatmul.mubr.bf16.gmra.mrb[0].mxu0 %v1478
        %v1514 = vpop.f32.mrb[0].mxu0
        %v1515 = vadd.f32 %v1450, %v1514
        %v1516 = vpop.f32.mrb[0].mxu0
        %v1517 = vpop.f32.mrb[0].mxu0
        %v1518 = vpop.f32.mrb[0].mxu0
        %1519 = vdwg.mxu0
        %v1520 = vadd.f32 %v1258, %v1515
        %v1521 = vpack.c.bf16 %v1367, %v1367
        %v1523 = vsel %vm866, %v1521, 0
        %1525 = vmatprep.subr.bf16.mxu0 0
        %1526 = vmatpush1.bf16.msra.mxu0 %v1388
        %1527 = vmatprep.subr.bf16.mxu0 0
        %1528 = vmatpush1.bf16.msra.mxu0 %v1389
        %1529 = vmatprep.subr.bf16.mxu0 0
        %1530 = vmatpush1.bf16.msra.mxu0 0
        %1531 = vmatprep.subr.bf16.mxu0 0
        %1532 = vmatpush1.bf16.msra.mxu0 0
        %1533 = vmatprep.subr.bf16.mxu0 0
        %1534 = vmatpush1.bf16.msra.mxu0 0
        %1535 = vmatprep.subr.bf16.mxu0 0
        %1536 = vmatpush1.bf16.msra.mxu0 0
        %1537 = vmatprep.subr.bf16.mxu0 0
        %1538 = vmatpush1.bf16.msra.mxu0 0
        %1539 = vmatprep.subr.bf16.mxu0 0
        %1540 = vmatpush1.bf16.msra.mxu0 0
        %1541 = vmatprep.subr.bf16.mxu0 0
        %1542 = vmatpush1.bf16.msra.mxu0 0
        %1543 = vmatprep.subr.bf16.mxu0 0
        %1544 = vmatpush1.bf16.msra.mxu0 0
        %1545 = vmatprep.subr.bf16.mxu0 0
        %1546 = vmatpush1.bf16.msra.mxu0 0
        %1547 = vmatprep.subr.bf16.mxu0 0
        %1548 = vmatpush1.bf16.msra.mxu0 0
        %1549 = vmatprep.subr.bf16.mxu0 0
        %1550 = vmatpush1.bf16.msra.mxu0 0
        %1551 = vmatprep.subr.bf16.mxu0 0
        %1552 = vmatpush1.bf16.msra.mxu0 0
        %1553 = vmatprep.subr.bf16.mxu0 0
        %1554 = vmatpush1.bf16.msra.mxu0 0
        %1555 = vmatprep.subr.bf16.mxu0 0
        %1556 = vmatpush1.bf16.msra.mxu0 0
        %1557 = vmatprep.mubr.bf16.mxu0 0
        %1558 = vmatmul.mubr.bf16.gmra.mrb[0].mxu0 %v1523
        %v1559 = vpop.f32.mrb[0].mxu0
        %v1560 = vadd.f32 %v1378, %v1559
        %v1561 = vpop.f32.mrb[0].mxu0
        %v1562 = vpop.f32.mrb[0].mxu0
        %v1563 = vpop.f32.mrb[0].mxu0
        %1564 = vdwg.mxu0
        %v1565 = vmax.f32 %v1560, 0.0
        %v1566 = vpack.c.bf16 %v1565, %v1565
        %v1568 = vsel %vm1476, %v1566, 0
        %1570 = vmatprep.subr.bf16.mxu0 0
        %1571 = vmatpush1.bf16.msra.mxu0 %v1468
        %1572 = vmatprep.subr.bf16.mxu0 0
        %1573 = vmatpush1.bf16.msra.mxu0 %v1469
        %1574 = vmatprep.subr.bf16.mxu0 0
        %1575 = vmatpush1.bf16.msra.mxu0 %v1470
        %1576 = vmatprep.subr.bf16.mxu0 0
        %1577 = vmatpush1.bf16.msra.mxu0 %v1471
        %1578 = vmatprep.subr.bf16.mxu0 0
        %1579 = vmatpush1.bf16.msra.mxu0 0
        %1580 = vmatprep.subr.bf16.mxu0 0
        %1581 = vmatpush1.bf16.msra.mxu0 0
        %1582 = vmatprep.subr.bf16.mxu0 0
        %1583 = vmatpush1.bf16.msra.mxu0 0
        %1584 = vmatprep.subr.bf16.mxu0 0
        %1585 = vmatpush1.bf16.msra.mxu0 0
        %1586 = vmatprep.subr.bf16.mxu0 0
        %1587 = vmatpush1.bf16.msra.mxu0 0
        %1588 = vmatprep.subr.bf16.mxu0 0
        %1589 = vmatpush1.bf16.msra.mxu0 0
        %1590 = vmatprep.subr.bf16.mxu0 0
        %1591 = vmatpush1.bf16.msra.mxu0 0
        %1592 = vmatprep.subr.bf16.mxu0 0
        %1593 = vmatpush1.bf16.msra.mxu0 0
        %1594 = vmatprep.subr.bf16.mxu0 0
        %1595 = vmatpush1.bf16.msra.mxu0 0
        %1596 = vmatprep.subr.bf16.mxu0 0
        %1597 = vmatpush1.bf16.msra.mxu0 0
        %1598 = vmatprep.subr.bf16.mxu0 0
        %1599 = vmatpush1.bf16.msra.mxu0 0
        %1600 = vmatprep.subr.bf16.mxu0 0
        %1601 = vmatpush1.bf16.msra.mxu0 0
        %1602 = vmatprep.mubr.bf16.mxu0 0
        %1603 = vmatmul.mubr.bf16.gmra.mrb[0].mxu0 %v1568
        %v1604 = vpop.f32.mrb[0].mxu0
        %v1605 = vadd.f32 %v1450, %v1604
        %v1606 = vpop.f32.mrb[0].mxu0
        %v1607 = vpop.f32.mrb[0].mxu0
        %v1608 = vpop.f32.mrb[0].mxu0
        %1609 = vdwg.mxu0
        %v1610 = vadd.f32 %v1307, %v1605
        %s1611 = scalar_lea.vmem [#allocation19], 2
        %v1612 = vld [vmem:[%s1611] sm:$0x1]
        %s1613 = scalar_lea.vmem [#allocation21], 2
        %v1614 = vld [vmem:[%s1613] sm:$0x1]
        %v1615 = vsel %vm866, %v1520, 0.0
        %1616 = vadd.xlane.f32.xlu0 %v1615
        %v1617 = vpop.xlane.xlu0 %1616
        %v1618 = vmul.f32 %v1617, %v870
        %v1619 = vsub.f32 %v1520, %v1618
        %v1620 = vmul.f32 %v1619, %v1619
        %v1621 = vsel %vm866, %v1620, 0.0
        %1622 = vadd.xlane.f32.xlu0 %v1621
        %v1623 = vpop.xlane.xlu0 %1622
        %v1624 = vmul.f32 %v1623, 0.032258064
        %v1625 = vrsqrt.pop %v1624
        %v1626 = vmul.f32 %v1624, %v1625
        %vm1627 = vcmp.eq.f32.partialorder %v1624, inf
        %v1628 = vsel %vm1627, %v1624, %v1626
        %vm1629 = vcmp.eq.f32.partialorder %v1624, 0.0
        %v1630 = vand.u32 %v1624, 2147483648
        %v1631 = vsel %vm1629, %v1630, %v1628
        %v1632 = vadd.f32 %v1631, 1e-06
        %v1633 = vrcp.pop %v1632
        %v1635 = vlaneseq
        %v1636 = vshrl.u32 %v1635, 7
        %v1637 = vsub.s32 0, %v1636
        %v1638 = vrot.slane %v1612, %v1637
        %v1640 = vmul.f32 %v1638, %v1619
        %v1641 = vmul.f32 %v1640, %v1633
        %v1643 = vlaneseq
        %v1644 = vshrl.u32 %v1643, 7
        %v1645 = vsub.s32 0, %v1644
        %v1646 = vrot.slane %v1614, %v1645
        %v1648 = vadd.f32 %v1641, %v1646
        %v1649 = vsel %vm866, %v1610, 0.0
        %1650 = vadd.xlane.f32.xlu0 %v1649
        %v1651 = vpop.xlane.xlu0 %1650
        %v1652 = vmul.f32 %v1651, %v870
        %v1653 = vsub.f32 %v1610, %v1652
        %v1654 = vmul.f32 %v1653, %v1653
        %v1655 = vsel %vm866, %v1654, 0.0
        %1656 = vadd.xlane.f32.xlu0 %v1655
        %v1657 = vpop.xlane.xlu0 %1656
        %v1658 = vmul.f32 %v1657, 0.032258064
        %v1659 = vrsqrt.pop %v1658
        %v1660 = vmul.f32 %v1658, %v1659
        %vm1661 = vcmp.eq.f32.partialorder %v1658, inf
        %v1662 = vsel %vm1661, %v1658, %v1660
        %vm1663 = vcmp.eq.f32.partialorder %v1658, 0.0
        %v1664 = vand.u32 %v1658, 2147483648
        %v1665 = vsel %vm1663, %v1664, %v1662
        %v1666 = vadd.f32 %v1665, 1e-06
        %v1667 = vrcp.pop %v1666
        %v1668 = vmul.f32 %v1638, %v1653
        %v1669 = vmul.f32 %v1668, %v1667
        %v1670 = vadd.f32 %v1669, %v1646
        %s1671 = scalar_lea.vmem [#allocation10], 16
        %v1672 = vld [vmem:[%s1671] sm:$0xf]
        %v1673 = vld [vmem:[%s1671 + $0x4] sm:$0xf]
        %v1674 = vld [vmem:[%s1671 + $0x8] sm:$0xf]
        %v1675 = vld [vmem:[%s1671 + $0xc] sm:$0xf]
        %v1676 = vpack.c.bf16 %v1648, %v1648
        %s1677 = scalar_lea.vmem %s6, 1
        %v1678 = vld [vmem:[%s1677] sm:$0x1]
        %v1680 = vlaneseq
        %v1681 = vshrl.u32 %v1680, 7
        %v1682 = vsub.s32 0, %v1681
        %v1683 = vrot.slane %v1678, %v1682
        %v1689 = vunpack.c.l.b16 %v1672
        %v1690 = vunpack.c.l.b16 %v1673
        %v1691 = vunpack.c.l.b16 %v1674
        %v1692 = vunpack.c.l.b16 %v1675
        %v1693 = vpack.c.b16 %v1690, %v1689
        %v1694 = vpack.c.b16 %v1692, %v1691
        %v1698 = vsel %vm866, %v1676, 0
        %1700 = vmatprep.subr.bf16.mxu0 0
        %1701 = vmatpush1.bf16.msra.mxu0 %v1693
        %1702 = vmatprep.subr.bf16.mxu0 0
        %1703 = vmatpush1.bf16.msra.mxu0 %v1694
        %1704 = vmatprep.subr.bf16.mxu0 0
        %1705 = vmatpush1.bf16.msra.mxu0 0
        %1706 = vmatprep.subr.bf16.mxu0 0
        %1707 = vmatpush1.bf16.msra.mxu0 0
        %1708 = vmatprep.subr.bf16.mxu0 0
        %1709 = vmatpush1.bf16.msra.mxu0 0
        %1710 = vmatprep.subr.bf16.mxu0 0
        %1711 = vmatpush1.bf16.msra.mxu0 0
        %1712 = vmatprep.subr.bf16.mxu0 0
        %1713 = vmatpush1.bf16.msra.mxu0 0
        %1714 = vmatprep.subr.bf16.mxu0 0
        %1715 = vmatpush1.bf16.msra.mxu0 0
        %1716 = vmatprep.subr.bf16.mxu0 0
        %1717 = vmatpush1.bf16.msra.mxu0 0
        %1718 = vmatprep.subr.bf16.mxu0 0
        %1719 = vmatpush1.bf16.msra.mxu0 0
        %1720 = vmatprep.subr.bf16.mxu0 0
        %1721 = vmatpush1.bf16.msra.mxu0 0
        %1722 = vmatprep.subr.bf16.mxu0 0
        %1723 = vmatpush1.bf16.msra.mxu0 0
        %1724 = vmatprep.subr.bf16.mxu0 0
        %1725 = vmatpush1.bf16.msra.mxu0 0
        %1726 = vmatprep.subr.bf16.mxu0 0
        %1727 = vmatpush1.bf16.msra.mxu0 0
        %1728 = vmatprep.subr.bf16.mxu0 0
        %1729 = vmatpush1.bf16.msra.mxu0 0
        %1730 = vmatprep.subr.bf16.mxu0 0
        %1731 = vmatpush1.bf16.msra.mxu0 0
        %1732 = vmatprep.mubr.bf16.mxu0 0
        %1733 = vmatmul.mubr.bf16.gmra.mrb[0].mxu0 %v1698
        %v1734 = vpop.f32.mrb[0].mxu0
        %v1735 = vadd.f32 %v1683, %v1734
        %v1736 = vpop.f32.mrb[0].mxu0
        %v1737 = vpop.f32.mrb[0].mxu0
        %v1738 = vpop.f32.mrb[0].mxu0
        %1739 = vdwg.mxu0
        %v1740 = vpack.c.bf16 %v1670, %v1670
        %v1742 = vsel %vm866, %v1740, 0
        %1744 = vmatprep.subr.bf16.mxu0 0
        %1745 = vmatpush1.bf16.msra.mxu0 %v1693
        %1746 = vmatprep.subr.bf16.mxu0 0
        %1747 = vmatpush1.bf16.msra.mxu0 %v1694
        %1748 = vmatprep.subr.bf16.mxu0 0
        %1749 = vmatpush1.bf16.msra.mxu0 0
        %1750 = vmatprep.subr.bf16.mxu0 0
        %1751 = vmatpush1.bf16.msra.mxu0 0
        %1752 = vmatprep.subr.bf16.mxu0 0
        %1753 = vmatpush1.bf16.msra.mxu0 0
        %1754 = vmatprep.subr.bf16.mxu0 0
        %1755 = vmatpush1.bf16.msra.mxu0 0
        %1756 = vmatprep.subr.bf16.mxu0 0
        %1757 = vmatpush1.bf16.msra.mxu0 0
        %1758 = vmatprep.subr.bf16.mxu0 0
        %1759 = vmatpush1.bf16.msra.mxu0 0
        %1760 = vmatprep.subr.bf16.mxu0 0
        %1761 = vmatpush1.bf16.msra.mxu0 0
        %1762 = vmatprep.subr.bf16.mxu0 0
        %1763 = vmatpush1.bf16.msra.mxu0 0
        %1764 = vmatprep.subr.bf16.mxu0 0
        %1765 = vmatpush1.bf16.msra.mxu0 0
        %1766 = vmatprep.subr.bf16.mxu0 0
        %1767 = vmatpush1.bf16.msra.mxu0 0
        %1768 = vmatprep.subr.bf16.mxu0 0
        %1769 = vmatpush1.bf16.msra.mxu0 0
        %1770 = vmatprep.subr.bf16.mxu0 0
        %1771 = vmatpush1.bf16.msra.mxu0 0
        %1772 = vmatprep.subr.bf16.mxu0 0
        %1773 = vmatpush1.bf16.msra.mxu0 0
        %1774 = vmatprep.subr.bf16.mxu0 0
        %1775 = vmatpush1.bf16.msra.mxu0 0
        %1776 = vmatprep.mubr.bf16.mxu0 0
        %1777 = vmatmul.mubr.bf16.gmra.mrb[0].mxu0 %v1742
        %v1778 = vpop.f32.mrb[0].mxu0
        %v1779 = vadd.f32 %v1683, %v1778
        %v1780 = vpop.f32.mrb[0].mxu0
        %v1781 = vpop.f32.mrb[0].mxu0
        %v1782 = vpop.f32.mrb[0].mxu0
        %1783 = vdwg.mxu0
        %v1784 = vsub.f32 %v1779, %v1735
        %1786 = vrot.lane.b32.xlu0 %v1784, 96
        %v1787 = vpop.permute.xlu0 %1786
        %v1789 = vmul.f32 %v1735, %v1787
        %v1790 = vpack.c.bf16 %v1789, %v1789
        %v1792 = vsel %vm866, %v1790, 0
        %1794 = vmatprep.subr.bf16.mxu0 0
        %1795 = vmatpush1.bf16.msra.mxu0 %v1055
        %1796 = vmatprep.subr.bf16.mxu0 0
        %1797 = vmatpush1.bf16.msra.mxu0 %v1056
        %1798 = vmatprep.subr.bf16.mxu0 0
        %1799 = vmatpush1.bf16.msra.mxu0 0
        %1800 = vmatprep.subr.bf16.mxu0 0
        %1801 = vmatpush1.bf16.msra.mxu0 0
        %1802 = vmatprep.subr.bf16.mxu0 0
        %1803 = vmatpush1.bf16.msra.mxu0 0
        %1804 = vmatprep.subr.bf16.mxu0 0
        %1805 = vmatpush1.bf16.msra.mxu0 0
        %1806 = vmatprep.subr.bf16.mxu0 0
        %1807 = vmatpush1.bf16.msra.mxu0 0
        %1808 = vmatprep.subr.bf16.mxu0 0
        %1809 = vmatpush1.bf16.msra.mxu0 0
        %1810 = vmatprep.subr.bf16.mxu0 0
        %1811 = vmatpush1.bf16.msra.mxu0 0
        %1812 = vmatprep.subr.bf16.mxu0 0
        %1813 = vmatpush1.bf16.msra.mxu0 0
        %1814 = vmatprep.subr.bf16.mxu0 0
        %1815 = vmatpush1.bf16.msra.mxu0 0
        %1816 = vmatprep.subr.bf16.mxu0 0
        %1817 = vmatpush1.bf16.msra.mxu0 0
        %1818 = vmatprep.subr.bf16.mxu0 0
        %1819 = vmatpush1.bf16.msra.mxu0 0
        %1820 = vmatprep.subr.bf16.mxu0 0
        %1821 = vmatpush1.bf16.msra.mxu0 0
        %1822 = vmatprep.subr.bf16.mxu0 0
        %1823 = vmatpush1.bf16.msra.mxu0 0
        %1824 = vmatprep.subr.bf16.mxu0 0
        %1825 = vmatpush1.bf16.msra.mxu0 0
        %1826 = vmatprep.mubr.bf16.mxu0 0
        %1827 = vmatmul.mubr.bf16.gmra.mrb[0].mxu0 %v1792
        %v1828 = vpop.f32.mrb[0].mxu0
        %v1829 = vadd.f32 %v1045, %v1828
        %v1830 = vpop.f32.mrb[0].mxu0
        %v1831 = vpop.f32.mrb[0].mxu0
        %v1832 = vpop.f32.mrb[0].mxu0
        %1833 = vdwg.mxu0
        %v1834 = vsub.f32 %v1735, %v1779
        %1836 = vrot.lane.b32.xlu0 %v1834, 96
        %v1837 = vpop.permute.xlu0 %1836
        %v1839 = vmul.f32 %v1779, %v1837
        %v1840 = vpack.c.bf16 %v1839, %v1839
        %v1842 = vsel %vm866, %v1840, 0
        %1844 = vmatprep.subr.bf16.mxu0 0
        %1845 = vmatpush1.bf16.msra.mxu0 %v1055
        %1846 = vmatprep.subr.bf16.mxu0 0
        %1847 = vmatpush1.bf16.msra.mxu0 %v1056
        %1848 = vmatprep.subr.bf16.mxu0 0
        %1849 = vmatpush1.bf16.msra.mxu0 0
        %1850 = vmatprep.subr.bf16.mxu0 0
        %1851 = vmatpush1.bf16.msra.mxu0 0
        %1852 = vmatprep.subr.bf16.mxu0 0
        %1853 = vmatpush1.bf16.msra.mxu0 0
        %1854 = vmatprep.subr.bf16.mxu0 0
        %1855 = vmatpush1.bf16.msra.mxu0 0
        %1856 = vmatprep.subr.bf16.mxu0 0
        %1857 = vmatpush1.bf16.msra.mxu0 0
        %1858 = vmatprep.subr.bf16.mxu0 0
        %1859 = vmatpush1.bf16.msra.mxu0 0
        %1860 = vmatprep.subr.bf16.mxu0 0
        %1861 = vmatpush1.bf16.msra.mxu0 0
        %1862 = vmatprep.subr.bf16.mxu0 0
        %1863 = vmatpush1.bf16.msra.mxu0 0
        %1864 = vmatprep.subr.bf16.mxu0 0
        %1865 = vmatpush1.bf16.msra.mxu0 0
        %1866 = vmatprep.subr.bf16.mxu0 0
        %1867 = vmatpush1.bf16.msra.mxu0 0
        %1868 = vmatprep.subr.bf16.mxu0 0
        %1869 = vmatpush1.bf16.msra.mxu0 0
        %1870 = vmatprep.subr.bf16.mxu0 0
        %1871 = vmatpush1.bf16.msra.mxu0 0
        %1872 = vmatprep.subr.bf16.mxu0 0
        %1873 = vmatpush1.bf16.msra.mxu0 0
        %1874 = vmatprep.subr.bf16.mxu0 0
        %1875 = vmatpush1.bf16.msra.mxu0 0
        %1876 = vmatprep.mubr.bf16.mxu0 0
        %1877 = vmatmul.mubr.bf16.gmra.mrb[0].mxu0 %v1842
        %v1878 = vpop.f32.mrb[0].mxu0
        %v1879 = vadd.f32 %v1112, %v1878
        %v1880 = vpop.f32.mrb[0].mxu0
        %v1881 = vpop.f32.mrb[0].mxu0
        %v1882 = vpop.f32.mrb[0].mxu0
        %1883 = vdwg.mxu0
        %v1884 = vsub.f32 0.0, %v1829
        %v1885 = vmul.f32 %v1884, 1.442695
        %v1886 = vpow.pop %v1885
        %v1887 = vadd.f32 %v1886, 1.0
        %v1888 = vrcp.pop %v1887
        %v1889 = vmul.f32 1.0, %v1888
        %v1890 = vsub.f32 0.0, %v1879
        %v1891 = vmul.f32 %v1890, 1.442695
        %v1892 = vpow.pop %v1891
        %v1893 = vadd.f32 %v1892, 1.0
        %v1894 = vrcp.pop %v1893
        %v1895 = vmul.f32 1.0, %v1894
        %1896 = vrot.lane.b32.xlu0 %v1784, 64
        %v1897 = vpop.permute.xlu0 %1896
        %v1899 = vmul.f32 %v1889, %v1897
        %1901 = vrot.lane.b32.xlu0 %v1899, 64
        %v1902 = vpop.permute.xlu0 %1901
        %v1904 = vadd.f32 %v1735, %v1902
        %1905 = vrot.lane.b32.xlu0 %v1834, 64
        %v1906 = vpop.permute.xlu0 %1905
        %v1908 = vmul.f32 %v1895, %v1906
        %1910 = vrot.lane.b32.xlu0 %v1908, 64
        %v1911 = vpop.permute.xlu0 %1910
        %v1913 = vadd.f32 %v1779, %v1911
        %s1914 = scalar_lea.vmem %s7, 16
        %v1915 = vld [vmem:[%s1914] sm:$0xf]
        %v1916 = vld [vmem:[%s1914 + $0x4] sm:$0xf]
        %v1917 = vld [vmem:[%s1914 + $0x8] sm:$0xf]
        %v1918 = vld [vmem:[%s1914 + $0xc] sm:$0xf]
        %s1919 = scalar_lea.vmem [#allocation12], 1
        %v1920 = vld [vmem:[%s1919] sm:$0x1]
        %v1921 = vpack.c.bf16 %v1904, %v1904
        %1923 = vrot.lane.b32.xlu0 %v1921, 64
        %v1924 = vpop.permute.xlu0 %1923
        %v1929 = vunpack.c.l.b16 %v1915
        %v1930 = vunpack.c.l.b16 %v1916
        %v1931 = vunpack.c.l.b16 %v1917
        %v1932 = vunpack.c.l.b16 %v1918
        %v1933 = vpack.c.b16 %v1930, %v1929
        %v1934 = vpack.c.b16 %v1932, %v1931
        %v1938 = vsel %vm866, %v1924, 0
        %1940 = vmatprep.subr.bf16.mxu0 0
        %1941 = vmatpush1.bf16.msra.mxu0 %v1933
        %1942 = vmatprep.subr.bf16.mxu0 0
        %1943 = vmatpush1.bf16.msra.mxu0 %v1934
        %1944 = vmatprep.subr.bf16.mxu0 0
        %1945 = vmatpush1.bf16.msra.mxu0 0
        %1946 = vmatprep.subr.bf16.mxu0 0
        %1947 = vmatpush1.bf16.msra.mxu0 0
        %1948 = vmatprep.subr.bf16.mxu0 0
        %1949 = vmatpush1.bf16.msra.mxu0 0
        %1950 = vmatprep.subr.bf16.mxu0 0
        %1951 = vmatpush1.bf16.msra.mxu0 0
        %1952 = vmatprep.subr.bf16.mxu0 0
        %1953 = vmatpush1.bf16.msra.mxu0 0
        %1954 = vmatprep.subr.bf16.mxu0 0
        %1955 = vmatpush1.bf16.msra.mxu0 0
        %1956 = vmatprep.subr.bf16.mxu0 0
        %1957 = vmatpush1.bf16.msra.mxu0 0
        %1958 = vmatprep.subr.bf16.mxu0 0
        %1959 = vmatpush1.bf16.msra.mxu0 0
        %1960 = vmatprep.subr.bf16.mxu0 0
        %1961 = vmatpush1.bf16.msra.mxu0 0
        %1962 = vmatprep.subr.bf16.mxu0 0
        %1963 = vmatpush1.bf16.msra.mxu0 0
        %1964 = vmatprep.subr.bf16.mxu0 0
        %1965 = vmatpush1.bf16.msra.mxu0 0
        %1966 = vmatprep.subr.bf16.mxu0 0
        %1967 = vmatpush1.bf16.msra.mxu0 0
        %1968 = vmatprep.subr.bf16.mxu0 0
        %1969 = vmatpush1.bf16.msra.mxu0 0
        %1970 = vmatprep.subr.bf16.mxu0 0
        %1971 = vmatpush1.bf16.msra.mxu0 0
        %1972 = vmatprep.mubr.bf16.mxu0 0
        %1973 = vmatmul.mubr.bf16.gmra.mrb[0].mxu0 %v1938
        %v1974 = vpop.f32.mrb[0].mxu0
        %v1975 = vadd.f32 0.0, %v1974
        %v1976 = vpop.f32.mrb[0].mxu0
        %v1977 = vpop.f32.mrb[0].mxu0
        %v1978 = vpop.f32.mrb[0].mxu0
        %1979 = vdwg.mxu0
        %v1980 = vadd.f32 %v1520, %v1975
        %v1982 = vlaneseq
        %v1983 = vshrl.u32 %v1982, 7
        %v1984 = vsub.s32 0, %v1983
        %v1985 = vrot.slane %v1920, %v1984
        %v1987 = vadd.f32 %v1980, %v1985
        %v1988 = vpack.c.bf16 %v1913, %v1913
        %1990 = vrot.lane.b32.xlu0 %v1988, 64
        %v1991 = vpop.permute.xlu0 %1990
        %v1993 = vsel %vm866, %v1991, 0
        %1995 = vmatprep.subr.bf16.mxu0 0
        %1996 = vmatpush1.bf16.msra.mxu0 %v1933
        %1997 = vmatprep.subr.bf16.mxu0 0
        %1998 = vmatpush1.bf16.msra.mxu0 %v1934
        %1999 = vmatprep.subr.bf16.mxu0 0
        %2000 = vmatpush1.bf16.msra.mxu0 0
        %2001 = vmatprep.subr.bf16.mxu0 0
        %2002 = vmatpush1.bf16.msra.mxu0 0
        %2003 = vmatprep.subr.bf16.mxu0 0
        %2004 = vmatpush1.bf16.msra.mxu0 0
        %2005 = vmatprep.subr.bf16.mxu0 0
        %2006 = vmatpush1.bf16.msra.mxu0 0
        %2007 = vmatprep.subr.bf16.mxu0 0
        %2008 = vmatpush1.bf16.msra.mxu0 0
        %2009 = vmatprep.subr.bf16.mxu0 0
        %2010 = vmatpush1.bf16.msra.mxu0 0
        %2011 = vmatprep.subr.bf16.mxu0 0
        %2012 = vmatpush1.bf16.msra.mxu0 0
        %2013 = vmatprep.subr.bf16.mxu0 0
        %2014 = vmatpush1.bf16.msra.mxu0 0
        %2015 = vmatprep.subr.bf16.mxu0 0
        %2016 = vmatpush1.bf16.msra.mxu0 0
        %2017 = vmatprep.subr.bf16.mxu0 0
        %2018 = vmatpush1.bf16.msra.mxu0 0
        %2019 = vmatprep.subr.bf16.mxu0 0
        %2020 = vmatpush1.bf16.msra.mxu0 0
        %2021 = vmatprep.subr.bf16.mxu0 0
        %2022 = vmatpush1.bf16.msra.mxu0 0
        %2023 = vmatprep.subr.bf16.mxu0 0
        %2024 = vmatpush1.bf16.msra.mxu0 0
        %2025 = vmatprep.subr.bf16.mxu0 0
        %2026 = vmatpush1.bf16.msra.mxu0 0
        %2027 = vmatprep.mubr.bf16.mxu0 0
        %2028 = vmatmul.mubr.bf16.gmra.mrb[0].mxu0 %v1993
        %v2029 = vpop.f32.mrb[0].mxu0
        %v2030 = vadd.f32 0.0, %v2029
        %v2031 = vpop.f32.mrb[0].mxu0
        %v2032 = vpop.f32.mrb[0].mxu0
        %v2033 = vpop.f32.mrb[0].mxu0
        %2034 = vdwg.mxu0
        %v2035 = vadd.f32 %v1610, %v2030
        %v2036 = vadd.f32 %v2035, %v1985
        %s2037 = scalar_lea.vmem [#allocation19], 3
        %v2038 = vld [vmem:[%s2037] sm:$0x1]
        %s2039 = scalar_lea.vmem [#allocation21], 3
        %v2040 = vld [vmem:[%s2039] sm:$0x1]
        %v2041 = vsel %vm866, %v1987, 0.0
        %2042 = vadd.xlane.f32.xlu0 %v2041
        %v2043 = vpop.xlane.xlu0 %2042
        %v2044 = vmul.f32 %v2043, %v870
        %v2045 = vsub.f32 %v1987, %v2044
        %v2046 = vmul.f32 %v2045, %v2045
        %v2047 = vsel %vm866, %v2046, 0.0
        %2048 = vadd.xlane.f32.xlu0 %v2047
        %v2049 = vpop.xlane.xlu0 %2048
        %v2050 = vmul.f32 %v2049, 0.032258064
        %v2051 = vrsqrt.pop %v2050
        %v2052 = vmul.f32 %v2050, %v2051
        %vm2053 = vcmp.eq.f32.partialorder %v2050, inf
        %v2054 = vsel %vm2053, %v2050, %v2052
        %vm2055 = vcmp.eq.f32.partialorder %v2050, 0.0
        %v2056 = vand.u32 %v2050, 2147483648
        %v2057 = vsel %vm2055, %v2056, %v2054
        %v2058 = vadd.f32 %v2057, 1e-06
        %v2059 = vrcp.pop %v2058
        %v2061 = vlaneseq
        %v2062 = vshrl.u32 %v2061, 7
        %v2063 = vsub.s32 0, %v2062
        %v2064 = vrot.slane %v2038, %v2063
        %v2066 = vmul.f32 %v2064, %v2045
        %v2067 = vmul.f32 %v2066, %v2059
        %v2069 = vlaneseq
        %v2070 = vshrl.u32 %v2069, 7
        %v2071 = vsub.s32 0, %v2070
        %v2072 = vrot.slane %v2040, %v2071
        %v2074 = vadd.f32 %v2067, %v2072
        %v2075 = vsel %vm866, %v2036, 0.0
        %2076 = vadd.xlane.f32.xlu0 %v2075
        %v2077 = vpop.xlane.xlu0 %2076
        %v2078 = vmul.f32 %v2077, %v870
        %v2079 = vsub.f32 %v2036, %v2078
        %v2080 = vmul.f32 %v2079, %v2079
        %v2081 = vsel %vm866, %v2080, 0.0
        %2082 = vadd.xlane.f32.xlu0 %v2081
        %v2083 = vpop.xlane.xlu0 %2082
        %v2084 = vmul.f32 %v2083, 0.032258064
        %v2085 = vrsqrt.pop %v2084
        %v2086 = vmul.f32 %v2084, %v2085
        %vm2087 = vcmp.eq.f32.partialorder %v2084, inf
        %v2088 = vsel %vm2087, %v2084, %v2086
        %vm2089 = vcmp.eq.f32.partialorder %v2084, 0.0
        %v2090 = vand.u32 %v2084, 2147483648
        %v2091 = vsel %vm2089, %v2090, %v2088
        %v2092 = vadd.f32 %v2091, 1e-06
        %v2093 = vrcp.pop %v2092
        %v2094 = vmul.f32 %v2064, %v2079
        %v2095 = vmul.f32 %v2094, %v2093
        %v2096 = vadd.f32 %v2095, %v2072
        %s2097 = scalar_lea.vmem %s11, 16
        %v2098 = vld [vmem:[%s2097] sm:$0xf]
        %v2099 = vld [vmem:[%s2097 + $0x4] sm:$0xf]
        %v2100 = vld [vmem:[%s2097 + $0x8] sm:$0xf]
        %v2101 = vld [vmem:[%s2097 + $0xc] sm:$0xf]
        %v2102 = vpack.c.bf16 %v2074, %v2074
        %s2103 = scalar_lea.vmem [#allocation16], 1
        %v2104 = vld [vmem:[%s2103] sm:$0x1]
        %v2106 = vlaneseq
        %v2107 = vshrl.u32 %v2106, 7
        %v2108 = vsub.s32 0, %v2107
        %v2109 = vrot.slane %v2104, %v2108
        %v2115 = vunpack.c.l.b16 %v2098
        %v2116 = vunpack.c.l.b16 %v2099
        %v2117 = vunpack.c.l.b16 %v2100
        %v2118 = vunpack.c.l.b16 %v2101
        %v2119 = vpack.c.b16 %v2116, %v2115
        %v2120 = vpack.c.b16 %v2118, %v2117
        %v2124 = vsel %vm866, %v2102, 0
        %2126 = vmatprep.subr.bf16.mxu0 0
        %2127 = vmatpush1.bf16.msra.mxu0 %v2119
        %2128 = vmatprep.subr.bf16.mxu0 0
        %2129 = vmatpush1.bf16.msra.mxu0 %v2120
        %2130 = vmatprep.subr.bf16.mxu0 0
        %2131 = vmatpush1.bf16.msra.mxu0 0
        %2132 = vmatprep.subr.bf16.mxu0 0
        %2133 = vmatpush1.bf16.msra.mxu0 0
        %2134 = vmatprep.subr.bf16.mxu0 0
        %2135 = vmatpush1.bf16.msra.mxu0 0
        %2136 = vmatprep.subr.bf16.mxu0 0
        %2137 = vmatpush1.bf16.msra.mxu0 0
        %2138 = vmatprep.subr.bf16.mxu0 0
        %2139 = vmatpush1.bf16.msra.mxu0 0
        %2140 = vmatprep.subr.bf16.mxu0 0
        %2141 = vmatpush1.bf16.msra.mxu0 0
        %2142 = vmatprep.subr.bf16.mxu0 0
        %2143 = vmatpush1.bf16.msra.mxu0 0
        %2144 = vmatprep.subr.bf16.mxu0 0
        %2145 = vmatpush1.bf16.msra.mxu0 0
        %2146 = vmatprep.subr.bf16.mxu0 0
        %2147 = vmatpush1.bf16.msra.mxu0 0
        %2148 = vmatprep.subr.bf16.mxu0 0
        %2149 = vmatpush1.bf16.msra.mxu0 0
        %2150 = vmatprep.subr.bf16.mxu0 0
        %2151 = vmatpush1.bf16.msra.mxu0 0
        %2152 = vmatprep.subr.bf16.mxu0 0
        %2153 = vmatpush1.bf16.msra.mxu0 0
        %2154 = vmatprep.subr.bf16.mxu0 0
        %2155 = vmatpush1.bf16.msra.mxu0 0
        %2156 = vmatprep.subr.bf16.mxu0 0
        %2157 = vmatpush1.bf16.msra.mxu0 0
        %2158 = vmatprep.mubr.bf16.mxu0 0
        %2159 = vmatmul.mubr.bf16.gmra.mrb[0].mxu0 %v2124
        %v2160 = vpop.f32.mrb[0].mxu0
        %v2161 = vadd.f32 %v2109, %v2160
        %v2162 = vpop.f32.mrb[0].mxu0
        %v2163 = vpop.f32.mrb[0].mxu0
        %v2164 = vpop.f32.mrb[0].mxu0
        %2165 = vdwg.mxu0
        %v2166 = vmax.f32 %v2161, 0.0
        %s2167 = scalar_lea.vmem %s13, 32
        %v2168 = vld [vmem:[%s2167] sm:$0xf]
        %v2169 = vld [vmem:[%s2167 + $0x4] sm:$0xf]
        %v2170 = vld [vmem:[%s2167 + $0x8] sm:$0xf]
        %v2171 = vld [vmem:[%s2167 + $0xc] sm:$0xf]
        %v2172 = vld [vmem:[%s2167 + $0x10] sm:$0xf]
        %v2173 = vld [vmem:[%s2167 + $0x14] sm:$0xf]
        %v2174 = vld [vmem:[%s2167 + $0x18] sm:$0xf]
        %v2175 = vld [vmem:[%s2167 + $0x1c] sm:$0xf]
        %v2176 = vpack.c.bf16 %v2166, %v2166
        %s2177 = scalar_lea.vmem [#allocation18], 1
        %v2178 = vld [vmem:[%s2177] sm:$0x1]
        %v2180 = vlaneseq
        %v2181 = vshrl.u32 %v2180, 7
        %v2182 = vsub.s32 0, %v2181
        %v2183 = vrot.slane %v2178, %v2182
        %v2193 = vunpack.c.l.b16 %v2168
        %v2194 = vunpack.c.l.b16 %v2169
        %v2195 = vunpack.c.l.b16 %v2170
        %v2196 = vunpack.c.l.b16 %v2171
        %v2197 = vunpack.c.l.b16 %v2172
        %v2198 = vunpack.c.l.b16 %v2173
        %v2199 = vunpack.c.l.b16 %v2174
        %v2200 = vunpack.c.l.b16 %v2175
        %v2201 = vpack.c.b16 %v2194, %v2193
        %v2202 = vpack.c.b16 %v2196, %v2195
        %v2203 = vpack.c.b16 %v2198, %v2197
        %v2204 = vpack.c.b16 %v2200, %v2199
        %v2210 = vsel %vm1476, %v2176, 0
        %2212 = vmatprep.subr.bf16.mxu0 0
        %2213 = vmatpush1.bf16.msra.mxu0 %v2201
        %2214 = vmatprep.subr.bf16.mxu0 0
        %2215 = vmatpush1.bf16.msra.mxu0 %v2202
        %2216 = vmatprep.subr.bf16.mxu0 0
        %2217 = vmatpush1.bf16.msra.mxu0 %v2203
        %2218 = vmatprep.subr.bf16.mxu0 0
        %2219 = vmatpush1.bf16.msra.mxu0 %v2204
        %2220 = vmatprep.subr.bf16.mxu0 0
        %2221 = vmatpush1.bf16.msra.mxu0 0
        %2222 = vmatprep.subr.bf16.mxu0 0
        %2223 = vmatpush1.bf16.msra.mxu0 0
        %2224 = vmatprep.subr.bf16.mxu0 0
        %2225 = vmatpush1.bf16.msra.mxu0 0
        %2226 = vmatprep.subr.bf16.mxu0 0
        %2227 = vmatpush1.bf16.msra.mxu0 0
        %2228 = vmatprep.subr.bf16.mxu0 0
        %2229 = vmatpush1.bf16.msra.mxu0 0
        %2230 = vmatprep.subr.bf16.mxu0 0
        %2231 = vmatpush1.bf16.msra.mxu0 0
        %2232 = vmatprep.subr.bf16.mxu0 0
        %2233 = vmatpush1.bf16.msra.mxu0 0
        %2234 = vmatprep.subr.bf16.mxu0 0
        %2235 = vmatpush1.bf16.msra.mxu0 0
        %2236 = vmatprep.subr.bf16.mxu0 0
        %2237 = vmatpush1.bf16.msra.mxu0 0
        %2238 = vmatprep.subr.bf16.mxu0 0
        %2239 = vmatpush1.bf16.msra.mxu0 0
        %2240 = vmatprep.subr.bf16.mxu0 0
        %2241 = vmatpush1.bf16.msra.mxu0 0
        %2242 = vmatprep.subr.bf16.mxu0 0
        %2243 = vmatpush1.bf16.msra.mxu0 0
        %2244 = vmatprep.mubr.bf16.mxu0 0
        %2245 = vmatmul.mubr.bf16.gmra.mrb[0].mxu0 %v2210
        %v2246 = vpop.f32.mrb[0].mxu0
        %v2247 = vadd.f32 %v2183, %v2246
        %v2248 = vpop.f32.mrb[0].mxu0
        %v2249 = vpop.f32.mrb[0].mxu0
        %v2250 = vpop.f32.mrb[0].mxu0
        %2251 = vdwg.mxu0
        %v2252 = vadd.f32 %v1987, %v2247
        %v2253 = vpack.c.bf16 %v2096, %v2096
        %v2255 = vsel %vm866, %v2253, 0
        %2257 = vmatprep.subr.bf16.mxu0 0
        %2258 = vmatpush1.bf16.msra.mxu0 %v2119
        %2259 = vmatprep.subr.bf16.mxu0 0
        %2260 = vmatpush1.bf16.msra.mxu0 %v2120
        %2261 = vmatprep.subr.bf16.mxu0 0
        %2262 = vmatpush1.bf16.msra.mxu0 0
        %2263 = vmatprep.subr.bf16.mxu0 0
        %2264 = vmatpush1.bf16.msra.mxu0 0
        %2265 = vmatprep.subr.bf16.mxu0 0
        %2266 = vmatpush1.bf16.msra.mxu0 0
        %2267 = vmatprep.subr.bf16.mxu0 0
        %2268 = vmatpush1.bf16.msra.mxu0 0
        %2269 = vmatprep.subr.bf16.mxu0 0
        %2270 = vmatpush1.bf16.msra.mxu0 0
        %2271 = vmatprep.subr.bf16.mxu0 0
        %2272 = vmatpush1.bf16.msra.mxu0 0
        %2273 = vmatprep.subr.bf16.mxu0 0
        %2274 = vmatpush1.bf16.msra.mxu0 0
        %2275 = vmatprep.subr.bf16.mxu0 0
        %2276 = vmatpush1.bf16.msra.mxu0 0
        %2277 = vmatprep.subr.bf16.mxu0 0
        %2278 = vmatpush1.bf16.msra.mxu0 0
        %2279 = vmatprep.subr.bf16.mxu0 0
        %2280 = vmatpush1.bf16.msra.mxu0 0
        %2281 = vmatprep.subr.bf16.mxu0 0
        %2282 = vmatpush1.bf16.msra.mxu0 0
        %2283 = vmatprep.subr.bf16.mxu0 0
        %2284 = vmatpush1.bf16.msra.mxu0 0
        %2285 = vmatprep.subr.bf16.mxu0 0
        %2286 = vmatpush1.bf16.msra.mxu0 0
        %2287 = vmatprep.subr.bf16.mxu0 0
        %2288 = vmatpush1.bf16.msra.mxu0 0
        %2289 = vmatprep.mubr.bf16.mxu0 0
        %2290 = vmatmul.mubr.bf16.gmra.mrb[0].mxu0 %v2255
        %v2291 = vpop.f32.mrb[0].mxu0
        %v2292 = vadd.f32 %v2109, %v2291
        %v2293 = vpop.f32.mrb[0].mxu0
        %v2294 = vpop.f32.mrb[0].mxu0
        %v2295 = vpop.f32.mrb[0].mxu0
        %2296 = vdwg.mxu0
        %v2297 = vmax.f32 %v2292, 0.0
        %v2298 = vpack.c.bf16 %v2297, %v2297
        %v2300 = vsel %vm1476, %v2298, 0
        %2302 = vmatprep.subr.bf16.mxu0 0
        %2303 = vmatpush1.bf16.msra.mxu0 %v2201
        %2304 = vmatprep.subr.bf16.mxu0 0
        %2305 = vmatpush1.bf16.msra.mxu0 %v2202
        %2306 = vmatprep.subr.bf16.mxu0 0
        %2307 = vmatpush1.bf16.msra.mxu0 %v2203
        %2308 = vmatprep.subr.bf16.mxu0 0
        %2309 = vmatpush1.bf16.msra.mxu0 %v2204
        %2310 = vmatprep.subr.bf16.mxu0 0
        %2311 = vmatpush1.bf16.msra.mxu0 0
        %2312 = vmatprep.subr.bf16.mxu0 0
        %2313 = vmatpush1.bf16.msra.mxu0 0
        %2314 = vmatprep.subr.bf16.mxu0 0
        %2315 = vmatpush1.bf16.msra.mxu0 0
        %2316 = vmatprep.subr.bf16.mxu0 0
        %2317 = vmatpush1.bf16.msra.mxu0 0
        %2318 = vmatprep.subr.bf16.mxu0 0
        %2319 = vmatpush1.bf16.msra.mxu0 0
        %2320 = vmatprep.subr.bf16.mxu0 0
        %2321 = vmatpush1.bf16.msra.mxu0 0
        %2322 = vmatprep.subr.bf16.mxu0 0
        %2323 = vmatpush1.bf16.msra.mxu0 0
        %2324 = vmatprep.subr.bf16.mxu0 0
        %2325 = vmatpush1.bf16.msra.mxu0 0
        %2326 = vmatprep.subr.bf16.mxu0 0
        %2327 = vmatpush1.bf16.msra.mxu0 0
        %2328 = vmatprep.subr.bf16.mxu0 0
        %2329 = vmatpush1.bf16.msra.mxu0 0
        %2330 = vmatprep.subr.bf16.mxu0 0
        %2331 = vmatpush1.bf16.msra.mxu0 0
        %2332 = vmatprep.subr.bf16.mxu0 0
        %2333 = vmatpush1.bf16.msra.mxu0 0
        %2334 = vmatprep.mubr.bf16.mxu0 0
        %2335 = vmatmul.mubr.bf16.gmra.mrb[0].mxu0 %v2300
        %v2336 = vpop.f32.mrb[0].mxu0
        %v2337 = vadd.f32 %v2183, %v2336
        %v2338 = vpop.f32.mrb[0].mxu0
        %v2339 = vpop.f32.mrb[0].mxu0
        %v2340 = vpop.f32.mrb[0].mxu0
        %2341 = vdwg.mxu0
        %v2342 = vadd.f32 %v2036, %v2337
        %s2343 = scalar_lea.vmem [#allocation19], 4
        %v2344 = vld [vmem:[%s2343] sm:$0x1]
        %s2345 = scalar_lea.vmem [#allocation21], 4
        %v2346 = vld [vmem:[%s2345] sm:$0x1]
        %v2347 = vsel %vm866, %v2252, 0.0
        %2348 = vadd.xlane.f32.xlu0 %v2347
        %v2349 = vpop.xlane.xlu0 %2348
        %v2350 = vmul.f32 %v2349, %v870
        %v2351 = vsub.f32 %v2252, %v2350
        %v2352 = vmul.f32 %v2351, %v2351
        %v2353 = vsel %vm866, %v2352, 0.0
        %2354 = vadd.xlane.f32.xlu0 %v2353
        %v2355 = vpop.xlane.xlu0 %2354
        %v2356 = vmul.f32 %v2355, 0.032258064
        %v2357 = vrsqrt.pop %v2356
        %v2358 = vmul.f32 %v2356, %v2357
        %vm2359 = vcmp.eq.f32.partialorder %v2356, inf
        %v2360 = vsel %vm2359, %v2356, %v2358
        %vm2361 = vcmp.eq.f32.partialorder %v2356, 0.0
        %v2362 = vand.u32 %v2356, 2147483648
        %v2363 = vsel %vm2361, %v2362, %v2360
        %v2364 = vadd.f32 %v2363, 1e-06
        %v2365 = vrcp.pop %v2364
        %v2367 = vlaneseq
        %v2368 = vshrl.u32 %v2367, 7
        %v2369 = vsub.s32 0, %v2368
        %v2370 = vrot.slane %v2344, %v2369
        %v2372 = vmul.f32 %v2370, %v2351
        %v2373 = vmul.f32 %v2372, %v2365
        %v2375 = vlaneseq
        %v2376 = vshrl.u32 %v2375, 7
        %v2377 = vsub.s32 0, %v2376
        %v2378 = vrot.slane %v2346, %v2377
        %v2380 = vadd.f32 %v2373, %v2378
        %v2381 = vsel %vm866, %v2342, 0.0
        %2382 = vadd.xlane.f32.xlu0 %v2381
        %v2383 = vpop.xlane.xlu0 %2382
        %v2384 = vmul.f32 %v2383, %v870
        %v2385 = vsub.f32 %v2342, %v2384
        %v2386 = vmul.f32 %v2385, %v2385
        %v2387 = vsel %vm866, %v2386, 0.0
        %2388 = vadd.xlane.f32.xlu0 %v2387
        %v2389 = vpop.xlane.xlu0 %2388
        %v2390 = vmul.f32 %v2389, 0.032258064
        %v2391 = vrsqrt.pop %v2390
        %v2392 = vmul.f32 %v2390, %v2391
        %vm2393 = vcmp.eq.f32.partialorder %v2390, inf
        %v2394 = vsel %vm2393, %v2390, %v2392
        %vm2395 = vcmp.eq.f32.partialorder %v2390, 0.0
        %v2396 = vand.u32 %v2390, 2147483648
        %v2397 = vsel %vm2395, %v2396, %v2394
        %v2398 = vadd.f32 %v2397, 1e-06
        %v2399 = vrcp.pop %v2398
        %v2400 = vmul.f32 %v2370, %v2385
        %v2401 = vmul.f32 %v2400, %v2399
        %v2402 = vadd.f32 %v2401, %v2378
        %s2403 = scalar_lea.vmem [#allocation19], 5
        %v2404 = vld [vmem:[%s2403] sm:$0x1]
        %s2405 = scalar_lea.vmem [#allocation21], 5
        %v2406 = vld [vmem:[%s2405] sm:$0x1]
        %v2407 = vsel %vm866, %v849, 0.0
        %2408 = vadd.xlane.f32.xlu0 %v2407
        %v2409 = vpop.xlane.xlu0 %2408
        %v2410 = vmul.f32 %v2409, %v870
        %v2411 = vsub.f32 %v849, %v2410
        %v2412 = vmul.f32 %v2411, %v2411
        %v2413 = vsel %vm866, %v2412, 0.0
        %2414 = vadd.xlane.f32.xlu0 %v2413
        %v2415 = vpop.xlane.xlu0 %2414
        %v2416 = vmul.f32 %v2415, 0.032258064
        %v2417 = vrsqrt.pop %v2416
        %v2418 = vmul.f32 %v2416, %v2417
        %vm2419 = vcmp.eq.f32.partialorder %v2416, inf
        %v2420 = vsel %vm2419, %v2416, %v2418
        %vm2421 = vcmp.eq.f32.partialorder %v2416, 0.0
        %v2422 = vand.u32 %v2416, 2147483648
        %v2423 = vsel %vm2421, %v2422, %v2420
        %v2424 = vadd.f32 %v2423, 1e-06
        %v2425 = vrcp.pop %v2424
        %v2427 = vlaneseq
        %v2428 = vshrl.u32 %v2427, 7
        %v2429 = vsub.s32 0, %v2428
        %v2430 = vrot.slane %v2404, %v2429
        %v2432 = vmul.f32 %v2430, %v2411
        %v2433 = vmul.f32 %v2432, %v2425
        %v2435 = vlaneseq
        %v2436 = vshrl.u32 %v2435, 7
        %v2437 = vsub.s32 0, %v2436
        %v2438 = vrot.slane %v2406, %v2437
        %v2440 = vadd.f32 %v2433, %v2438
        %s2441 = scalar_lea.vmem %s7, 32
        %v2442 = vld [vmem:[%s2441] sm:$0xf]
        %v2443 = vld [vmem:[%s2441 + $0x4] sm:$0xf]
        %v2444 = vld [vmem:[%s2441 + $0x8] sm:$0xf]
        %v2445 = vld [vmem:[%s2441 + $0xc] sm:$0xf]
        %v2446 = vpack.c.bf16 %v2440, %v2440
        %v2451 = vunpack.c.l.b16 %v2442
        %v2452 = vunpack.c.l.b16 %v2443
        %v2453 = vunpack.c.l.b16 %v2444
        %v2454 = vunpack.c.l.b16 %v2445
        %v2455 = vpack.c.b16 %v2452, %v2451
        %v2456 = vpack.c.b16 %v2454, %v2453
        %v2460 = vsel %vm866, %v2446, 0
        %2462 = vmatprep.subr.bf16.mxu0 0
        %2463 = vmatpush1.bf16.msra.mxu0 %v2455
        %2464 = vmatprep.subr.bf16.mxu0 0
        %2465 = vmatpush1.bf16.msra.mxu0 %v2456
        %2466 = vmatprep.subr.bf16.mxu0 0
        %2467 = vmatpush1.bf16.msra.mxu0 0
        %2468 = vmatprep.subr.bf16.mxu0 0
        %2469 = vmatpush1.bf16.msra.mxu0 0
        %2470 = vmatprep.subr.bf16.mxu0 0
        %2471 = vmatpush1.bf16.msra.mxu0 0
        %2472 = vmatprep.subr.bf16.mxu0 0
        %2473 = vmatpush1.bf16.msra.mxu0 0
        %2474 = vmatprep.subr.bf16.mxu0 0
        %2475 = vmatpush1.bf16.msra.mxu0 0
        %2476 = vmatprep.subr.bf16.mxu0 0
        %2477 = vmatpush1.bf16.msra.mxu0 0
        %2478 = vmatprep.subr.bf16.mxu0 0
        %2479 = vmatpush1.bf16.msra.mxu0 0
        %2480 = vmatprep.subr.bf16.mxu0 0
        %2481 = vmatpush1.bf16.msra.mxu0 0
        %2482 = vmatprep.subr.bf16.mxu0 0
        %2483 = vmatpush1.bf16.msra.mxu0 0
        %2484 = vmatprep.subr.bf16.mxu0 0
        %2485 = vmatpush1.bf16.msra.mxu0 0
        %2486 = vmatprep.subr.bf16.mxu0 0
        %2487 = vmatpush1.bf16.msra.mxu0 0
        %2488 = vmatprep.subr.bf16.mxu0 0
        %2489 = vmatpush1.bf16.msra.mxu0 0
        %2490 = vmatprep.subr.bf16.mxu0 0
        %2491 = vmatpush1.bf16.msra.mxu0 0
        %2492 = vmatprep.subr.bf16.mxu0 0
        %2493 = vmatpush1.bf16.msra.mxu0 0
        %2494 = vmatprep.mubr.bf16.mxu0 0
        %2495 = vmatmul.mubr.bf16.gmra.mrb[0].mxu0 %v2460
        %v2496 = vpop.f32.mrb[0].mxu0
        %v2497 = vadd.f32 0.0, %v2496
        %v2498 = vpop.f32.mrb[0].mxu0
        %v2499 = vpop.f32.mrb[0].mxu0
        %v2500 = vpop.f32.mrb[0].mxu0
        %2501 = vdwg.mxu0
        %v2502 = vadd.f32 %v849, %v2497
        %s2503 = scalar_lea.vmem [#allocation12], 2
        %v2504 = vld [vmem:[%s2503] sm:$0x1]
        %v2506 = vlaneseq
        %v2507 = vshrl.u32 %v2506, 7
        %v2508 = vsub.s32 0, %v2507
        %v2509 = vrot.slane %v2504, %v2508
        %v2511 = vadd.f32 %v2502, %v2509
        %s2512 = scalar_lea.vmem [#allocation19], 6
        %v2513 = vld [vmem:[%s2512] sm:$0x1]
        %s2514 = scalar_lea.vmem [#allocation21], 6
        %v2515 = vld [vmem:[%s2514] sm:$0x1]
        %v2516 = vsel %vm866, %v2511, 0.0
        %2517 = vadd.xlane.f32.xlu0 %v2516
        %v2518 = vpop.xlane.xlu0 %2517
        %v2519 = vmul.f32 %v2518, %v870
        %v2520 = vsub.f32 %v2511, %v2519
        %v2521 = vmul.f32 %v2520, %v2520
        %v2522 = vsel %vm866, %v2521, 0.0
        %2523 = vadd.xlane.f32.xlu0 %v2522
        %v2524 = vpop.xlane.xlu0 %2523
        %v2525 = vmul.f32 %v2524, 0.032258064
        %v2526 = vrsqrt.pop %v2525
        %v2527 = vmul.f32 %v2525, %v2526
        %vm2528 = vcmp.eq.f32.partialorder %v2525, inf
        %v2529 = vsel %vm2528, %v2525, %v2527
        %vm2530 = vcmp.eq.f32.partialorder %v2525, 0.0
        %v2531 = vand.u32 %v2525, 2147483648
        %v2532 = vsel %vm2530, %v2531, %v2529
        %v2533 = vadd.f32 %v2532, 1e-06
        %v2534 = vrcp.pop %v2533
        %v2536 = vlaneseq
        %v2537 = vshrl.u32 %v2536, 7
        %v2538 = vsub.s32 0, %v2537
        %v2539 = vrot.slane %v2513, %v2538
        %v2541 = vmul.f32 %v2539, %v2520
        %v2542 = vmul.f32 %v2541, %v2534
        %v2544 = vlaneseq
        %v2545 = vshrl.u32 %v2544, 7
        %v2546 = vsub.s32 0, %v2545
        %v2547 = vrot.slane %v2515, %v2546
        %v2549 = vadd.f32 %v2542, %v2547
        %s2550 = scalar_lea.vmem %s7, 64
        %v2551 = vld [vmem:[%s2550] sm:$0xf]
        %v2552 = vld [vmem:[%s2550 + $0x4] sm:$0xf]
        %v2553 = vld [vmem:[%s2550 + $0x8] sm:$0xf]
        %v2554 = vld [vmem:[%s2550 + $0xc] sm:$0xf]
        %v2555 = vpack.c.bf16 %v2549, %v2549
        %s2556 = scalar_lea.vmem [#allocation12], 4
        %v2557 = vld [vmem:[%s2556] sm:$0x1]
        %v2559 = vlaneseq
        %v2560 = vshrl.u32 %v2559, 7
        %v2561 = vsub.s32 0, %v2560
        %v2562 = vrot.slane %v2557, %v2561
        %v2568 = vunpack.c.l.b16 %v2551
        %v2569 = vunpack.c.l.b16 %v2552
        %v2570 = vunpack.c.l.b16 %v2553
        %v2571 = vunpack.c.l.b16 %v2554
        %v2572 = vpack.c.b16 %v2569, %v2568
        %v2573 = vpack.c.b16 %v2571, %v2570
        %v2577 = vsel %vm866, %v2555, 0
        %2579 = vmatprep.subr.bf16.mxu0 0
        %2580 = vmatpush1.bf16.msra.mxu0 %v2572
        %2581 = vmatprep.subr.bf16.mxu0 0
        %2582 = vmatpush1.bf16.msra.mxu0 %v2573
        %2583 = vmatprep.subr.bf16.mxu0 0
        %2584 = vmatpush1.bf16.msra.mxu0 0
        %2585 = vmatprep.subr.bf16.mxu0 0
        %2586 = vmatpush1.bf16.msra.mxu0 0
        %2587 = vmatprep.subr.bf16.mxu0 0
        %2588 = vmatpush1.bf16.msra.mxu0 0
        %2589 = vmatprep.subr.bf16.mxu0 0
        %2590 = vmatpush1.bf16.msra.mxu0 0
        %2591 = vmatprep.subr.bf16.mxu0 0
        %2592 = vmatpush1.bf16.msra.mxu0 0
        %2593 = vmatprep.subr.bf16.mxu0 0
        %2594 = vmatpush1.bf16.msra.mxu0 0
        %2595 = vmatprep.subr.bf16.mxu0 0
        %2596 = vmatpush1.bf16.msra.mxu0 0
        %2597 = vmatprep.subr.bf16.mxu0 0
        %2598 = vmatpush1.bf16.msra.mxu0 0
        %2599 = vmatprep.subr.bf16.mxu0 0
        %2600 = vmatpush1.bf16.msra.mxu0 0
        %2601 = vmatprep.subr.bf16.mxu0 0
        %2602 = vmatpush1.bf16.msra.mxu0 0
        %2603 = vmatprep.subr.bf16.mxu0 0
        %2604 = vmatpush1.bf16.msra.mxu0 0
        %2605 = vmatprep.subr.bf16.mxu0 0
        %2606 = vmatpush1.bf16.msra.mxu0 0
        %2607 = vmatprep.subr.bf16.mxu0 0
        %2608 = vmatpush1.bf16.msra.mxu0 0
        %2609 = vmatprep.subr.bf16.mxu0 0
        %2610 = vmatpush1.bf16.msra.mxu0 0
        %2611 = vmatprep.mubr.bf16.mxu0 0
        %2612 = vmatmul.mubr.bf16.gmra.mrb[0].mxu0 %v2577
        %v2613 = vpop.f32.mrb[0].mxu0
        %v2614 = vadd.f32 %v2562, %v2613
        %v2615 = vpop.f32.mrb[0].mxu0
        %v2616 = vpop.f32.mrb[0].mxu0
        %v2617 = vpop.f32.mrb[0].mxu0
        %2618 = vdwg.mxu0
        %v2619 = vld [vmem:[#allocation13] sm:$0xf]
        %v2620 = vld [vmem:[#allocation13 + $0x4] sm:$0xf]
        %v2621 = vld [vmem:[#allocation13 + $0x8] sm:$0xf]
        %v2622 = vld [vmem:[#allocation13 + $0xc] sm:$0xf]
        %v2623 = vpack.c.bf16 %v2380, %v2380
        %v2624 = vld [vmem:[#allocation15] sm:$0x1]
        %v2626 = vlaneseq
        %v2627 = vshrl.u32 %v2626, 7
        %v2628 = vsub.s32 0, %v2627
        %v2629 = vrot.slane %v2624, %v2628
        %v2635 = vunpack.c.l.b16 %v2619
        %v2636 = vunpack.c.l.b16 %v2620
        %v2637 = vunpack.c.l.b16 %v2621
        %v2638 = vunpack.c.l.b16 %v2622
        %v2639 = vpack.c.b16 %v2636, %v2635
        %v2640 = vpack.c.b16 %v2638, %v2637
        %v2644 = vsel %vm866, %v2623, 0
        %2646 = vmatprep.subr.bf16.mxu0 0
        %2647 = vmatpush1.bf16.msra.mxu0 %v2639
        %2648 = vmatprep.subr.bf16.mxu0 0
        %2649 = vmatpush1.bf16.msra.mxu0 %v2640
        %2650 = vmatprep.subr.bf16.mxu0 0
        %2651 = vmatpush1.bf16.msra.mxu0 0
        %2652 = vmatprep.subr.bf16.mxu0 0
        %2653 = vmatpush1.bf16.msra.mxu0 0
        %2654 = vmatprep.subr.bf16.mxu0 0
        %2655 = vmatpush1.bf16.msra.mxu0 0
        %2656 = vmatprep.subr.bf16.mxu0 0
        %2657 = vmatpush1.bf16.msra.mxu0 0
        %2658 = vmatprep.subr.bf16.mxu0 0
        %2659 = vmatpush1.bf16.msra.mxu0 0
        %2660 = vmatprep.subr.bf16.mxu0 0
        %2661 = vmatpush1.bf16.msra.mxu0 0
        %2662 = vmatprep.subr.bf16.mxu0 0
        %2663 = vmatpush1.bf16.msra.mxu0 0
        %2664 = vmatprep.subr.bf16.mxu0 0
        %2665 = vmatpush1.bf16.msra.mxu0 0
        %2666 = vmatprep.subr.bf16.mxu0 0
        %2667 = vmatpush1.bf16.msra.mxu0 0
        %2668 = vmatprep.subr.bf16.mxu0 0
        %2669 = vmatpush1.bf16.msra.mxu0 0
        %2670 = vmatprep.subr.bf16.mxu0 0
        %2671 = vmatpush1.bf16.msra.mxu0 0
        %2672 = vmatprep.subr.bf16.mxu0 0
        %2673 = vmatpush1.bf16.msra.mxu0 0
        %2674 = vmatprep.subr.bf16.mxu0 0
        %2675 = vmatpush1.bf16.msra.mxu0 0
        %2676 = vmatprep.subr.bf16.mxu0 0
        %2677 = vmatpush1.bf16.msra.mxu0 0
        %2678 = vmatprep.mubr.bf16.mxu0 0
        %2679 = vmatmul.mubr.bf16.gmra.mrb[0].mxu0 %v2644
        %v2680 = vpop.f32.mrb[0].mxu0
        %v2681 = vadd.f32 %v2629, %v2680
        %v2682 = vpop.f32.mrb[0].mxu0
        %v2683 = vpop.f32.mrb[0].mxu0
        %v2684 = vpop.f32.mrb[0].mxu0
        %2685 = vdwg.mxu0
        %v2686 = vpack.c.bf16 %v2402, %v2402
        %v2688 = vsel %vm866, %v2686, 0
        %2690 = vmatprep.subr.bf16.mxu0 0
        %2691 = vmatpush1.bf16.msra.mxu0 %v2639
        %2692 = vmatprep.subr.bf16.mxu0 0
        %2693 = vmatpush1.bf16.msra.mxu0 %v2640
        %2694 = vmatprep.subr.bf16.mxu0 0
        %2695 = vmatpush1.bf16.msra.mxu0 0
        %2696 = vmatprep.subr.bf16.mxu0 0
        %2697 = vmatpush1.bf16.msra.mxu0 0
        %2698 = vmatprep.subr.bf16.mxu0 0
        %2699 = vmatpush1.bf16.msra.mxu0 0
        %2700 = vmatprep.subr.bf16.mxu0 0
        %2701 = vmatpush1.bf16.msra.mxu0 0
        %2702 = vmatprep.subr.bf16.mxu0 0
        %2703 = vmatpush1.bf16.msra.mxu0 0
        %2704 = vmatprep.subr.bf16.mxu0 0
        %2705 = vmatpush1.bf16.msra.mxu0 0
        %2706 = vmatprep.subr.bf16.mxu0 0
        %2707 = vmatpush1.bf16.msra.mxu0 0
        %2708 = vmatprep.subr.bf16.mxu0 0
        %2709 = vmatpush1.bf16.msra.mxu0 0
        %2710 = vmatprep.subr.bf16.mxu0 0
        %2711 = vmatpush1.bf16.msra.mxu0 0
        %2712 = vmatprep.subr.bf16.mxu0 0
        %2713 = vmatpush1.bf16.msra.mxu0 0
        %2714 = vmatprep.subr.bf16.mxu0 0
        %2715 = vmatpush1.bf16.msra.mxu0 0
        %2716 = vmatprep.subr.bf16.mxu0 0
        %2717 = vmatpush1.bf16.msra.mxu0 0
        %2718 = vmatprep.subr.bf16.mxu0 0
        %2719 = vmatpush1.bf16.msra.mxu0 0
        %2720 = vmatprep.subr.bf16.mxu0 0
        %2721 = vmatpush1.bf16.msra.mxu0 0
        %2722 = vmatprep.mubr.bf16.mxu0 0
        %2723 = vmatmul.mubr.bf16.gmra.mrb[0].mxu0 %v2688
        %v2724 = vpop.f32.mrb[0].mxu0
        %v2725 = vadd.f32 %v2629, %v2724
        %v2726 = vpop.f32.mrb[0].mxu0
        %v2727 = vpop.f32.mrb[0].mxu0
        %v2728 = vpop.f32.mrb[0].mxu0
        %2729 = vdwg.mxu0
        %v2730 = vsub.f32 %v2725, %v2681
        %v2731 = vmul.f32 %v2614, %v2730
        %v2732 = vpack.c.bf16 %v2731, %v2731
        %v2734 = vsel %vm866, %v2732, 0
        %2736 = vmatprep.subr.bf16.mxu0 0
        %2737 = vmatpush1.bf16.msra.mxu0 %v1055
        %2738 = vmatprep.subr.bf16.mxu0 0
        %2739 = vmatpush1.bf16.msra.mxu0 %v1056
        %2740 = vmatprep.subr.bf16.mxu0 0
        %2741 = vmatpush1.bf16.msra.mxu0 0
        %2742 = vmatprep.subr.bf16.mxu0 0
        %2743 = vmatpush1.bf16.msra.mxu0 0
        %2744 = vmatprep.subr.bf16.mxu0 0
        %2745 = vmatpush1.bf16.msra.mxu0 0
        %2746 = vmatprep.subr.bf16.mxu0 0
        %2747 = vmatpush1.bf16.msra.mxu0 0
        %2748 = vmatprep.subr.bf16.mxu0 0
        %2749 = vmatpush1.bf16.msra.mxu0 0
        %2750 = vmatprep.subr.bf16.mxu0 0
        %2751 = vmatpush1.bf16.msra.mxu0 0
        %2752 = vmatprep.subr.bf16.mxu0 0
        %2753 = vmatpush1.bf16.msra.mxu0 0
        %2754 = vmatprep.subr.bf16.mxu0 0
        %2755 = vmatpush1.bf16.msra.mxu0 0
        %2756 = vmatprep.subr.bf16.mxu0 0
        %2757 = vmatpush1.bf16.msra.mxu0 0
        %2758 = vmatprep.subr.bf16.mxu0 0
        %2759 = vmatpush1.bf16.msra.mxu0 0
        %2760 = vmatprep.subr.bf16.mxu0 0
        %2761 = vmatpush1.bf16.msra.mxu0 0
        %2762 = vmatprep.subr.bf16.mxu0 0
        %2763 = vmatpush1.bf16.msra.mxu0 0
        %2764 = vmatprep.subr.bf16.mxu0 0
        %2765 = vmatpush1.bf16.msra.mxu0 0
        %2766 = vmatprep.subr.bf16.mxu0 0
        %2767 = vmatpush1.bf16.msra.mxu0 0
        %2768 = vmatprep.mubr.bf16.mxu0 0
        %2769 = vmatmul.mubr.bf16.gmra.mrb[0].mxu0 %v2734
        %v2770 = vpop.f32.mrb[0].mxu0
        %v2771 = vadd.f32 %v1045, %v2770
        %v2772 = vpop.f32.mrb[0].mxu0
        %v2773 = vpop.f32.mrb[0].mxu0
        %v2774 = vpop.f32.mrb[0].mxu0
        %2775 = vdwg.mxu0
        %v2776 = vsub.f32 0.0, %v2771
        %v2777 = vmul.f32 %v2776, 1.442695
        %v2778 = vpow.pop %v2777
        %v2779 = vadd.f32 %v2778, 1.0
        %v2780 = vrcp.pop %v2779
        %v2781 = vmul.f32 1.0, %v2780
        %2783 = vrot.lane.b32.xlu0 %v2730, 96
        %v2784 = vpop.permute.xlu0 %2783
        %v2786 = vmul.f32 %v2781, %v2784
        %2788 = vrot.lane.b32.xlu0 %v2786, 32
        %v2789 = vpop.permute.xlu0 %2788
        %v2791 = vadd.f32 %v2681, %v2789
        %s2792 = scalar_lea.vmem %s7, 96
        %v2793 = vld [vmem:[%s2792] sm:$0xf]
        %v2794 = vld [vmem:[%s2792 + $0x4] sm:$0xf]
        %v2795 = vld [vmem:[%s2792 + $0x8] sm:$0xf]
        %v2796 = vld [vmem:[%s2792 + $0xc] sm:$0xf]
        %v2797 = vpack.c.bf16 %v2791, %v2791
        %2799 = vrot.lane.b32.xlu0 %v2797, 96
        %v2800 = vpop.permute.xlu0 %2799
        %v2805 = vunpack.c.l.b16 %v2793
        %v2806 = vunpack.c.l.b16 %v2794
        %v2807 = vunpack.c.l.b16 %v2795
        %v2808 = vunpack.c.l.b16 %v2796
        %v2809 = vpack.c.b16 %v2806, %v2805
        %v2810 = vpack.c.b16 %v2808, %v2807
        %v2814 = vsel %vm866, %v2800, 0
        %2816 = vmatprep.subr.bf16.mxu0 0
        %2817 = vmatpush1.bf16.msra.mxu0 %v2809
        %2818 = vmatprep.subr.bf16.mxu0 0
        %2819 = vmatpush1.bf16.msra.mxu0 %v2810
        %2820 = vmatprep.subr.bf16.mxu0 0
        %2821 = vmatpush1.bf16.msra.mxu0 0
        %2822 = vmatprep.subr.bf16.mxu0 0
        %2823 = vmatpush1.bf16.msra.mxu0 0
        %2824 = vmatprep.subr.bf16.mxu0 0
        %2825 = vmatpush1.bf16.msra.mxu0 0
        %2826 = vmatprep.subr.bf16.mxu0 0
        %2827 = vmatpush1.bf16.msra.mxu0 0
        %2828 = vmatprep.subr.bf16.mxu0 0
        %2829 = vmatpush1.bf16.msra.mxu0 0
        %2830 = vmatprep.subr.bf16.mxu0 0
        %2831 = vmatpush1.bf16.msra.mxu0 0
        %2832 = vmatprep.subr.bf16.mxu0 0
        %2833 = vmatpush1.bf16.msra.mxu0 0
        %2834 = vmatprep.subr.bf16.mxu0 0
        %2835 = vmatpush1.bf16.msra.mxu0 0
        %2836 = vmatprep.subr.bf16.mxu0 0
        %2837 = vmatpush1.bf16.msra.mxu0 0
        %2838 = vmatprep.subr.bf16.mxu0 0
        %2839 = vmatpush1.bf16.msra.mxu0 0
        %2840 = vmatprep.subr.bf16.mxu0 0
        %2841 = vmatpush1.bf16.msra.mxu0 0
        %2842 = vmatprep.subr.bf16.mxu0 0
        %2843 = vmatpush1.bf16.msra.mxu0 0
        %2844 = vmatprep.subr.bf16.mxu0 0
        %2845 = vmatpush1.bf16.msra.mxu0 0
        %2846 = vmatprep.subr.bf16.mxu0 0
        %2847 = vmatpush1.bf16.msra.mxu0 0
        %2848 = vmatprep.mubr.bf16.mxu0 0
        %2849 = vmatmul.mubr.bf16.gmra.mrb[0].mxu0 %v2814
        %v2850 = vpop.f32.mrb[0].mxu0
        %v2851 = vadd.f32 0.0, %v2850
        %v2852 = vpop.f32.mrb[0].mxu0
        %v2853 = vpop.f32.mrb[0].mxu0
        %v2854 = vpop.f32.mrb[0].mxu0
        %2855 = vdwg.mxu0
        %v2856 = vadd.f32 %v2511, %v2851
        %s2857 = scalar_lea.vmem [#allocation12], 6
        %v2858 = vld [vmem:[%s2857] sm:$0x1]
        %v2860 = vlaneseq
        %v2861 = vshrl.u32 %v2860, 7
        %v2862 = vsub.s32 0, %v2861
        %v2863 = vrot.slane %v2858, %v2862
        %v2865 = vadd.f32 %v2856, %v2863
        %s2866 = scalar_lea.vmem [#allocation19], 7
        %v2867 = vld [vmem:[%s2866] sm:$0x1]
        %s2868 = scalar_lea.vmem [#allocation21], 7
        %v2869 = vld [vmem:[%s2868] sm:$0x1]
        %v2870 = vsel %vm866, %v2865, 0.0
        %2871 = vadd.xlane.f32.xlu0 %v2870
        %v2872 = vpop.xlane.xlu0 %2871
        %v2873 = vmul.f32 %v2872, %v870
        %v2874 = vsub.f32 %v2865, %v2873
        %v2875 = vmul.f32 %v2874, %v2874
        %v2876 = vsel %vm866, %v2875, 0.0
        %2877 = vadd.xlane.f32.xlu0 %v2876
        %v2878 = vpop.xlane.xlu0 %2877
        %v2879 = vmul.f32 %v2878, 0.032258064
        %v2880 = vrsqrt.pop %v2879
        %v2881 = vmul.f32 %v2879, %v2880
        %vm2882 = vcmp.eq.f32.partialorder %v2879, inf
        %v2883 = vsel %vm2882, %v2879, %v2881
        %vm2884 = vcmp.eq.f32.partialorder %v2879, 0.0
        %v2885 = vand.u32 %v2879, 2147483648
        %v2886 = vsel %vm2884, %v2885, %v2883
        %v2887 = vadd.f32 %v2886, 1e-06
        %v2888 = vrcp.pop %v2887
        %v2890 = vlaneseq
        %v2891 = vshrl.u32 %v2890, 7
        %v2892 = vsub.s32 0, %v2891
        %v2893 = vrot.slane %v2867, %v2892
        %v2895 = vmul.f32 %v2893, %v2874
        %v2896 = vmul.f32 %v2895, %v2888
        %v2898 = vlaneseq
        %v2899 = vshrl.u32 %v2898, 7
        %v2900 = vsub.s32 0, %v2899
        %v2901 = vrot.slane %v2869, %v2900
        %v2903 = vadd.f32 %v2896, %v2901
        %s2904 = scalar_lea.vmem %s11, 32
        %v2905 = vld [vmem:[%s2904] sm:$0xf]
        %v2906 = vld [vmem:[%s2904 + $0x4] sm:$0xf]
        %v2907 = vld [vmem:[%s2904 + $0x8] sm:$0xf]
        %v2908 = vld [vmem:[%s2904 + $0xc] sm:$0xf]
        %v2909 = vpack.c.bf16 %v2903, %v2903
        %s2910 = scalar_lea.vmem [#allocation16], 2
        %v2911 = vld [vmem:[%s2910] sm:$0x1]
        %v2913 = vlaneseq
        %v2914 = vshrl.u32 %v2913, 7
        %v2915 = vsub.s32 0, %v2914
        %v2916 = vrot.slane %v2911, %v2915
        %v2922 = vunpack.c.l.b16 %v2905
        %v2923 = vunpack.c.l.b16 %v2906
        %v2924 = vunpack.c.l.b16 %v2907
        %v2925 = vunpack.c.l.b16 %v2908
        %v2926 = vpack.c.b16 %v2923, %v2922
        %v2927 = vpack.c.b16 %v2925, %v2924
        %v2931 = vsel %vm866, %v2909, 0
        %2933 = vmatprep.subr.bf16.mxu0 0
        %2934 = vmatpush1.bf16.msra.mxu0 %v2926
        %2935 = vmatprep.subr.bf16.mxu0 0
        %2936 = vmatpush1.bf16.msra.mxu0 %v2927
        %2937 = vmatprep.subr.bf16.mxu0 0
        %2938 = vmatpush1.bf16.msra.mxu0 0
        %2939 = vmatprep.subr.bf16.mxu0 0
        %2940 = vmatpush1.bf16.msra.mxu0 0
        %2941 = vmatprep.subr.bf16.mxu0 0
        %2942 = vmatpush1.bf16.msra.mxu0 0
        %2943 = vmatprep.subr.bf16.mxu0 0
        %2944 = vmatpush1.bf16.msra.mxu0 0
        %2945 = vmatprep.subr.bf16.mxu0 0
        %2946 = vmatpush1.bf16.msra.mxu0 0
        %2947 = vmatprep.subr.bf16.mxu0 0
        %2948 = vmatpush1.bf16.msra.mxu0 0
        %2949 = vmatprep.subr.bf16.mxu0 0
        %2950 = vmatpush1.bf16.msra.mxu0 0
        %2951 = vmatprep.subr.bf16.mxu0 0
        %2952 = vmatpush1.bf16.msra.mxu0 0
        %2953 = vmatprep.subr.bf16.mxu0 0
        %2954 = vmatpush1.bf16.msra.mxu0 0
        %2955 = vmatprep.subr.bf16.mxu0 0
        %2956 = vmatpush1.bf16.msra.mxu0 0
        %2957 = vmatprep.subr.bf16.mxu0 0
        %2958 = vmatpush1.bf16.msra.mxu0 0
        %2959 = vmatprep.subr.bf16.mxu0 0
        %2960 = vmatpush1.bf16.msra.mxu0 0
        %2961 = vmatprep.subr.bf16.mxu0 0
        %2962 = vmatpush1.bf16.msra.mxu0 0
        %2963 = vmatprep.subr.bf16.mxu0 0
        %2964 = vmatpush1.bf16.msra.mxu0 0
        %2965 = vmatprep.mubr.bf16.mxu0 0
        %2966 = vmatmul.mubr.bf16.gmra.mrb[0].mxu0 %v2931
        %v2967 = vpop.f32.mrb[0].mxu0
        %v2968 = vadd.f32 %v2916, %v2967
        %v2969 = vpop.f32.mrb[0].mxu0
        %v2970 = vpop.f32.mrb[0].mxu0
        %v2971 = vpop.f32.mrb[0].mxu0
        %2972 = vdwg.mxu0
        %v2973 = vmax.f32 %v2968, 0.0
        %s2974 = scalar_lea.vmem %s13, 64
        %v2975 = vld [vmem:[%s2974] sm:$0xf]
        %v2976 = vld [vmem:[%s2974 + $0x4] sm:$0xf]
        %v2977 = vld [vmem:[%s2974 + $0x8] sm:$0xf]
        %v2978 = vld [vmem:[%s2974 + $0xc] sm:$0xf]
        %v2979 = vld [vmem:[%s2974 + $0x10] sm:$0xf]
        %v2980 = vld [vmem:[%s2974 + $0x14] sm:$0xf]
        %v2981 = vld [vmem:[%s2974 + $0x18] sm:$0xf]
        %v2982 = vld [vmem:[%s2974 + $0x1c] sm:$0xf]
        %v2983 = vpack.c.bf16 %v2973, %v2973
        %s2984 = scalar_lea.vmem [#allocation18], 2
        %v2985 = vld [vmem:[%s2984] sm:$0x1]
        %v2987 = vlaneseq
        %v2988 = vshrl.u32 %v2987, 7
        %v2989 = vsub.s32 0, %v2988
        %v2990 = vrot.slane %v2985, %v2989
        %v3000 = vunpack.c.l.b16 %v2975
        %v3001 = vunpack.c.l.b16 %v2976
        %v3002 = vunpack.c.l.b16 %v2977
        %v3003 = vunpack.c.l.b16 %v2978
        %v3004 = vunpack.c.l.b16 %v2979
        %v3005 = vunpack.c.l.b16 %v2980
        %v3006 = vunpack.c.l.b16 %v2981
        %v3007 = vunpack.c.l.b16 %v2982
        %v3008 = vpack.c.b16 %v3001, %v3000
        %v3009 = vpack.c.b16 %v3003, %v3002
        %v3010 = vpack.c.b16 %v3005, %v3004
        %v3011 = vpack.c.b16 %v3007, %v3006
        %v3017 = vsel %vm1476, %v2983, 0
        %3019 = vmatprep.subr.bf16.mxu0 0
        %3020 = vmatpush1.bf16.msra.mxu0 %v3008
        %3021 = vmatprep.subr.bf16.mxu0 0
        %3022 = vmatpush1.bf16.msra.mxu0 %v3009
        %3023 = vmatprep.subr.bf16.mxu0 0
        %3024 = vmatpush1.bf16.msra.mxu0 %v3010
        %3025 = vmatprep.subr.bf16.mxu0 0
        %3026 = vmatpush1.bf16.msra.mxu0 %v3011
        %3027 = vmatprep.subr.bf16.mxu0 0
        %3028 = vmatpush1.bf16.msra.mxu0 0
        %3029 = vmatprep.subr.bf16.mxu0 0
        %3030 = vmatpush1.bf16.msra.mxu0 0
        %3031 = vmatprep.subr.bf16.mxu0 0
        %3032 = vmatpush1.bf16.msra.mxu0 0
        %3033 = vmatprep.subr.bf16.mxu0 0
        %3034 = vmatpush1.bf16.msra.mxu0 0
        %3035 = vmatprep.subr.bf16.mxu0 0
        %3036 = vmatpush1.bf16.msra.mxu0 0
        %3037 = vmatprep.subr.bf16.mxu0 0
        %3038 = vmatpush1.bf16.msra.mxu0 0
        %3039 = vmatprep.subr.bf16.mxu0 0
        %3040 = vmatpush1.bf16.msra.mxu0 0
        %3041 = vmatprep.subr.bf16.mxu0 0
        %3042 = vmatpush1.bf16.msra.mxu0 0
        %3043 = vmatprep.subr.bf16.mxu0 0
        %3044 = vmatpush1.bf16.msra.mxu0 0
        %3045 = vmatprep.subr.bf16.mxu0 0
        %3046 = vmatpush1.bf16.msra.mxu0 0
        %3047 = vmatprep.subr.bf16.mxu0 0
        %3048 = vmatpush1.bf16.msra.mxu0 0
        %3049 = vmatprep.subr.bf16.mxu0 0
        %3050 = vmatpush1.bf16.msra.mxu0 0
        %3051 = vmatprep.mubr.bf16.mxu0 0
        %3052 = vmatmul.mubr.bf16.gmra.mrb[0].mxu0 %v3017
        %v3053 = vpop.f32.mrb[0].mxu0
        %v3054 = vadd.f32 %v2990, %v3053
        %v3055 = vpop.f32.mrb[0].mxu0
        %v3056 = vpop.f32.mrb[0].mxu0
        %v3057 = vpop.f32.mrb[0].mxu0
        %3058 = vdwg.mxu0
        %v3059 = vadd.f32 %v2865, %v3054
        %s3060 = scalar_lea.vmem [#allocation19], 8
        %v3061 = vld [vmem:[%s3060] sm:$0x1]
        %s3062 = scalar_lea.vmem [#allocation21], 8
        %v3063 = vld [vmem:[%s3062] sm:$0x1]
        %v3064 = vsel %vm866, %v3059, 0.0
        %3065 = vadd.xlane.f32.xlu0 %v3064
        %v3066 = vpop.xlane.xlu0 %3065
        %v3067 = vmul.f32 %v3066, %v870
        %v3068 = vsub.f32 %v3059, %v3067
        %v3069 = vmul.f32 %v3068, %v3068
        %v3070 = vsel %vm866, %v3069, 0.0
        %3071 = vadd.xlane.f32.xlu0 %v3070
        %v3072 = vpop.xlane.xlu0 %3071
        %v3073 = vmul.f32 %v3072, 0.032258064
        %v3074 = vrsqrt.pop %v3073
        %v3075 = vmul.f32 %v3073, %v3074
        %vm3076 = vcmp.eq.f32.partialorder %v3073, inf
        %v3077 = vsel %vm3076, %v3073, %v3075
        %vm3078 = vcmp.eq.f32.partialorder %v3073, 0.0
        %v3079 = vand.u32 %v3073, 2147483648
        %v3080 = vsel %vm3078, %v3079, %v3077
        %v3081 = vadd.f32 %v3080, 1e-06
        %v3082 = vrcp.pop %v3081
        %v3084 = vlaneseq
        %v3085 = vshrl.u32 %v3084, 7
        %v3086 = vsub.s32 0, %v3085
        %v3087 = vrot.slane %v3061, %v3086
        %v3089 = vmul.f32 %v3087, %v3068
        %v3090 = vmul.f32 %v3089, %v3082
        %v3092 = vlaneseq
        %v3093 = vshrl.u32 %v3092, 7
        %v3094 = vsub.s32 0, %v3093
        %v3095 = vrot.slane %v3063, %v3094
        %v3097 = vadd.f32 %v3090, %v3095
        %s3098 = scalar_lea.vmem %s7, 48
        %v3099 = vld [vmem:[%s3098] sm:$0xf]
        %v3100 = vld [vmem:[%s3098 + $0x4] sm:$0xf]
        %v3101 = vld [vmem:[%s3098 + $0x8] sm:$0xf]
        %v3102 = vld [vmem:[%s3098 + $0xc] sm:$0xf]
        %v3103 = vpack.c.bf16 %v3097, %v3097
        %v3108 = vunpack.c.l.b16 %v3099
        %v3109 = vunpack.c.l.b16 %v3100
        %v3110 = vunpack.c.l.b16 %v3101
        %v3111 = vunpack.c.l.b16 %v3102
        %v3112 = vpack.c.b16 %v3109, %v3108
        %v3113 = vpack.c.b16 %v3111, %v3110
        %v3117 = vsel %vm866, %v3103, 0
        %3119 = vmatprep.subr.bf16.mxu0 0
        %3120 = vmatpush1.bf16.msra.mxu0 %v3112
        %3121 = vmatprep.subr.bf16.mxu0 0
        %3122 = vmatpush1.bf16.msra.mxu0 %v3113
        %3123 = vmatprep.subr.bf16.mxu0 0
        %3124 = vmatpush1.bf16.msra.mxu0 0
        %3125 = vmatprep.subr.bf16.mxu0 0
        %3126 = vmatpush1.bf16.msra.mxu0 0
        %3127 = vmatprep.subr.bf16.mxu0 0
        %3128 = vmatpush1.bf16.msra.mxu0 0
        %3129 = vmatprep.subr.bf16.mxu0 0
        %3130 = vmatpush1.bf16.msra.mxu0 0
        %3131 = vmatprep.subr.bf16.mxu0 0
        %3132 = vmatpush1.bf16.msra.mxu0 0
        %3133 = vmatprep.subr.bf16.mxu0 0
        %3134 = vmatpush1.bf16.msra.mxu0 0
        %3135 = vmatprep.subr.bf16.mxu0 0
        %3136 = vmatpush1.bf16.msra.mxu0 0
        %3137 = vmatprep.subr.bf16.mxu0 0
        %3138 = vmatpush1.bf16.msra.mxu0 0
        %3139 = vmatprep.subr.bf16.mxu0 0
        %3140 = vmatpush1.bf16.msra.mxu0 0
        %3141 = vmatprep.subr.bf16.mxu0 0
        %3142 = vmatpush1.bf16.msra.mxu0 0
        %3143 = vmatprep.subr.bf16.mxu0 0
        %3144 = vmatpush1.bf16.msra.mxu0 0
        %3145 = vmatprep.subr.bf16.mxu0 0
        %3146 = vmatpush1.bf16.msra.mxu0 0
        %3147 = vmatprep.subr.bf16.mxu0 0
        %3148 = vmatpush1.bf16.msra.mxu0 0
        %3149 = vmatprep.subr.bf16.mxu0 0
        %3150 = vmatpush1.bf16.msra.mxu0 0
        %3151 = vmatprep.mubr.bf16.mxu0 0
        %3152 = vmatmul.mubr.bf16.gmra.mrb[0].mxu0 %v3117
        %v3153 = vpop.f32.mrb[0].mxu0
        %v3154 = vadd.f32 0.0, %v3153
        %v3155 = vpop.f32.mrb[0].mxu0
        %v3156 = vpop.f32.mrb[0].mxu0
        %v3157 = vpop.f32.mrb[0].mxu0
        %3158 = vdwg.mxu0
        %v3159 = vadd.f32 %v3059, %v3154
        %s3160 = scalar_lea.vmem [#allocation12], 3
        %v3161 = vld [vmem:[%s3160] sm:$0x1]
        %v3163 = vlaneseq
        %v3164 = vshrl.u32 %v3163, 7
        %v3165 = vsub.s32 0, %v3164
        %v3166 = vrot.slane %v3161, %v3165
        %v3168 = vadd.f32 %v3159, %v3166
        %s3169 = scalar_lea.vmem [#allocation19], 9
        %v3170 = vld [vmem:[%s3169] sm:$0x1]
        %s3171 = scalar_lea.vmem [#allocation21], 9
        %v3172 = vld [vmem:[%s3171] sm:$0x1]
        %v3173 = vsel %vm866, %v3168, 0.0
        %3174 = vadd.xlane.f32.xlu0 %v3173
        %v3175 = vpop.xlane.xlu0 %3174
        %v3176 = vmul.f32 %v3175, %v870
        %v3177 = vsub.f32 %v3168, %v3176
        %v3178 = vmul.f32 %v3177, %v3177
        %v3179 = vsel %vm866, %v3178, 0.0
        %3180 = vadd.xlane.f32.xlu0 %v3179
        %v3181 = vpop.xlane.xlu0 %3180
        %v3182 = vmul.f32 %v3181, 0.032258064
        %v3183 = vrsqrt.pop %v3182
        %v3184 = vmul.f32 %v3182, %v3183
        %vm3185 = vcmp.eq.f32.partialorder %v3182, inf
        %v3186 = vsel %vm3185, %v3182, %v3184
        %vm3187 = vcmp.eq.f32.partialorder %v3182, 0.0
        %v3188 = vand.u32 %v3182, 2147483648
        %v3189 = vsel %vm3187, %v3188, %v3186
        %v3190 = vadd.f32 %v3189, 1e-06
        %v3191 = vrcp.pop %v3190
        %v3193 = vlaneseq
        %v3194 = vshrl.u32 %v3193, 7
        %v3195 = vsub.s32 0, %v3194
        %v3196 = vrot.slane %v3170, %v3195
        %v3198 = vmul.f32 %v3196, %v3177
        %v3199 = vmul.f32 %v3198, %v3191
        %v3201 = vlaneseq
        %v3202 = vshrl.u32 %v3201, 7
        %v3203 = vsub.s32 0, %v3202
        %v3204 = vrot.slane %v3172, %v3203
        %v3206 = vadd.f32 %v3199, %v3204
        %s3207 = scalar_lea.vmem %s7, 80
        %v3208 = vld [vmem:[%s3207] sm:$0xf]
        %v3209 = vld [vmem:[%s3207 + $0x4] sm:$0xf]
        %v3210 = vld [vmem:[%s3207 + $0x8] sm:$0xf]
        %v3211 = vld [vmem:[%s3207 + $0xc] sm:$0xf]
        %v3212 = vpack.c.bf16 %v3206, %v3206
        %s3213 = scalar_lea.vmem [#allocation12], 5
        %v3214 = vld [vmem:[%s3213] sm:$0x1]
        %v3216 = vlaneseq
        %v3217 = vshrl.u32 %v3216, 7
        %v3218 = vsub.s32 0, %v3217
        %v3219 = vrot.slane %v3214, %v3218
        %v3225 = vunpack.c.l.b16 %v3208
        %v3226 = vunpack.c.l.b16 %v3209
        %v3227 = vunpack.c.l.b16 %v3210
        %v3228 = vunpack.c.l.b16 %v3211
        %v3229 = vpack.c.b16 %v3226, %v3225
        %v3230 = vpack.c.b16 %v3228, %v3227
        %v3234 = vsel %vm866, %v3212, 0
        %3236 = vmatprep.subr.bf16.mxu0 0
        %3237 = vmatpush1.bf16.msra.mxu0 %v3229
        %3238 = vmatprep.subr.bf16.mxu0 0
        %3239 = vmatpush1.bf16.msra.mxu0 %v3230
        %3240 = vmatprep.subr.bf16.mxu0 0
        %3241 = vmatpush1.bf16.msra.mxu0 0
        %3242 = vmatprep.subr.bf16.mxu0 0
        %3243 = vmatpush1.bf16.msra.mxu0 0
        %3244 = vmatprep.subr.bf16.mxu0 0
        %3245 = vmatpush1.bf16.msra.mxu0 0
        %3246 = vmatprep.subr.bf16.mxu0 0
        %3247 = vmatpush1.bf16.msra.mxu0 0
        %3248 = vmatprep.subr.bf16.mxu0 0
        %3249 = vmatpush1.bf16.msra.mxu0 0
        %3250 = vmatprep.subr.bf16.mxu0 0
        %3251 = vmatpush1.bf16.msra.mxu0 0
        %3252 = vmatprep.subr.bf16.mxu0 0
        %3253 = vmatpush1.bf16.msra.mxu0 0
        %3254 = vmatprep.subr.bf16.mxu0 0
        %3255 = vmatpush1.bf16.msra.mxu0 0
        %3256 = vmatprep.subr.bf16.mxu0 0
        %3257 = vmatpush1.bf16.msra.mxu0 0
        %3258 = vmatprep.subr.bf16.mxu0 0
        %3259 = vmatpush1.bf16.msra.mxu0 0
        %3260 = vmatprep.subr.bf16.mxu0 0
        %3261 = vmatpush1.bf16.msra.mxu0 0
        %3262 = vmatprep.subr.bf16.mxu0 0
        %3263 = vmatpush1.bf16.msra.mxu0 0
        %3264 = vmatprep.subr.bf16.mxu0 0
        %3265 = vmatpush1.bf16.msra.mxu0 0
        %3266 = vmatprep.subr.bf16.mxu0 0
        %3267 = vmatpush1.bf16.msra.mxu0 0
        %3268 = vmatprep.mubr.bf16.mxu0 0
        %3269 = vmatmul.mubr.bf16.gmra.mrb[0].mxu0 %v3234
        %v3270 = vpop.f32.mrb[0].mxu0
        %v3271 = vadd.f32 %v3219, %v3270
        %v3272 = vpop.f32.mrb[0].mxu0
        %v3273 = vpop.f32.mrb[0].mxu0
        %v3274 = vpop.f32.mrb[0].mxu0
        %3275 = vdwg.mxu0
        %s3276 = scalar_lea.vmem [#allocation13], 16
        %v3277 = vld [vmem:[%s3276] sm:$0xf]
        %v3278 = vld [vmem:[%s3276 + $0x4] sm:$0xf]
        %v3279 = vld [vmem:[%s3276 + $0x8] sm:$0xf]
        %v3280 = vld [vmem:[%s3276 + $0xc] sm:$0xf]
        %s3281 = scalar_lea.vmem [#allocation15], 1
        %v3282 = vld [vmem:[%s3281] sm:$0x1]
        %v3284 = vlaneseq
        %v3285 = vshrl.u32 %v3284, 7
        %v3286 = vsub.s32 0, %v3285
        %v3287 = vrot.slane %v3282, %v3286
        %v3293 = vunpack.c.l.b16 %v3277
        %v3294 = vunpack.c.l.b16 %v3278
        %v3295 = vunpack.c.l.b16 %v3279
        %v3296 = vunpack.c.l.b16 %v3280
        %v3297 = vpack.c.b16 %v3294, %v3293
        %v3298 = vpack.c.b16 %v3296, %v3295
        %3301 = vmatprep.subr.bf16.mxu0 0
        %3302 = vmatpush1.bf16.msra.mxu0 %v3297
        %3303 = vmatprep.subr.bf16.mxu0 0
        %3304 = vmatpush1.bf16.msra.mxu0 %v3298
        %3305 = vmatprep.subr.bf16.mxu0 0
        %3306 = vmatpush1.bf16.msra.mxu0 0
        %3307 = vmatprep.subr.bf16.mxu0 0
        %3308 = vmatpush1.bf16.msra.mxu0 0
        %3309 = vmatprep.subr.bf16.mxu0 0
        %3310 = vmatpush1.bf16.msra.mxu0 0
        %3311 = vmatprep.subr.bf16.mxu0 0
        %3312 = vmatpush1.bf16.msra.mxu0 0
        %3313 = vmatprep.subr.bf16.mxu0 0
        %3314 = vmatpush1.bf16.msra.mxu0 0
        %3315 = vmatprep.subr.bf16.mxu0 0
        %3316 = vmatpush1.bf16.msra.mxu0 0
        %3317 = vmatprep.subr.bf16.mxu0 0
        %3318 = vmatpush1.bf16.msra.mxu0 0
        %3319 = vmatprep.subr.bf16.mxu0 0
        %3320 = vmatpush1.bf16.msra.mxu0 0
        %3321 = vmatprep.subr.bf16.mxu0 0
        %3322 = vmatpush1.bf16.msra.mxu0 0
        %3323 = vmatprep.subr.bf16.mxu0 0
        %3324 = vmatpush1.bf16.msra.mxu0 0
        %3325 = vmatprep.subr.bf16.mxu0 0
        %3326 = vmatpush1.bf16.msra.mxu0 0
        %3327 = vmatprep.subr.bf16.mxu0 0
        %3328 = vmatpush1.bf16.msra.mxu0 0
        %3329 = vmatprep.subr.bf16.mxu0 0
        %3330 = vmatpush1.bf16.msra.mxu0 0
        %3331 = vmatprep.subr.bf16.mxu0 0
        %3332 = vmatpush1.bf16.msra.mxu0 0
        %3333 = vmatprep.mubr.bf16.mxu0 0
        %3334 = vmatmul.mubr.bf16.gmra.mrb[0].mxu0 %v2644
        %v3335 = vpop.f32.mrb[0].mxu0
        %v3336 = vadd.f32 %v3287, %v3335
        %v3337 = vpop.f32.mrb[0].mxu0
        %v3338 = vpop.f32.mrb[0].mxu0
        %v3339 = vpop.f32.mrb[0].mxu0
        %3340 = vdwg.mxu0
        %3341 = vmatprep.subr.bf16.mxu0 0
        %3342 = vmatpush1.bf16.msra.mxu0 %v3297
        %3343 = vmatprep.subr.bf16.mxu0 0
        %3344 = vmatpush1.bf16.msra.mxu0 %v3298
        %3345 = vmatprep.subr.bf16.mxu0 0
        %3346 = vmatpush1.bf16.msra.mxu0 0
        %3347 = vmatprep.subr.bf16.mxu0 0
        %3348 = vmatpush1.bf16.msra.mxu0 0
        %3349 = vmatprep.subr.bf16.mxu0 0
        %3350 = vmatpush1.bf16.msra.mxu0 0
        %3351 = vmatprep.subr.bf16.mxu0 0
        %3352 = vmatpush1.bf16.msra.mxu0 0
        %3353 = vmatprep.subr.bf16.mxu0 0
        %3354 = vmatpush1.bf16.msra.mxu0 0
        %3355 = vmatprep.subr.bf16.mxu0 0
        %3356 = vmatpush1.bf16.msra.mxu0 0
        %3357 = vmatprep.subr.bf16.mxu0 0
        %3358 = vmatpush1.bf16.msra.mxu0 0
        %3359 = vmatprep.subr.bf16.mxu0 0
        %3360 = vmatpush1.bf16.msra.mxu0 0
        %3361 = vmatprep.subr.bf16.mxu0 0
        %3362 = vmatpush1.bf16.msra.mxu0 0
        %3363 = vmatprep.subr.bf16.mxu0 0
        %3364 = vmatpush1.bf16.msra.mxu0 0
        %3365 = vmatprep.subr.bf16.mxu0 0
        %3366 = vmatpush1.bf16.msra.mxu0 0
        %3367 = vmatprep.subr.bf16.mxu0 0
        %3368 = vmatpush1.bf16.msra.mxu0 0
        %3369 = vmatprep.subr.bf16.mxu0 0
        %3370 = vmatpush1.bf16.msra.mxu0 0
        %3371 = vmatprep.subr.bf16.mxu0 0
        %3372 = vmatpush1.bf16.msra.mxu0 0
        %3373 = vmatprep.mubr.bf16.mxu0 0
        %3374 = vmatmul.mubr.bf16.gmra.mrb[0].mxu0 %v2688
        %v3375 = vpop.f32.mrb[0].mxu0
        %v3376 = vadd.f32 %v3287, %v3375
        %v3377 = vpop.f32.mrb[0].mxu0
        %v3378 = vpop.f32.mrb[0].mxu0
        %v3379 = vpop.f32.mrb[0].mxu0
        %3380 = vdwg.mxu0
        %v3381 = vsub.f32 %v3376, %v3336
        %v3382 = vmul.f32 %v3271, %v3381
        %v3383 = vpack.c.bf16 %v3382, %v3382
        %v3385 = vsel %vm866, %v3383, 0
        %3387 = vmatprep.subr.bf16.mxu0 0
        %3388 = vmatpush1.bf16.msra.mxu0 %v1055
        %3389 = vmatprep.subr.bf16.mxu0 0
        %3390 = vmatpush1.bf16.msra.mxu0 %v1056
        %3391 = vmatprep.subr.bf16.mxu0 0
        %3392 = vmatpush1.bf16.msra.mxu0 0
        %3393 = vmatprep.subr.bf16.mxu0 0
        %3394 = vmatpush1.bf16.msra.mxu0 0
        %3395 = vmatprep.subr.bf16.mxu0 0
        %3396 = vmatpush1.bf16.msra.mxu0 0
        %3397 = vmatprep.subr.bf16.mxu0 0
        %3398 = vmatpush1.bf16.msra.mxu0 0
        %3399 = vmatprep.subr.bf16.mxu0 0
        %3400 = vmatpush1.bf16.msra.mxu0 0
        %3401 = vmatprep.subr.bf16.mxu0 0
        %3402 = vmatpush1.bf16.msra.mxu0 0
        %3403 = vmatprep.subr.bf16.mxu0 0
        %3404 = vmatpush1.bf16.msra.mxu0 0
        %3405 = vmatprep.subr.bf16.mxu0 0
        %3406 = vmatpush1.bf16.msra.mxu0 0
        %3407 = vmatprep.subr.bf16.mxu0 0
        %3408 = vmatpush1.bf16.msra.mxu0 0
        %3409 = vmatprep.subr.bf16.mxu0 0
        %3410 = vmatpush1.bf16.msra.mxu0 0
        %3411 = vmatprep.subr.bf16.mxu0 0
        %3412 = vmatpush1.bf16.msra.mxu0 0
        %3413 = vmatprep.subr.bf16.mxu0 0
        %3414 = vmatpush1.bf16.msra.mxu0 0
        %3415 = vmatprep.subr.bf16.mxu0 0
        %3416 = vmatpush1.bf16.msra.mxu0 0
        %3417 = vmatprep.subr.bf16.mxu0 0
        %3418 = vmatpush1.bf16.msra.mxu0 0
        %3419 = vmatprep.mubr.bf16.mxu0 0
        %3420 = vmatmul.mubr.bf16.gmra.mrb[0].mxu0 %v3385
        %v3421 = vpop.f32.mrb[0].mxu0
        %v3422 = vadd.f32 %v1045, %v3421
        %v3423 = vpop.f32.mrb[0].mxu0
        %v3424 = vpop.f32.mrb[0].mxu0
        %v3425 = vpop.f32.mrb[0].mxu0
        %3426 = vdwg.mxu0
        %v3427 = vsub.f32 0.0, %v3422
        %v3428 = vmul.f32 %v3427, 1.442695
        %v3429 = vpow.pop %v3428
        %v3430 = vadd.f32 %v3429, 1.0
        %v3431 = vrcp.pop %v3430
        %v3432 = vmul.f32 1.0, %v3431
        %3434 = vrot.lane.b32.xlu0 %v3381, 96
        %v3435 = vpop.permute.xlu0 %3434
        %v3437 = vmul.f32 %v3432, %v3435
        %3439 = vrot.lane.b32.xlu0 %v3437, 32
        %v3440 = vpop.permute.xlu0 %3439
        %v3442 = vadd.f32 %v3336, %v3440
        %s3443 = scalar_lea.vmem %s7, 112
        %v3444 = vld [vmem:[%s3443] sm:$0xf]
        %v3445 = vld [vmem:[%s3443 + $0x4] sm:$0xf]
        %v3446 = vld [vmem:[%s3443 + $0x8] sm:$0xf]
        %v3447 = vld [vmem:[%s3443 + $0xc] sm:$0xf]
        %v3448 = vpack.c.bf16 %v3442, %v3442
        %3450 = vrot.lane.b32.xlu0 %v3448, 96
        %v3451 = vpop.permute.xlu0 %3450
        %v3456 = vunpack.c.l.b16 %v3444
        %v3457 = vunpack.c.l.b16 %v3445
        %v3458 = vunpack.c.l.b16 %v3446
        %v3459 = vunpack.c.l.b16 %v3447
        %v3460 = vpack.c.b16 %v3457, %v3456
        %v3461 = vpack.c.b16 %v3459, %v3458
        %v3465 = vsel %vm866, %v3451, 0
        %3467 = vmatprep.subr.bf16.mxu0 0
        %3468 = vmatpush1.bf16.msra.mxu0 %v3460
        %3469 = vmatprep.subr.bf16.mxu0 0
        %3470 = vmatpush1.bf16.msra.mxu0 %v3461
        %3471 = vmatprep.subr.bf16.mxu0 0
        %3472 = vmatpush1.bf16.msra.mxu0 0
        %3473 = vmatprep.subr.bf16.mxu0 0
        %3474 = vmatpush1.bf16.msra.mxu0 0
        %3475 = vmatprep.subr.bf16.mxu0 0
        %3476 = vmatpush1.bf16.msra.mxu0 0
        %3477 = vmatprep.subr.bf16.mxu0 0
        %3478 = vmatpush1.bf16.msra.mxu0 0
        %3479 = vmatprep.subr.bf16.mxu0 0
        %3480 = vmatpush1.bf16.msra.mxu0 0
        %3481 = vmatprep.subr.bf16.mxu0 0
        %3482 = vmatpush1.bf16.msra.mxu0 0
        %3483 = vmatprep.subr.bf16.mxu0 0
        %3484 = vmatpush1.bf16.msra.mxu0 0
        %3485 = vmatprep.subr.bf16.mxu0 0
        %3486 = vmatpush1.bf16.msra.mxu0 0
        %3487 = vmatprep.subr.bf16.mxu0 0
        %3488 = vmatpush1.bf16.msra.mxu0 0
        %3489 = vmatprep.subr.bf16.mxu0 0
        %3490 = vmatpush1.bf16.msra.mxu0 0
        %3491 = vmatprep.subr.bf16.mxu0 0
        %3492 = vmatpush1.bf16.msra.mxu0 0
        %3493 = vmatprep.subr.bf16.mxu0 0
        %3494 = vmatpush1.bf16.msra.mxu0 0
        %3495 = vmatprep.subr.bf16.mxu0 0
        %3496 = vmatpush1.bf16.msra.mxu0 0
        %3497 = vmatprep.subr.bf16.mxu0 0
        %3498 = vmatpush1.bf16.msra.mxu0 0
        %3499 = vmatprep.mubr.bf16.mxu0 0
        %3500 = vmatmul.mubr.bf16.gmra.mrb[0].mxu0 %v3465
        %v3501 = vpop.f32.mrb[0].mxu0
        %v3502 = vadd.f32 0.0, %v3501
        %v3503 = vpop.f32.mrb[0].mxu0
        %v3504 = vpop.f32.mrb[0].mxu0
        %v3505 = vpop.f32.mrb[0].mxu0
        %3506 = vdwg.mxu0
        %v3507 = vadd.f32 %v3168, %v3502
        %s3508 = scalar_lea.vmem [#allocation12], 7
        %v3509 = vld [vmem:[%s3508] sm:$0x1]
        %v3511 = vlaneseq
        %v3512 = vshrl.u32 %v3511, 7
        %v3513 = vsub.s32 0, %v3512
        %v3514 = vrot.slane %v3509, %v3513
        %v3516 = vadd.f32 %v3507, %v3514
        %s3517 = scalar_lea.vmem [#allocation19], 10
        %v3518 = vld [vmem:[%s3517] sm:$0x1]
        %s3519 = scalar_lea.vmem [#allocation21], 10
        %v3520 = vld [vmem:[%s3519] sm:$0x1]
        %v3521 = vsel %vm866, %v3516, 0.0
        %3522 = vadd.xlane.f32.xlu0 %v3521
        %v3523 = vpop.xlane.xlu0 %3522
        %v3524 = vmul.f32 %v3523, %v870
        %v3525 = vsub.f32 %v3516, %v3524
        %v3526 = vmul.f32 %v3525, %v3525
        %v3527 = vsel %vm866, %v3526, 0.0
        %3528 = vadd.xlane.f32.xlu0 %v3527
        %v3529 = vpop.xlane.xlu0 %3528
        %v3530 = vmul.f32 %v3529, 0.032258064
        %v3531 = vrsqrt.pop %v3530
        %v3532 = vmul.f32 %v3530, %v3531
        %vm3533 = vcmp.eq.f32.partialorder %v3530, inf
        %v3534 = vsel %vm3533, %v3530, %v3532
        %vm3535 = vcmp.eq.f32.partialorder %v3530, 0.0
        %v3536 = vand.u32 %v3530, 2147483648
        %v3537 = vsel %vm3535, %v3536, %v3534
        %v3538 = vadd.f32 %v3537, 1e-06
        %v3539 = vrcp.pop %v3538
        %v3541 = vlaneseq
        %v3542 = vshrl.u32 %v3541, 7
        %v3543 = vsub.s32 0, %v3542
        %v3544 = vrot.slane %v3518, %v3543
        %v3546 = vmul.f32 %v3544, %v3525
        %v3547 = vmul.f32 %v3546, %v3539
        %v3549 = vlaneseq
        %v3550 = vshrl.u32 %v3549, 7
        %v3551 = vsub.s32 0, %v3550
        %v3552 = vrot.slane %v3520, %v3551
        %v3554 = vadd.f32 %v3547, %v3552
        %s3555 = scalar_lea.vmem %s11, 48
        %v3556 = vld [vmem:[%s3555] sm:$0xf]
        %v3557 = vld [vmem:[%s3555 + $0x4] sm:$0xf]
        %v3558 = vld [vmem:[%s3555 + $0x8] sm:$0xf]
        %v3559 = vld [vmem:[%s3555 + $0xc] sm:$0xf]
        %v3560 = vpack.c.bf16 %v3554, %v3554
        %s3561 = scalar_lea.vmem [#allocation16], 3
        %v3562 = vld [vmem:[%s3561] sm:$0x1]
        %v3564 = vlaneseq
        %v3565 = vshrl.u32 %v3564, 7
        %v3566 = vsub.s32 0, %v3565
        %v3567 = vrot.slane %v3562, %v3566
        %v3573 = vunpack.c.l.b16 %v3556
        %v3574 = vunpack.c.l.b16 %v3557
        %v3575 = vunpack.c.l.b16 %v3558
        %v3576 = vunpack.c.l.b16 %v3559
        %v3577 = vpack.c.b16 %v3574, %v3573
        %v3578 = vpack.c.b16 %v3576, %v3575
        %v3582 = vsel %vm866, %v3560, 0
        %3584 = vmatprep.subr.bf16.mxu0 0
        %3585 = vmatpush1.bf16.msra.mxu0 %v3577
        %3586 = vmatprep.subr.bf16.mxu0 0
        %3587 = vmatpush1.bf16.msra.mxu0 %v3578
        %3588 = vmatprep.subr.bf16.mxu0 0
        %3589 = vmatpush1.bf16.msra.mxu0 0
        %3590 = vmatprep.subr.bf16.mxu0 0
        %3591 = vmatpush1.bf16.msra.mxu0 0
        %3592 = vmatprep.subr.bf16.mxu0 0
        %3593 = vmatpush1.bf16.msra.mxu0 0
        %3594 = vmatprep.subr.bf16.mxu0 0
        %3595 = vmatpush1.bf16.msra.mxu0 0
        %3596 = vmatprep.subr.bf16.mxu0 0
        %3597 = vmatpush1.bf16.msra.mxu0 0
        %3598 = vmatprep.subr.bf16.mxu0 0
        %3599 = vmatpush1.bf16.msra.mxu0 0
        %3600 = vmatprep.subr.bf16.mxu0 0
        %3601 = vmatpush1.bf16.msra.mxu0 0
        %3602 = vmatprep.subr.bf16.mxu0 0
        %3603 = vmatpush1.bf16.msra.mxu0 0
        %3604 = vmatprep.subr.bf16.mxu0 0
        %3605 = vmatpush1.bf16.msra.mxu0 0
        %3606 = vmatprep.subr.bf16.mxu0 0
        %3607 = vmatpush1.bf16.msra.mxu0 0
        %3608 = vmatprep.subr.bf16.mxu0 0
        %3609 = vmatpush1.bf16.msra.mxu0 0
        %3610 = vmatprep.subr.bf16.mxu0 0
        %3611 = vmatpush1.bf16.msra.mxu0 0
        %3612 = vmatprep.subr.bf16.mxu0 0
        %3613 = vmatpush1.bf16.msra.mxu0 0
        %3614 = vmatprep.subr.bf16.mxu0 0
        %3615 = vmatpush1.bf16.msra.mxu0 0
        %3616 = vmatprep.mubr.bf16.mxu0 0
        %3617 = vmatmul.mubr.bf16.gmra.mrb[0].mxu0 %v3582
        %v3618 = vpop.f32.mrb[0].mxu0
        %v3619 = vadd.f32 %v3567, %v3618
        %v3620 = vpop.f32.mrb[0].mxu0
        %v3621 = vpop.f32.mrb[0].mxu0
        %v3622 = vpop.f32.mrb[0].mxu0
        %3623 = vdwg.mxu0
        %v3624 = vmax.f32 %v3619, 0.0
        %s3625 = scalar_lea.vmem %s13, 96
        %v3626 = vld [vmem:[%s3625] sm:$0xf]
        %v3627 = vld [vmem:[%s3625 + $0x4] sm:$0xf]
        %v3628 = vld [vmem:[%s3625 + $0x8] sm:$0xf]
        %v3629 = vld [vmem:[%s3625 + $0xc] sm:$0xf]
        %v3630 = vld [vmem:[%s3625 + $0x10] sm:$0xf]
        %v3631 = vld [vmem:[%s3625 + $0x14] sm:$0xf]
        %v3632 = vld [vmem:[%s3625 + $0x18] sm:$0xf]
        %v3633 = vld [vmem:[%s3625 + $0x1c] sm:$0xf]
        %v3634 = vpack.c.bf16 %v3624, %v3624
        %s3635 = scalar_lea.vmem [#allocation18], 3
        %v3636 = vld [vmem:[%s3635] sm:$0x1]
        %v3638 = vlaneseq
        %v3639 = vshrl.u32 %v3638, 7
        %v3640 = vsub.s32 0, %v3639
        %v3641 = vrot.slane %v3636, %v3640
        %v3651 = vunpack.c.l.b16 %v3626
        %v3652 = vunpack.c.l.b16 %v3627
        %v3653 = vunpack.c.l.b16 %v3628
        %v3654 = vunpack.c.l.b16 %v3629
        %v3655 = vunpack.c.l.b16 %v3630
        %v3656 = vunpack.c.l.b16 %v3631
        %v3657 = vunpack.c.l.b16 %v3632
        %v3658 = vunpack.c.l.b16 %v3633
        %v3659 = vpack.c.b16 %v3652, %v3651
        %v3660 = vpack.c.b16 %v3654, %v3653
        %v3661 = vpack.c.b16 %v3656, %v3655
        %v3662 = vpack.c.b16 %v3658, %v3657
        %v3668 = vsel %vm1476, %v3634, 0
        %3670 = vmatprep.subr.bf16.mxu0 0
        %3671 = vmatpush1.bf16.msra.mxu0 %v3659
        %3672 = vmatprep.subr.bf16.mxu0 0
        %3673 = vmatpush1.bf16.msra.mxu0 %v3660
        %3674 = vmatprep.subr.bf16.mxu0 0
        %3675 = vmatpush1.bf16.msra.mxu0 %v3661
        %3676 = vmatprep.subr.bf16.mxu0 0
        %3677 = vmatpush1.bf16.msra.mxu0 %v3662
        %3678 = vmatprep.subr.bf16.mxu0 0
        %3679 = vmatpush1.bf16.msra.mxu0 0
        %3680 = vmatprep.subr.bf16.mxu0 0
        %3681 = vmatpush1.bf16.msra.mxu0 0
        %3682 = vmatprep.subr.bf16.mxu0 0
        %3683 = vmatpush1.bf16.msra.mxu0 0
        %3684 = vmatprep.subr.bf16.mxu0 0
        %3685 = vmatpush1.bf16.msra.mxu0 0
        %3686 = vmatprep.subr.bf16.mxu0 0
        %3687 = vmatpush1.bf16.msra.mxu0 0
        %3688 = vmatprep.subr.bf16.mxu0 0
        %3689 = vmatpush1.bf16.msra.mxu0 0
        %3690 = vmatprep.subr.bf16.mxu0 0
        %3691 = vmatpush1.bf16.msra.mxu0 0
        %3692 = vmatprep.subr.bf16.mxu0 0
        %3693 = vmatpush1.bf16.msra.mxu0 0
        %3694 = vmatprep.subr.bf16.mxu0 0
        %3695 = vmatpush1.bf16.msra.mxu0 0
        %3696 = vmatprep.subr.bf16.mxu0 0
        %3697 = vmatpush1.bf16.msra.mxu0 0
        %3698 = vmatprep.subr.bf16.mxu0 0
        %3699 = vmatpush1.bf16.msra.mxu0 0
        %3700 = vmatprep.subr.bf16.mxu0 0
        %3701 = vmatpush1.bf16.msra.mxu0 0
        %3702 = vmatprep.mubr.bf16.mxu0 0
        %3703 = vmatmul.mubr.bf16.gmra.mrb[0].mxu0 %v3668
        %v3704 = vpop.f32.mrb[0].mxu0
        %v3705 = vadd.f32 %v3641, %v3704
        %v3706 = vpop.f32.mrb[0].mxu0
        %v3707 = vpop.f32.mrb[0].mxu0
        %v3708 = vpop.f32.mrb[0].mxu0
        %3709 = vdwg.mxu0
        %v3710 = vadd.f32 %v3516, %v3705
        %s3711 = scalar_lea.vmem [#allocation19], 11
        %v3712 = vld [vmem:[%s3711] sm:$0x1]
        %s3713 = scalar_lea.vmem [#allocation21], 11
        %v3714 = vld [vmem:[%s3713] sm:$0x1]
        %v3715 = vsel %vm866, %v3710, 0.0
        %3716 = vadd.xlane.f32.xlu0 %v3715
        %v3717 = vpop.xlane.xlu0 %3716
        %v3718 = vmul.f32 %v3717, %v870
        %v3719 = vsub.f32 %v3710, %v3718
        %v3720 = vmul.f32 %v3719, %v3719
        %v3721 = vsel %vm866, %v3720, 0.0
        %3722 = vadd.xlane.f32.xlu0 %v3721
        %v3723 = vpop.xlane.xlu0 %3722
        %v3724 = vmul.f32 %v3723, 0.032258064
        %v3725 = vrsqrt.pop %v3724
        %v3726 = vmul.f32 %v3724, %v3725
        %vm3727 = vcmp.eq.f32.partialorder %v3724, inf
        %v3728 = vsel %vm3727, %v3724, %v3726
        %vm3729 = vcmp.eq.f32.partialorder %v3724, 0.0
        %v3730 = vand.u32 %v3724, 2147483648
        %v3731 = vsel %vm3729, %v3730, %v3728
        %v3732 = vadd.f32 %v3731, 1e-06
        %v3733 = vrcp.pop %v3732
        %v3735 = vlaneseq
        %v3736 = vshrl.u32 %v3735, 7
        %v3737 = vsub.s32 0, %v3736
        %v3738 = vrot.slane %v3712, %v3737
        %v3740 = vmul.f32 %v3738, %v3719
        %v3741 = vmul.f32 %v3740, %v3733
        %v3743 = vlaneseq
        %v3744 = vshrl.u32 %v3743, 7
        %v3745 = vsub.s32 0, %v3744
        %v3746 = vrot.slane %v3714, %v3745
        %v3748 = vadd.f32 %v3741, %v3746
        %v3749 = vlaneseq
        %v3750 = vshrl.u32 %v3749, 7
        %s3751 = sadd.s32 %s52, %s53
        %s3752 = smul.u32 %s3751, 8
        %v3753 = vstv %s3752
        %v3754 = vadd.s32 %v3753, %v3750
        %s3755 = sld [smem:[#allocation3]]
        %v3756 = vstv %s3755
        %vm3757 = vcmp.lt.s32.totalorder %v3754, %v3756
        %v3758 = vsel %vm3757, 1, 0
        %vm3759 = vcmp.eq.s32.totalorder %v3758, 1
        %v3760 = vsel %vm3759, %v3748, -1e+30
        %v3761 = vsel %vm866, %v3760, -inf
        %v3762 = vrot.slane %v3761, 4
        %v3763 = vmax.f32 %v3761, %v3762
        %v3764 = vrot.slane %v3763, 2
        %v3765 = vmax.f32 %v3763, %v3764
        %v3766 = vrot.slane %v3765, 1
        %v3767 = vmax.f32 %v3765, %v3766
        %v3768 = vsel %vm3759, %v3748, 1e+30
        %v3769 = vsel %vm866, %v3768, inf
        %v3770 = vrot.slane %v3769, 4
        %v3771 = vmin.f32 %v3769, %v3770
        %v3772 = vrot.slane %v3771, 2
        %v3773 = vmin.f32 %v3771, %v3772
        %v3774 = vrot.slane %v3773, 1
        %v3775 = vmin.f32 %v3773, %v3774
        %v3776 = vld [vmem:[%s822] sm:$0xff]
        %v3777 = vmax.f32 %v3776, %v3767
        %3778 = vst.msk [vmem:[%s822] sm:$0xff] %vm866, %v3777
        %v3779 = vld [vmem:[%s829] sm:$0xff]
        %v3780 = vmin.f32 %v3779, %v3775
        %3781 = vst.msk [vmem:[%s829] sm:$0xff] %vm866, %v3780
        %s3782 = sand.u32 %s453, 1
        %s3783 = scalar_lea.sflag [#allocation6], %s3782
        %s3784 = sand.u32 %s453, 1
        %s3785 = smul.addr %s3784, 8
        %s3786 = scalar_lea.vmem [#allocation22], %s3785
        %s3787 = sand.u32 %s479, 1
        %s3788 = scalar_lea.sflag [#allocation24], %s3787
        %s3789 = sand.u32 %s479, 1
        %s3790 = smul.addr %s3789, 8
        %s3791 = scalar_lea.vmem [#allocation23], %s3790
        // Predicated region
        $region137: #{tpu_custom_call.1} parent=87 // pred_check
          %p3792 = pneg %p463
        $region138: #{tpu_custom_call.1} parent=87 // pred_check_branch
          %3794 = sbr.rel (%p3792) target = $region140
        $region139: #{tpu_custom_call.1} parent=87 // pred_region
          %s3796 = ssub.s32 128, 128
          %3797 = vsyncadd %s3783, %s3796
          %s3798 = smul.addr %s52, 128
          %s3799 = scalar_lea.hbm %s18, %s3798
          %s3801 = sshll.u32 %s3786, 4
          %s3802 = int_to_ptr.vmem [resolvable:$true] %s3801
          %3804 = dma.vmem_to_hbm [thread:$0]  %s3802, 128, %s3799, %s3783
        $region140: #{tpu_custom_call.1} parent=87 // pred_fallthru
          _
        // Predicated region
        $region141: #{tpu_custom_call.1} parent=87 // pred_check
          %p3805 = pneg %p489
        $region142: #{tpu_custom_call.1} parent=87 // pred_check_branch
          %3807 = sbr.rel (%p3805) target = $region144
        $region143: #{tpu_custom_call.1} parent=87 // pred_region
          %s3809 = ssub.s32 128, 128
          %3810 = vsyncadd %s3788, %s3809
          %s3811 = smul.addr %s52, 128
          %s3812 = scalar_lea.hbm %s19, %s3811
          %s3814 = sshll.u32 %s3791, 4
          %s3815 = int_to_ptr.vmem [resolvable:$true] %s3814
          %3817 = dma.vmem_to_hbm [thread:$0]  %s3815, 128, %s3812, %s3788
        $region144: #{tpu_custom_call.1} parent=87 // pred_fallthru
          _
      $region88: #{tpu_custom_call.1} parent=5 // pred_fallthru
        _
      %p3818 = scmp.le.s32.totalorder 2, %s43
      // Predicated region
      $region145: #{tpu_custom_call.1} parent=5 // pred_check
        %p3819 = pneg %p3818
      $region146: #{tpu_custom_call.1} parent=5 // pred_check_branch
        %3821 = sbr.rel (%p3819) target = $region148
      $region147: #{tpu_custom_call.1} parent=5 // pred_region
        %s3822 = ssub.s32 %s43, 2
        // Predicated region
        $region149: #{tpu_custom_call.1} parent=147 // pred_check
          %p3823 = pneg %p469
        $region150: #{tpu_custom_call.1} parent=147 // pred_check_branch
          %3825 = sbr.rel (%p3823) target = $region152
        $region151: #{tpu_custom_call.1} parent=147 // pred_region
          %s3826 = sand.u32 %s454, 1
          %s3827 = scalar_lea.sflag [#allocation6], %s3826
          %s3828 = sand.u32 %s454, 1
          %s3829 = smul.addr %s3828, 8
          %s3830 = scalar_lea.vmem [#allocation22], %s3829
          %3831 = dma.done %s3827, 128
        $region152: #{tpu_custom_call.1} parent=147 // pred_fallthru
          _
        // Predicated region
        $region153: #{tpu_custom_call.1} parent=147 // pred_check
          %p3832 = pneg %p495
        $region154: #{tpu_custom_call.1} parent=147 // pred_check_branch
          %3834 = sbr.rel (%p3832) target = $region156
        $region155: #{tpu_custom_call.1} parent=147 // pred_region
          %s3835 = sand.u32 %s480, 1
          %s3836 = scalar_lea.sflag [#allocation24], %s3835
          %s3837 = sand.u32 %s480, 1
          %s3838 = smul.addr %s3837, 8
          %s3839 = scalar_lea.vmem [#allocation23], %s3838
          %3840 = dma.done %s3836, 128
        $region156: #{tpu_custom_call.1} parent=147 // pred_fallthru
          _
      $region148: #{tpu_custom_call.1} parent=5 // pred_fallthru
        _
    $region6: #{tpu_custom_call.1} parent=1 // loop_footer
      %s47 = sadd.s32 1, %s43
    $region7: #{tpu_custom_call.1} parent=1 // loop_footer_branch
      %42 = sbr.rel target = $region3
    $region8: #{tpu_custom_call.1} parent=1 // loop_exit
      _
    %3841 = vsyncpa [#allocation5], 1
    %s3842 = scalar_lea.sflag [#allocation5], 1
    %3843 = vsyncpa %s3842, 1
    %3844 = vsyncpa [#allocation8], 1
    %s3845 = scalar_lea.sflag [#allocation8], 1
    %3846 = vsyncpa %s3845, 1
    %3847 = vsyncpa [#allocation11], 1
    %3848 = vsyncpa [#allocation14], 1
    %3849 = vsyncpa [#allocation17], 1
    %3850 = vsyncpa [#allocation20], 1
    %3851 = vsyncpa [#allocation6], 1
    %s3852 = scalar_lea.sflag [#allocation6], 1
    %3853 = vsyncpa %s3852, 1
    %3854 = vsyncpa [#allocation24], 1
    %s3855 = scalar_lea.sflag [#allocation24], 1
    %3856 = vsyncpa %s3855, 1

</llo_original>
